<compile_context>
chip_gen: v7x
topology: tpu7x:2x2x1
jax: 0.10.0
libtpu: 0.0.40
codegen_flags: <defaults>
</compile_context>

<pallas_src>
import functools

import jax
import jax.numpy as jnp
from jax import lax
from jax.experimental import pallas as pl
from jax.experimental.pallas import tpu as pltpu


# ----------------------------------------------------------------------------
# Model config (small synthetic llama-style backbone)
# ----------------------------------------------------------------------------
VOCAB = 64
HIDDEN = 128
N_HEADS = 4
HEAD_DIM = HIDDEN // N_HEADS
INTERMEDIATE = 256
N_LAYERS = 2
RMS_EPS = 1e-6
NEG_BIG = -1e30          # finite additive mask value (avoids inf-inf NaNs)


# ----------------------------------------------------------------------------
# Fused forward kernel (one grid step per decoder layer)
# ----------------------------------------------------------------------------
def _rms_norm(x, gamma):
    var = jnp.mean(x * x, axis=-1, keepdims=True)
    return x * lax.rsqrt(var + RMS_EPS) * gamma


def _dec2enc_kernel(x_ref, brow_ref, bcol_ref, keep_ref, pool_ref,
                    ln1_ref, wqkv_ref, wo_ref, ln2_ref, wgu_ref, wd_ref,
                    fln_ref, hw_ref, hb_ref, o_ref,
                    h_scr, bias_scr,
                    *, n_heads, hidden, head_dim, inter):
    f32 = jnp.float32
    bf16 = jnp.bfloat16
    li = pl.program_id(0)
    last = pl.num_programs(0) - 1
    bs = h_scr.shape[0]

    # ---- one-time init (layer 0): load activations, build additive mask ----
    @pl.when(li == 0)
    def _():
        h_scr[...] = x_ref[...]
        # Block-diagonal batch + causal + key padding, generated from ~2.5 KB
        # of metadata (no 64 KB bias DMA).  Within a sequence, global position
        # order equals local order, so causality is just row >= col.
        row = lax.broadcasted_iota(jnp.int32, (bs, bs), 0)
        col = lax.broadcasted_iota(jnp.int32, (bs, bs), 1)
        same_seq = bcol_ref[...] == brow_ref[...]            # (bs, bs)
        causal = row >= col                                  # (bs, bs)
        keep = keep_ref[...] > 0.5                           # (1, bs) key pads
        valid = same_seq & causal & keep
        bias_scr[...] = jnp.where(valid, 0.0, NEG_BIG).astype(f32)

    h = h_scr[...]                       # (bs, H) f32 activations (resident)
    bias = bias_scr[...]                 # (bs, bs) f32 additive attention mask

    # Per-head 0/1 lane masks (iota + compares, no integer division).
    lane = lax.broadcasted_iota(jnp.int32, (1, hidden), 1)
    hmasks = [((lane >= hh * head_dim) &
               (lane < (hh + 1) * head_dim)).astype(f32)
              for hh in range(n_heads)]

    # ---------------- attention block ----------------
    xn = _rms_norm(h, ln1_ref[...])                                  # (bs, H)
    qkv = jnp.dot(xn.astype(bf16), wqkv_ref[...],
                  preferred_element_type=f32)                        # (bs, 3H)
    q = qkv[:, :hidden].astype(bf16)          # 1/sqrt(Dh) folded into wqkv
    k = qkv[:, hidden:2 * hidden]
    v = qkv[:, 2 * hidden:3 * hidden]

    # Head h occupies sublane block h of the stacked operands with only its
    # own lanes non-zero, so one full-width contraction equals the 4 per-head
    # matmuls (mask applied to K is equivalent to masking Q; for V it selects
    # the head's output lanes).
    k_stack = jnp.concatenate([(k * hm).astype(bf16) for hm in hmasks], axis=0)
    v_stack = jnp.concatenate([(v * hm).astype(bf16) for hm in hmasks], axis=0)

    # One MXU score matmul for all heads: (bs, H) x (n_heads*bs, H)^T.
    scores = lax.dot_general(q, k_stack, (((1,), (1,)), ((), ())),
                             preferred_element_type=f32)    # (bs, n_heads*bs)

    # Per-head softmax on 128-lane-aligned blocks; normalization fused into
    # the bf16 cast feeding the PV matmul (no separate f32 probs slab).
    p_blocks = []
    for hh in range(n_heads):
        s = scores[:, hh * bs:(hh + 1) * bs] + bias
        m = jnp.max(s, axis=-1, keepdims=True)
        p = jnp.exp(s - m)
        denom = jnp.sum(p, axis=-1, keepdims=True)
        p_blocks.append((p * pl.reciprocal(denom, approx=True)).astype(bf16))
    p_full = jnp.concatenate(p_blocks, axis=1)              # (bs, n_heads*bs)

    # One K-stacked PV matmul replaces the serial per-head ctx accumulation.
    ctx = jnp.dot(p_full, v_stack, preferred_element_type=f32)      # (bs, H)
    h = h + jnp.dot(ctx.astype(bf16), wo_ref[...],
                    preferred_element_type=f32)

    # ---------------- SwiGLU MLP block ----------------
    xn = _rms_norm(h, ln2_ref[...])
    gu = jnp.dot(xn.astype(bf16), wgu_ref[...],
                 preferred_element_type=f32)                         # (bs, 2I)
    gate = gu[:, :inter]
    up = gu[:, inter:]
    mid = (jax.nn.silu(gate) * up).astype(bf16)
    h = h + jnp.dot(mid, wd_ref[...], preferred_element_type=f32)

    h_scr[...] = h

    # ---- final RMSNorm -> mean over seq -> Linear(H, 1) -> view(-1, 4) ----
    @pl.when(li == last)
    def _():
        hn = _rms_norm(h, fln_ref[...])                              # (bs, H)
        pooled = jnp.dot(pool_ref[...], hn,
                         preferred_element_type=f32)                 # (B, H)
        logits = jnp.sum(pooled * hw_ref[...], axis=-1, keepdims=True)  # (B,1)
        logits = logits + hb_ref[0, 0]
        o_ref[...] = logits.reshape(o_ref.shape)                     # (B//4, 4)


def dec2enc_fused_forward(h0, b_row, b_col, keep, pool, params):
    """h0: (B*S, H) f32 embedded tokens -> (B//4, 4) f32 choice logits."""
    bs, hidden = h0.shape
    batch = pool.shape[0]
    groups = batch // 4

    kern = functools.partial(
        _dec2enc_kernel, n_heads=N_HEADS, hidden=HIDDEN,
        head_dim=HEAD_DIM, inter=INTERMEDIATE)

    const = lambda l: (0, 0)          # resident across the layer axis
    per_layer = lambda l: (l, 0, 0)   # pipelined per-layer weight blocks

    in_specs = [
        pl.BlockSpec((bs, hidden), const),                           # h0
        pl.BlockSpec((1, bs), const),                                # b_row
        pl.BlockSpec((bs, 1), const),                                # b_col
        pl.BlockSpec((1, bs), const),                                # keep
        pl.BlockSpec((batch, bs), const),                            # pool
        pl.BlockSpec((None, 1, HIDDEN), per_layer),                  # ln1
        pl.BlockSpec((None, HIDDEN, 3 * HIDDEN), per_layer),         # wqkv
        pl.BlockSpec((None, HIDDEN, HIDDEN), per_layer),             # wo
        pl.BlockSpec((None, 1, HIDDEN), per_layer),                  # ln2
        pl.BlockSpec((None, HIDDEN, 2 * INTERMEDIATE), per_layer),   # wgu
        pl.BlockSpec((None, INTERMEDIATE, HIDDEN), per_layer),       # wd
        pl.BlockSpec((1, HIDDEN), const),                            # final_norm
        pl.BlockSpec((1, HIDDEN), const),                            # head_w
        pl.BlockSpec(memory_space=pltpu.MemorySpace.SMEM),           # head_b
    ]

    return pl.pallas_call(
        kern,
        out_shape=jax.ShapeDtypeStruct((groups, 4), jnp.float32),
        grid=(N_LAYERS,),
        in_specs=in_specs,
        out_specs=pl.BlockSpec((groups, 4), const),
        scratch_shapes=[
            pltpu.VMEM((bs, hidden), jnp.float32),   # resident activations
            pltpu.VMEM((bs, bs), jnp.float32),       # additive attention bias
        ],
        compiler_params=pltpu.CompilerParams(
            dimension_semantics=("arbitrary",),      # layers are sequential
            vmem_limit_bytes=32 * 1024 * 1024),
    )(h0, b_row, b_col, keep, pool,
      params["ln1"], params["wqkv"], params["wo"],
      params["ln2"], params["wgu"], params["wd"],
      params["final_norm"], params["head_w"], params["head_b"])


# ----------------------------------------------------------------------------
# Synthetic backbone params (deterministic), weights stored fused + bf16
# ----------------------------------------------------------------------------
def init_params(key):
    def nrm(k, shape, scale=0.02):
        return (scale * jax.random.normal(k, shape)).astype(jnp.float32)

    keys = jax.random.split(key, 6)
    bf16 = jnp.bfloat16

    wqkv = nrm(keys[1], (N_LAYERS, HIDDEN, 3 * HIDDEN))
    # Fold 1/sqrt(head_dim) into the Q columns (true constant fold into the
    # weight; the kernel never scales activations).
    q_scale = 1.0 / float(HEAD_DIM) ** 0.5
    wqkv = wqkv.at[:, :, :HIDDEN].multiply(q_scale)

    return {
        "embed": nrm(keys[0], (VOCAB, HIDDEN)),
        "ln1": jnp.ones((N_LAYERS, 1, HIDDEN), jnp.float32),
        "wqkv": wqkv.astype(bf16),
        "wo": nrm(keys[2], (N_LAYERS, HIDDEN, HIDDEN)).astype(bf16),
        "ln2": jnp.ones((N_LAYERS, 1, HIDDEN), jnp.float32),
        "wgu": nrm(keys[3], (N_LAYERS, HIDDEN, 2 * INTERMEDIATE)).astype(bf16),
        "wd": nrm(keys[4], (N_LAYERS, INTERMEDIATE, HIDDEN)).astype(bf16),
        "final_norm": jnp.ones((1, HIDDEN), jnp.float32),
        "head_w": nrm(keys[5], (1, HIDDEN)),
        "head_b": jnp.zeros((1, 1), jnp.float32),
    }


# ----------------------------------------------------------------------------
# Dec2Enc forward (pred path, labels=None)
# ----------------------------------------------------------------------------
def dec2enc_forward(params, input_ids, attention_mask):
    B, S = input_ids.shape
    BS = B * S

    # Embedding gather (glue).
    h0 = jnp.take(params["embed"], input_ids.reshape(BS), axis=0)   # (BS, H)

    # Compact attention-mask metadata; the (BS, BS) additive bias itself is
    # generated inside the kernel.
    pos = jnp.arange(BS, dtype=jnp.int32)
    b_idx = pos // S
    b_row = b_idx.reshape(1, BS)
    b_col = b_idx.reshape(BS, 1)
    keep = (attention_mask.reshape(1, BS) > 0).astype(jnp.float32)

    # Seq mean-pool matrix (B, BS) with 1/S on own-sequence columns.
    # NOTE: like the PyTorch reference (hidden.mean(dim=1)), pads are included.
    pool = (b_idx[None, :] == jnp.arange(B, dtype=jnp.int32)[:, None])
    pool = pool.astype(jnp.float32) / S

    logits4 = dec2enc_fused_forward(h0, b_row, b_col, keep, pool, params)
    # torch.max(logits, dim=-1) -> indices (cheap glue, not a hot path).
    pred = jnp.argmax(logits4, axis=-1)
    return logits4, pred


if __name__ == "__main__":
    key = jax.random.PRNGKey(0)
    pkey, ikey = jax.random.split(key)

    params = init_params(pkey)

    # 2 multiple-choice questions x 4 choices each => batch 8, seq 16.
    B, S = 8, 16
    input_ids = jax.random.randint(ikey, (B, S), 0, VOCAB, dtype=jnp.int32)
    # Variable-length padding mask (1 = real token, 0 = pad).
    lengths = jnp.array([16, 12, 10, 16, 14, 16, 9, 11], dtype=jnp.int32)
    attention_mask = (jnp.arange(S)[None, :] < lengths[:, None]).astype(jnp.int32)

    logits4, pred = dec2enc_forward(params, input_ids, attention_mask)
    jax.block_until_ready((logits4, pred))

    assert logits4.shape == (B // 4, 4)
    assert pred.shape == (B // 4,)
    print("KERNEL_OK")
</pallas_src>

<mosaic_0001>
module attributes {stable_mosaic.version = 11 : i64} {
  func.func @_dec2enc_kernel(%arg0: i32, %arg1: memref<128x128xf32, #tpu.memory_space<vmem>>, %arg2: memref<1x128xi32, #tpu.memory_space<vmem>>, %arg3: memref<128x1xi32, #tpu.memory_space<vmem>>, %arg4: memref<1x128xf32, #tpu.memory_space<vmem>>, %arg5: memref<8x128xf32, #tpu.memory_space<vmem>>, %arg6: memref<1x1x128xf32, #tpu.memory_space<vmem>>, %arg7: memref<1x128x384xbf16, #tpu.memory_space<vmem>>, %arg8: memref<1x128x128xbf16, #tpu.memory_space<vmem>>, %arg9: memref<1x1x128xf32, #tpu.memory_space<vmem>>, %arg10: memref<1x128x512xbf16, #tpu.memory_space<vmem>>, %arg11: memref<1x256x128xbf16, #tpu.memory_space<vmem>>, %arg12: memref<1x128xf32, #tpu.memory_space<vmem>>, %arg13: memref<1x128xf32, #tpu.memory_space<vmem>>, %arg14: memref<1x1xf32, #tpu.memory_space<smem>>, %arg15: memref<2x4xf32, #tpu.memory_space<vmem>>, %arg16: memref<128x128xf32, #tpu.memory_space<vmem>>, %arg17: memref<128x128xf32, #tpu.memory_space<vmem>>) attributes {dimension_semantics = [#tpu.dimension_semantics<arbitrary>], iteration_bounds = array<i64: 2>, scalar_prefetch = 0 : i64, scratch_operands = 2 : i64, tpu.core_type = #tpu.core_type<tc>, window_params = [{pipeline_mode = #tpu.pipeline_mode<synchronous>, transform_indices = @transform_0, window_bounds = array<i64: 128, 128>}, {pipeline_mode = #tpu.pipeline_mode<synchronous>, transform_indices = @transform_1, window_bounds = array<i64: 1, 128>}, {pipeline_mode = #tpu.pipeline_mode<synchronous>, transform_indices = @transform_2, window_bounds = array<i64: 128, 1>}, {pipeline_mode = #tpu.pipeline_mode<synchronous>, transform_indices = @transform_3, window_bounds = array<i64: 1, 128>}, {pipeline_mode = #tpu.pipeline_mode<synchronous>, transform_indices = @transform_4, window_bounds = array<i64: 8, 128>}, {transform_indices = @transform_5, window_bounds = array<i64: 1, 1, 128>}, {transform_indices = @transform_6, window_bounds = array<i64: 1, 128, 384>}, {transform_indices = @transform_7, window_bounds = array<i64: 1, 128, 128>}, {transform_indices = @transform_8, window_bounds = array<i64: 1, 1, 128>}, {transform_indices = @transform_9, window_bounds = array<i64: 1, 128, 512>}, {transform_indices = @transform_10, window_bounds = array<i64: 1, 256, 128>}, {pipeline_mode = #tpu.pipeline_mode<synchronous>, transform_indices = @transform_11, window_bounds = array<i64: 1, 128>}, {pipeline_mode = #tpu.pipeline_mode<synchronous>, transform_indices = @transform_12, window_bounds = array<i64: 1, 128>}, {transform_indices = @transform_13, window_bounds = array<i64: 1, 1>}, {pipeline_mode = #tpu.pipeline_mode<synchronous>, transform_indices = @transform_14, window_bounds = array<i64: 2, 4>}]} {
    %c0_i32 = arith.constant 0 : i32
    %0 = arith.cmpi eq, %arg0, %c0_i32 : i32
    %1 = arith.extui %0 : i1 to i32
    %c0_i32_0 = arith.constant 0 : i32
    %2 = arith.cmpi ne, %1, %c0_i32_0 : i32
    scf.if %2 {
      %c0_49 = arith.constant 0 : index
      %c0_50 = arith.constant 0 : index
      %178 = vector.load %arg1[%c0_49, %c0_50] : memref<128x128xf32, #tpu.memory_space<vmem>>, vector<128x128xf32>
      %c0_51 = arith.constant 0 : index
      %c0_52 = arith.constant 0 : index
      %179 = vector.load %arg16[%c0_51, %c0_52] : memref<128x128xf32, #tpu.memory_space<vmem>>, vector<128x128xf32>
      tpu.vector_store %arg16[%c0_51, %c0_52], %178 {strides = array<i32>} : memref<128x128xf32, #tpu.memory_space<vmem>>, vector<128x128xf32>,
      %180 = tpu.iota {dimensions = array<i32: 0>} : vector<128x128xi32>
      %181 = tpu.iota {dimensions = array<i32: 1>} : vector<128x128xi32>
      %c0_53 = arith.constant 0 : index
      %c0_54 = arith.constant 0 : index
      %182 = vector.load %arg3[%c0_53, %c0_54] : memref<128x1xi32, #tpu.memory_space<vmem>>, vector<128x1xi32>
      %c0_55 = arith.constant 0 : index
      %c0_56 = arith.constant 0 : index
      %183 = vector.load %arg2[%c0_55, %c0_56] : memref<1x128xi32, #tpu.memory_space<vmem>>, vector<1x128xi32>
      %184 = vector.broadcast %182 : vector<128x1xi32> to vector<128x128xi32>
      %185 = vector.broadcast %183 : vector<1x128xi32> to vector<128x128xi32>
      %186 = arith.cmpi eq, %184, %185 : vector<128x128xi32>
      %187 = arith.cmpi sge, %180, %181 : vector<128x128xi32>
      %c0_57 = arith.constant 0 : index
      %c0_58 = arith.constant 0 : index
      %188 = vector.load %arg4[%c0_57, %c0_58] : memref<1x128xf32, #tpu.memory_space<vmem>>, vector<1x128xf32>
      %cst_59 = arith.constant 5.000000e-01 : f32
      %189 = vector.broadcast %cst_59 : f32 to vector<1x128xf32>
      %190 = arith.cmpf ogt, %188, %189 : vector<1x128xf32>
      %191 = arith.andi %186, %187 : vector<128x128xi1>
      %192 = vector.broadcast %190 : vector<1x128xi1> to vector<128x128xi1>
      %193 = arith.andi %191, %192 : vector<128x128xi1>
      %cst_60 = arith.constant 0.000000e+00 : f32
      %cst_61 = arith.constant -1.000000e+30 : f32
      %194 = vector.broadcast %cst_60 : f32 to vector<128x128xf32>
      %195 = vector.broadcast %cst_61 : f32 to vector<128x128xf32>
      %196 = arith.select %193, %194, %195 : vector<128x128xi1>, vector<128x128xf32>
      %c0_62 = arith.constant 0 : index
      %c0_63 = arith.constant 0 : index
      %197 = vector.load %arg17[%c0_62, %c0_63] : memref<128x128xf32, #tpu.memory_space<vmem>>, vector<128x128xf32>
      tpu.vector_store %arg17[%c0_62, %c0_63], %196 {strides = array<i32>} : memref<128x128xf32, #tpu.memory_space<vmem>>, vector<128x128xf32>,
    } else {
    }
    %c0 = arith.constant 0 : index
    %c0_1 = arith.constant 0 : index
    %3 = vector.load %arg16[%c0, %c0_1] : memref<128x128xf32, #tpu.memory_space<vmem>>, vector<128x128xf32>
    %c0_2 = arith.constant 0 : index
    %c0_3 = arith.constant 0 : index
    %4 = vector.load %arg17[%c0_2, %c0_3] : memref<128x128xf32, #tpu.memory_space<vmem>>, vector<128x128xf32>
    %5 = tpu.iota {dimensions = array<i32: 1>} : vector<1x128xi32>
    %c0_i32_4 = arith.constant 0 : i32
    %6 = vector.broadcast %c0_i32_4 : i32 to vector<1x128xi32>
    %7 = arith.cmpi sge, %5, %6 : vector<1x128xi32>
    %c32_i32 = arith.constant 32 : i32
    %8 = vector.broadcast %c32_i32 : i32 to vector<1x128xi32>
    %9 = arith.cmpi slt, %5, %8 : vector<1x128xi32>
    %10 = arith.andi %7, %9 : vector<1x128xi1>
    %11 = arith.extui %10 : vector<1x128xi1> to vector<1x128xi32>
    %12 = arith.sitofp %11 : vector<1x128xi32> to vector<1x128xf32>
    %c32_i32_5 = arith.constant 32 : i32
    %13 = vector.broadcast %c32_i32_5 : i32 to vector<1x128xi32>
    %14 = arith.cmpi sge, %5, %13 : vector<1x128xi32>
    %c64_i32 = arith.constant 64 : i32
    %15 = vector.broadcast %c64_i32 : i32 to vector<1x128xi32>
    %16 = arith.cmpi slt, %5, %15 : vector<1x128xi32>
    %17 = arith.andi %14, %16 : vector<1x128xi1>
    %18 = arith.extui %17 : vector<1x128xi1> to vector<1x128xi32>
    %19 = arith.sitofp %18 : vector<1x128xi32> to vector<1x128xf32>
    %c64_i32_6 = arith.constant 64 : i32
    %20 = vector.broadcast %c64_i32_6 : i32 to vector<1x128xi32>
    %21 = arith.cmpi sge, %5, %20 : vector<1x128xi32>
    %c96_i32 = arith.constant 96 : i32
    %22 = vector.broadcast %c96_i32 : i32 to vector<1x128xi32>
    %23 = arith.cmpi slt, %5, %22 : vector<1x128xi32>
    %24 = arith.andi %21, %23 : vector<1x128xi1>
    %25 = arith.extui %24 : vector<1x128xi1> to vector<1x128xi32>
    %26 = arith.sitofp %25 : vector<1x128xi32> to vector<1x128xf32>
    %c96_i32_7 = arith.constant 96 : i32
    %27 = vector.broadcast %c96_i32_7 : i32 to vector<1x128xi32>
    %28 = arith.cmpi sge, %5, %27 : vector<1x128xi32>
    %c128_i32 = arith.constant 128 : i32
    %29 = vector.broadcast %c128_i32 : i32 to vector<1x128xi32>
    %30 = arith.cmpi slt, %5, %29 : vector<1x128xi32>
    %31 = arith.andi %28, %30 : vector<1x128xi1>
    %32 = arith.extui %31 : vector<1x128xi1> to vector<1x128xi32>
    %33 = arith.sitofp %32 : vector<1x128xi32> to vector<1x128xf32>
    %c0_8 = arith.constant 0 : index
    %c0_9 = arith.constant 0 : index
    %c0_10 = arith.constant 0 : index
    %34 = vector.load %arg6[%c0_8, %c0_9, %c0_10] : memref<1x1x128xf32, #tpu.memory_space<vmem>>, vector<1x1x128xf32>
    %35 = vector.shape_cast %34 : vector<1x1x128xf32> to vector<1x128xf32>
    %36 = arith.mulf %3, %3 : vector<128x128xf32>
    %cst = arith.constant dense<0.000000e+00> : vector<128xf32>
    %37 = vector.multi_reduction <add>, %36, %cst [1] : vector<128x128xf32> to vector<128xf32>
    %38 = vector.shape_cast %37 : vector<128xf32> to vector<128x1xf32>
    %cst_11 = arith.constant 1.280000e+02 : f32
    %39 = vector.broadcast %cst_11 : f32 to vector<128x1xf32>
    %40 = arith.divf %38, %39 : vector<128x1xf32>
    %cst_12 = arith.constant 9.99999997E-7 : f32
    %41 = vector.broadcast %cst_12 : f32 to vector<128x1xf32>
    %42 = arith.addf %40, %41 : vector<128x1xf32>
    %43 = math.rsqrt %42 : vector<128x1xf32>
    %44 = vector.broadcast %43 : vector<128x1xf32> to vector<128x128xf32>
    %45 = arith.mulf %3, %44 : vector<128x128xf32>
    %46 = vector.broadcast %35 : vector<1x128xf32> to vector<128x128xf32>
    %47 = arith.mulf %45, %46 : vector<128x128xf32>
    %48 = arith.truncf %47 : vector<128x128xf32> to vector<128x128xbf16>
    %c0_13 = arith.constant 0 : index
    %c0_14 = arith.constant 0 : index
    %c0_15 = arith.constant 0 : index
    %49 = vector.load %arg7[%c0_13, %c0_14, %c0_15] : memref<1x128x384xbf16, #tpu.memory_space<vmem>>, vector<1x128x384xbf16>
    %50 = vector.shape_cast %49 : vector<1x128x384xbf16> to vector<128x384xbf16>
    %cst_16 = arith.constant dense<0.000000e+00> : vector<128x384xf32>
    %51 = tpu.matmul %48, %50, %cst_16 {dimension_numbers = #tpu.dot_dimension_numbers<[1], [0], [0], [1], [0, 0, 1, 1], [], []>} : vector<128x128xbf16>, vector<128x384xbf16>, vector<128x384xf32> -> vector<128x384xf32>
    %52 = vector.extract_strided_slice %51 {offsets = [0, 0], sizes = [128, 128], strides = [1, 1]} : vector<128x384xf32> to vector<128x128xf32>
    %53 = arith.truncf %52 : vector<128x128xf32> to vector<128x128xbf16>
    %54 = vector.extract_strided_slice %51 {offsets = [0, 128], sizes = [128, 128], strides = [1, 1]} : vector<128x384xf32> to vector<128x128xf32>
    %55 = vector.extract_strided_slice %51 {offsets = [0, 256], sizes = [128, 128], strides = [1, 1]} : vector<128x384xf32> to vector<128x128xf32>
    %56 = vector.broadcast %12 : vector<1x128xf32> to vector<128x128xf32>
    %57 = arith.mulf %54, %56 : vector<128x128xf32>
    %58 = arith.truncf %57 : vector<128x128xf32> to vector<128x128xbf16>
    %59 = vector.broadcast %19 : vector<1x128xf32> to vector<128x128xf32>
    %60 = arith.mulf %54, %59 : vector<128x128xf32>
    %61 = arith.truncf %60 : vector<128x128xf32> to vector<128x128xbf16>
    %62 = vector.broadcast %26 : vector<1x128xf32> to vector<128x128xf32>
    %63 = arith.mulf %54, %62 : vector<128x128xf32>
    %64 = arith.truncf %63 : vector<128x128xf32> to vector<128x128xbf16>
    %65 = vector.broadcast %33 : vector<1x128xf32> to vector<128x128xf32>
    %66 = arith.mulf %54, %65 : vector<128x128xf32>
    %67 = arith.truncf %66 : vector<128x128xf32> to vector<128x128xbf16>
    %68 = tpu.concatenate %58, %61, %64, %67 in 0 : vector<128x128xbf16>, vector<128x128xbf16>, vector<128x128xbf16>, vector<128x128xbf16> -> vector<512x128xbf16>
    %69 = vector.broadcast %12 : vector<1x128xf32> to vector<128x128xf32>
    %70 = arith.mulf %55, %69 : vector<128x128xf32>
    %71 = arith.truncf %70 : vector<128x128xf32> to vector<128x128xbf16>
    %72 = vector.broadcast %19 : vector<1x128xf32> to vector<128x128xf32>
    %73 = arith.mulf %55, %72 : vector<128x128xf32>
    %74 = arith.truncf %73 : vector<128x128xf32> to vector<128x128xbf16>
    %75 = vector.broadcast %26 : vector<1x128xf32> to vector<128x128xf32>
    %76 = arith.mulf %55, %75 : vector<128x128xf32>
    %77 = arith.truncf %76 : vector<128x128xf32> to vector<128x128xbf16>
    %78 = vector.broadcast %33 : vector<1x128xf32> to vector<128x128xf32>
    %79 = arith.mulf %55, %78 : vector<128x128xf32>
    %80 = arith.truncf %79 : vector<128x128xf32> to vector<128x128xbf16>
    %81 = tpu.concatenate %71, %74, %77, %80 in 0 : vector<128x128xbf16>, vector<128x128xbf16>, vector<128x128xbf16>, vector<128x128xbf16> -> vector<512x128xbf16>
    %cst_17 = arith.constant dense<0.000000e+00> : vector<128x512xf32>
    %82 = tpu.matmul %53, %68, %cst_17 {dimension_numbers = #tpu.dot_dimension_numbers<[1], [1], [0], [0], [0, 0, 1, 0], [], []>} : vector<128x128xbf16>, vector<512x128xbf16>, vector<128x512xf32> -> vector<128x512xf32>
    %83 = vector.extract_strided_slice %82 {offsets = [0, 0], sizes = [128, 128], strides = [1, 1]} : vector<128x512xf32> to vector<128x128xf32>
    %84 = arith.addf %83, %4 : vector<128x128xf32>
    %cst_18 = arith.constant dense<0xFF800000> : vector<128xf32>
    %85 = vector.multi_reduction <maximumf>, %84, %cst_18 [1] : vector<128x128xf32> to vector<128xf32>
    %86 = vector.shape_cast %85 : vector<128xf32> to vector<128x1xf32>
    %87 = vector.broadcast %86 : vector<128x1xf32> to vector<128x128xf32>
    %88 = arith.subf %84, %87 : vector<128x128xf32>
    %89 = math.exp %88 : vector<128x128xf32>
    %cst_19 = arith.constant dense<0.000000e+00> : vector<128xf32>
    %90 = vector.multi_reduction <add>, %89, %cst_19 [1] : vector<128x128xf32> to vector<128xf32>
    %91 = vector.shape_cast %90 : vector<128xf32> to vector<128x1xf32>
    %92 = tpu.reciprocal %91 {approx = true} : vector<128x1xf32> -> vector<128x1xf32>
    %93 = vector.broadcast %92 : vector<128x1xf32> to vector<128x128xf32>
    %94 = arith.mulf %89, %93 : vector<128x128xf32>
    %95 = arith.truncf %94 : vector<128x128xf32> to vector<128x128xbf16>
    %96 = vector.extract_strided_slice %82 {offsets = [0, 128], sizes = [128, 128], strides = [1, 1]} : vector<128x512xf32> to vector<128x128xf32>
    %97 = arith.addf %96, %4 : vector<128x128xf32>
    %cst_20 = arith.constant dense<0xFF800000> : vector<128xf32>
    %98 = vector.multi_reduction <maximumf>, %97, %cst_20 [1] : vector<128x128xf32> to vector<128xf32>
    %99 = vector.shape_cast %98 : vector<128xf32> to vector<128x1xf32>
    %100 = vector.broadcast %99 : vector<128x1xf32> to vector<128x128xf32>
    %101 = arith.subf %97, %100 : vector<128x128xf32>
    %102 = math.exp %101 : vector<128x128xf32>
    %cst_21 = arith.constant dense<0.000000e+00> : vector<128xf32>
    %103 = vector.multi_reduction <add>, %102, %cst_21 [1] : vector<128x128xf32> to vector<128xf32>
    %104 = vector.shape_cast %103 : vector<128xf32> to vector<128x1xf32>
    %105 = tpu.reciprocal %104 {approx = true} : vector<128x1xf32> -> vector<128x1xf32>
    %106 = vector.broadcast %105 : vector<128x1xf32> to vector<128x128xf32>
    %107 = arith.mulf %102, %106 : vector<128x128xf32>
    %108 = arith.truncf %107 : vector<128x128xf32> to vector<128x128xbf16>
    %109 = vector.extract_strided_slice %82 {offsets = [0, 256], sizes = [128, 128], strides = [1, 1]} : vector<128x512xf32> to vector<128x128xf32>
    %110 = arith.addf %109, %4 : vector<128x128xf32>
    %cst_22 = arith.constant dense<0xFF800000> : vector<128xf32>
    %111 = vector.multi_reduction <maximumf>, %110, %cst_22 [1] : vector<128x128xf32> to vector<128xf32>
    %112 = vector.shape_cast %111 : vector<128xf32> to vector<128x1xf32>
    %113 = vector.broadcast %112 : vector<128x1xf32> to vector<128x128xf32>
    %114 = arith.subf %110, %113 : vector<128x128xf32>
    %115 = math.exp %114 : vector<128x128xf32>
    %cst_23 = arith.constant dense<0.000000e+00> : vector<128xf32>
    %116 = vector.multi_reduction <add>, %115, %cst_23 [1] : vector<128x128xf32> to vector<128xf32>
    %117 = vector.shape_cast %116 : vector<128xf32> to vector<128x1xf32>
    %118 = tpu.reciprocal %117 {approx = true} : vector<128x1xf32> -> vector<128x1xf32>
    %119 = vector.broadcast %118 : vector<128x1xf32> to vector<128x128xf32>
    %120 = arith.mulf %115, %119 : vector<128x128xf32>
    %121 = arith.truncf %120 : vector<128x128xf32> to vector<128x128xbf16>
    %122 = vector.extract_strided_slice %82 {offsets = [0, 384], sizes = [128, 128], strides = [1, 1]} : vector<128x512xf32> to vector<128x128xf32>
    %123 = arith.addf %122, %4 : vector<128x128xf32>
    %cst_24 = arith.constant dense<0xFF800000> : vector<128xf32>
    %124 = vector.multi_reduction <maximumf>, %123, %cst_24 [1] : vector<128x128xf32> to vector<128xf32>
    %125 = vector.shape_cast %124 : vector<128xf32> to vector<128x1xf32>
    %126 = vector.broadcast %125 : vector<128x1xf32> to vector<128x128xf32>
    %127 = arith.subf %123, %126 : vector<128x128xf32>
    %128 = math.exp %127 : vector<128x128xf32>
    %cst_25 = arith.constant dense<0.000000e+00> : vector<128xf32>
    %129 = vector.multi_reduction <add>, %128, %cst_25 [1] : vector<128x128xf32> to vector<128xf32>
    %130 = vector.shape_cast %129 : vector<128xf32> to vector<128x1xf32>
    %131 = tpu.reciprocal %130 {approx = true} : vector<128x1xf32> -> vector<128x1xf32>
    %132 = vector.broadcast %131 : vector<128x1xf32> to vector<128x128xf32>
    %133 = arith.mulf %128, %132 : vector<128x128xf32>
    %134 = arith.truncf %133 : vector<128x128xf32> to vector<128x128xbf16>
    %135 = tpu.concatenate %95, %108, %121, %134 in 1 : vector<128x128xbf16>, vector<128x128xbf16>, vector<128x128xbf16>, vector<128x128xbf16> -> vector<128x512xbf16>
    %cst_26 = arith.constant dense<0.000000e+00> : vector<128x128xf32>
    %136 = tpu.matmul %135, %81, %cst_26 {dimension_numbers = #tpu.dot_dimension_numbers<[1], [0], [0], [1], [0, 0, 1, 1], [], []>} : vector<128x512xbf16>, vector<512x128xbf16>, vector<128x128xf32> -> vector<128x128xf32>
    %137 = arith.truncf %136 : vector<128x128xf32> to vector<128x128xbf16>
    %c0_27 = arith.constant 0 : index
    %c0_28 = arith.constant 0 : index
    %c0_29 = arith.constant 0 : index
    %138 = vector.load %arg8[%c0_27, %c0_28, %c0_29] : memref<1x128x128xbf16, #tpu.memory_space<vmem>>, vector<1x128x128xbf16>
    %139 = vector.shape_cast %138 : vector<1x128x128xbf16> to vector<128x128xbf16>
    %cst_30 = arith.constant dense<0.000000e+00> : vector<128x128xf32>
    %140 = tpu.matmul %137, %139, %cst_30 {dimension_numbers = #tpu.dot_dimension_numbers<[1], [0], [0], [1], [0, 0, 1, 1], [], []>} : vector<128x128xbf16>, vector<128x128xbf16>, vector<128x128xf32> -> vector<128x128xf32>
    %141 = arith.addf %3, %140 : vector<128x128xf32>
    %c0_31 = arith.constant 0 : index
    %c0_32 = arith.constant 0 : index
    %c0_33 = arith.constant 0 : index
    %142 = vector.load %arg9[%c0_31, %c0_32, %c0_33] : memref<1x1x128xf32, #tpu.memory_space<vmem>>, vector<1x1x128xf32>
    %143 = vector.shape_cast %142 : vector<1x1x128xf32> to vector<1x128xf32>
    %144 = arith.mulf %141, %141 : vector<128x128xf32>
    %cst_34 = arith.constant dense<0.000000e+00> : vector<128xf32>
    %145 = vector.multi_reduction <add>, %144, %cst_34 [1] : vector<128x128xf32> to vector<128xf32>
    %146 = vector.shape_cast %145 : vector<128xf32> to vector<128x1xf32>
    %cst_35 = arith.constant 1.280000e+02 : f32
    %147 = vector.broadcast %cst_35 : f32 to vector<128x1xf32>
    %148 = arith.divf %146, %147 : vector<128x1xf32>
    %cst_36 = arith.constant 9.99999997E-7 : f32
    %149 = vector.broadcast %cst_36 : f32 to vector<128x1xf32>
    %150 = arith.addf %148, %149 : vector<128x1xf32>
    %151 = math.rsqrt %150 : vector<128x1xf32>
    %152 = vector.broadcast %151 : vector<128x1xf32> to vector<128x128xf32>
    %153 = arith.mulf %141, %152 : vector<128x128xf32>
    %154 = vector.broadcast %143 : vector<1x128xf32> to vector<128x128xf32>
    %155 = arith.mulf %153, %154 : vector<128x128xf32>
    %156 = arith.truncf %155 : vector<128x128xf32> to vector<128x128xbf16>
    %c0_37 = arith.constant 0 : index
    %c0_38 = arith.constant 0 : index
    %c0_39 = arith.constant 0 : index
    %157 = vector.load %arg10[%c0_37, %c0_38, %c0_39] : memref<1x128x512xbf16, #tpu.memory_space<vmem>>, vector<1x128x512xbf16>
    %158 = vector.shape_cast %157 : vector<1x128x512xbf16> to vector<128x512xbf16>
    %cst_40 = arith.constant dense<0.000000e+00> : vector<128x512xf32>
    %159 = tpu.matmul %156, %158, %cst_40 {dimension_numbers = #tpu.dot_dimension_numbers<[1], [0], [0], [1], [0, 0, 1, 1], [], []>} : vector<128x128xbf16>, vector<128x512xbf16>, vector<128x512xf32> -> vector<128x512xf32>
    %160 = vector.extract_strided_slice %159 {offsets = [0, 0], sizes = [128, 256], strides = [1, 1]} : vector<128x512xf32> to vector<128x256xf32>
    %161 = vector.extract_strided_slice %159 {offsets = [0, 256], sizes = [128, 256], strides = [1, 1]} : vector<128x512xf32> to vector<128x256xf32>
    %162 = arith.negf %160 : vector<128x256xf32>
    %163 = math.exp %162 : vector<128x256xf32>
    %cst_41 = arith.constant 1.000000e+00 : f32
    %164 = vector.broadcast %cst_41 : f32 to vector<128x256xf32>
    %165 = arith.addf %164, %163 : vector<128x256xf32>
    %166 = arith.divf %164, %165 : vector<128x256xf32>
    %167 = arith.mulf %160, %166 : vector<128x256xf32>
    %168 = arith.mulf %167, %161 : vector<128x256xf32>
    %169 = arith.truncf %168 : vector<128x256xf32> to vector<128x256xbf16>
    %c0_42 = arith.constant 0 : index
    %c0_43 = arith.constant 0 : index
    %c0_44 = arith.constant 0 : index
    %170 = vector.load %arg11[%c0_42, %c0_43, %c0_44] : memref<1x256x128xbf16, #tpu.memory_space<vmem>>, vector<1x256x128xbf16>
    %171 = vector.shape_cast %170 : vector<1x256x128xbf16> to vector<256x128xbf16>
    %cst_45 = arith.constant dense<0.000000e+00> : vector<128x128xf32>
    %172 = tpu.matmul %169, %171, %cst_45 {dimension_numbers = #tpu.dot_dimension_numbers<[1], [0], [0], [1], [0, 0, 1, 1], [], []>} : vector<128x256xbf16>, vector<256x128xbf16>, vector<128x128xf32> -> vector<128x128xf32>
    %173 = arith.addf %141, %172 : vector<128x128xf32>
    %c0_46 = arith.constant 0 : index
    %c0_47 = arith.constant 0 : index
    %174 = vector.load %arg16[%c0_46, %c0_47] : memref<128x128xf32, #tpu.memory_space<vmem>>, vector<128x128xf32>
    tpu.vector_store %arg16[%c0_46, %c0_47], %173 {strides = array<i32>} : memref<128x128xf32, #tpu.memory_space<vmem>>, vector<128x128xf32>,
    %c1_i32 = arith.constant 1 : i32
    %175 = arith.cmpi eq, %arg0, %c1_i32 : i32
    %176 = arith.extui %175 : i1 to i32
    %c0_i32_48 = arith.constant 0 : i32
    %177 = arith.cmpi ne, %176, %c0_i32_48 : i32
    scf.if %177 {
      %c0_49 = arith.constant 0 : index
      %c0_50 = arith.constant 0 : index
      %178 = vector.load %arg12[%c0_49, %c0_50] : memref<1x128xf32, #tpu.memory_space<vmem>>, vector<1x128xf32>
      %179 = arith.mulf %173, %173 : vector<128x128xf32>
      %cst_51 = arith.constant dense<0.000000e+00> : vector<128xf32>
      %180 = vector.multi_reduction <add>, %179, %cst_51 [1] : vector<128x128xf32> to vector<128xf32>
      %181 = vector.shape_cast %180 : vector<128xf32> to vector<128x1xf32>
      %cst_52 = arith.constant 1.280000e+02 : f32
      %182 = vector.broadcast %cst_52 : f32 to vector<128x1xf32>
      %183 = arith.divf %181, %182 : vector<128x1xf32>
      %cst_53 = arith.constant 9.99999997E-7 : f32
      %184 = vector.broadcast %cst_53 : f32 to vector<128x1xf32>
      %185 = arith.addf %183, %184 : vector<128x1xf32>
      %186 = math.rsqrt %185 : vector<128x1xf32>
      %187 = vector.broadcast %186 : vector<128x1xf32> to vector<128x128xf32>
      %188 = arith.mulf %173, %187 : vector<128x128xf32>
      %189 = vector.broadcast %178 : vector<1x128xf32> to vector<128x128xf32>
      %190 = arith.mulf %188, %189 : vector<128x128xf32>
      %c0_54 = arith.constant 0 : index
      %c0_55 = arith.constant 0 : index
      %191 = vector.load %arg5[%c0_54, %c0_55] : memref<8x128xf32, #tpu.memory_space<vmem>>, vector<8x128xf32>
      %cst_56 = arith.constant dense<0.000000e+00> : vector<8x128xf32>
      %192 = tpu.matmul %191, %190, %cst_56 {dimension_numbers = #tpu.dot_dimension_numbers<[1], [0], [0], [1], [0, 0, 1, 1], [], []>} : vector<8x128xf32>, vector<128x128xf32>, vector<8x128xf32> -> vector<8x128xf32>
      %c0_57 = arith.constant 0 : index
      %c0_58 = arith.constant 0 : index
      %193 = vector.load %arg13[%c0_57, %c0_58] : memref<1x128xf32, #tpu.memory_space<vmem>>, vector<1x128xf32>
      %194 = vector.broadcast %193 : vector<1x128xf32> to vector<8x128xf32>
      %195 = arith.mulf %192, %194 : vector<8x128xf32>
      %cst_59 = arith.constant dense<0.000000e+00> : vector<8xf32>
      %196 = vector.multi_reduction <add>, %195, %cst_59 [1] : vector<8x128xf32> to vector<8xf32>
      %197 = vector.shape_cast %196 : vector<8xf32> to vector<8x1xf32>
      %c0_60 = arith.constant 0 : index
      %c0_61 = arith.constant 0 : index
      %198 = memref.load %arg14[%c0_60, %c0_61] : memref<1x1xf32, #tpu.memory_space<smem>>
      %199 = vector.broadcast %198 : f32 to vector<8x1xf32>
      %200 = arith.addf %197, %199 : vector<8x1xf32>
      %201 = vector.shape_cast %200 : vector<8x1xf32> to vector<2x4xf32>
      %c0_62 = arith.constant 0 : index
      %c0_63 = arith.constant 0 : index
      %202 = vector.load %arg15[%c0_62, %c0_63] : memref<2x4xf32, #tpu.memory_space<vmem>>, vector<2x4xf32>
      tpu.vector_store %arg15[%c0_62, %c0_63], %201 {strides = array<i32>} : memref<2x4xf32, #tpu.memory_space<vmem>>, vector<2x4xf32>,
    } else {
    }
    return
  }
  func.func @transform_0(%arg0: i32) -> (i32, i32) {
    %c0_i32 = arith.constant 0 : i32
    %c0_i32_0 = arith.constant 0 : i32
    %c0_i32_1 = arith.constant 0 : i32
    return %c0_i32, %c0_i32_0 : i32, i32
  }
  func.func @transform_1(%arg0: i32) -> (i32, i32) {
    %c0_i32 = arith.constant 0 : i32
    %c0_i32_0 = arith.constant 0 : i32
    %c0_i32_1 = arith.constant 0 : i32
    return %c0_i32, %c0_i32_0 : i32, i32
  }
  func.func @transform_2(%arg0: i32) -> (i32, i32) {
    %c0_i32 = arith.constant 0 : i32
    %c0_i32_0 = arith.constant 0 : i32
    %c0_i32_1 = arith.constant 0 : i32
    return %c0_i32, %c0_i32_0 : i32, i32
  }
  func.func @transform_3(%arg0: i32) -> (i32, i32) {
    %c0_i32 = arith.constant 0 : i32
    %c0_i32_0 = arith.constant 0 : i32
    %c0_i32_1 = arith.constant 0 : i32
    return %c0_i32, %c0_i32_0 : i32, i32
  }
  func.func @transform_4(%arg0: i32) -> (i32, i32) {
    %c0_i32 = arith.constant 0 : i32
    %c0_i32_0 = arith.constant 0 : i32
    %c0_i32_1 = arith.constant 0 : i32
    return %c0_i32, %c0_i32_0 : i32, i32
  }
  func.func @transform_5(%arg0: i32) -> (i32, i32, i32) {
    %c0_i32 = arith.constant 0 : i32
    %c0_i32_0 = arith.constant 0 : i32
    %c0_i32_1 = arith.constant 0 : i32
    return %arg0, %c0_i32, %c0_i32_0 : i32, i32, i32
  }
  func.func @transform_6(%arg0: i32) -> (i32, i32, i32) {
    %c0_i32 = arith.constant 0 : i32
    %c0_i32_0 = arith.constant 0 : i32
    %c0_i32_1 = arith.constant 0 : i32
    return %arg0, %c0_i32, %c0_i32_0 : i32, i32, i32
  }
  func.func @transform_7(%arg0: i32) -> (i32, i32, i32) {
    %c0_i32 = arith.constant 0 : i32
    %c0_i32_0 = arith.constant 0 : i32
    %c0_i32_1 = arith.constant 0 : i32
    return %arg0, %c0_i32, %c0_i32_0 : i32, i32, i32
  }
  func.func @transform_8(%arg0: i32) -> (i32, i32, i32) {
    %c0_i32 = arith.constant 0 : i32
    %c0_i32_0 = arith.constant 0 : i32
    %c0_i32_1 = arith.constant 0 : i32
    return %arg0, %c0_i32, %c0_i32_0 : i32, i32, i32
  }
  func.func @transform_9(%arg0: i32) -> (i32, i32, i32) {
    %c0_i32 = arith.constant 0 : i32
    %c0_i32_0 = arith.constant 0 : i32
    %c0_i32_1 = arith.constant 0 : i32
    return %arg0, %c0_i32, %c0_i32_0 : i32, i32, i32
  }
  func.func @transform_10(%arg0: i32) -> (i32, i32, i32) {
    %c0_i32 = arith.constant 0 : i32
    %c0_i32_0 = arith.constant 0 : i32
    %c0_i32_1 = arith.constant 0 : i32
    return %arg0, %c0_i32, %c0_i32_0 : i32, i32, i32
  }
  func.func @transform_11(%arg0: i32) -> (i32, i32) {
    %c0_i32 = arith.constant 0 : i32
    %c0_i32_0 = arith.constant 0 : i32
    %c0_i32_1 = arith.constant 0 : i32
    return %c0_i32, %c0_i32_0 : i32, i32
  }
  func.func @transform_12(%arg0: i32) -> (i32, i32) {
    %c0_i32 = arith.constant 0 : i32
    %c0_i32_0 = arith.constant 0 : i32
    %c0_i32_1 = arith.constant 0 : i32
    return %c0_i32, %c0_i32_0 : i32, i32
  }
  func.func @transform_13(%arg0: i32) -> (i32, i32) {
    %c0_i32 = arith.constant 0 : i32
    %c0_i32_0 = arith.constant 0 : i32
    %c0_i32_1 = arith.constant 0 : i32
    return %c0_i32, %c0_i32_0 : i32, i32
  }
  func.func @transform_14(%arg0: i32) -> (i32, i32) {
    %c0_i32 = arith.constant 0 : i32
    %c0_i32_0 = arith.constant 0 : i32
    %c0_i32_1 = arith.constant 0 : i32
    return %c0_i32, %c0_i32_0 : i32, i32
  }
}

</mosaic_0001>

<llo_original>
// kernel: tpu_custom_call.1
$region0: #{tpu_custom_call.1}
  #allocation0 [shape = 'u32[]', space=smem, size = 0x4, offset = 0x4, fixed_abs, tag = 'smem constant byte address 0x4 - core index']
  #allocation1 [shape = 'u32[144,128]{1,0:T(1,128)}', space=vmem, size = 0x12000, scoped, tag = 'internal scratch']
  #allocation2 [shape = 'f32[128,128]{1,0:T(8,128)}', space=vmem, size = 0x10000, scoped, tag = 'scratch operand']
  #allocation3 [shape = 'f32[128,128]{1,0:T(8,128)}', space=vmem, size = 0x10000, scoped, tag = 'scratch operand']
  #allocation4 [shape = 'f32[1,1]{1,0:T(1,128)S(6)}', space=smem, size = 0x200, scoped, tag = 'scoped memory for tpu_custom_call.1']
  %s0 = inlined_call_operand.vmem [shape: f32[128,128], index: 0, kind: input, shape index: {}]
  %s1 = inlined_call_operand.hbm [shape: s32[1,128], index: 1, kind: input, shape index: {}]
  %s2 = inlined_call_operand.vmem [shape: s32[128,1], index: 2, kind: input, shape index: {}]
  %s3 = inlined_call_operand.vmem [shape: f32[1,128], index: 3, kind: input, shape index: {}]
  %s4 = inlined_call_operand.vmem [shape: f32[8,128], index: 4, kind: input, shape index: {}]
  %s5 = inlined_call_operand.vmem [shape: f32[2,1,128], index: 5, kind: input, shape index: {}]
  %s6 = inlined_call_operand.hbm [shape: bf16[2,128,384], index: 6, kind: input, shape index: {}]
  %s7 = inlined_call_operand.hbm [shape: bf16[2,128,128], index: 7, kind: input, shape index: {}]
  %s8 = inlined_call_operand.vmem [shape: f32[2,1,128], index: 8, kind: input, shape index: {}]
  %s9 = inlined_call_operand.hbm [shape: bf16[2,128,512], index: 9, kind: input, shape index: {}]
  %s10 = inlined_call_operand.hbm [shape: bf16[2,256,128], index: 10, kind: input, shape index: {}]
  %s11 = inlined_call_operand.vmem [shape: f32[1,128], index: 11, kind: input, shape index: {}]
  %s12 = inlined_call_operand.vmem [shape: f32[1,128], index: 12, kind: input, shape index: {}]
  %s13 = inlined_call_operand.<no memory space> [shape: f32[1,1], index: 13, kind: input, shape index: {}]
  %s14 = inlined_call_operand.hbm [shape: f32[2,4], index: 14, kind: output, shape index: {}]
  %s15 = sld [smem:[#allocation0]]
  $region117: #{tpu_custom_call.1} parent=0
    _
  %s17 = ssub.s32 1, %s15
  %s18 = scalar_select 0, %s17, %s15
  %19 = sst [smem:[#allocation4]] %s13
  $region1: #{tpu_custom_call.1} parent=0
    #allocation5 [shape = 'u8[512]{0}', space=vmem, size = 0x400, scoped, tag = 'input window, operand 1, single buffered']
    #allocation6 [shape = 's32[2]{0}', space=sflag, size = 0x8, scoped, tag = 'scoped memory for tpu_custom_call.1']
    #allocation7 [shape = 's32[2]{0}', space=sflag, size = 0x8, scoped, tag = 'scoped memory for tpu_custom_call.1']
    #allocation8 [shape = 'u8[196608]{0}', space=vmem, size = 0x30000, scoped, tag = 'input window, operand 6']
    #allocation9 [shape = 's32[2]{0}', space=sflag, size = 0x8, scoped, tag = 'scoped memory for tpu_custom_call.1']
    #allocation10 [shape = 'u8[65536]{0}', space=vmem, size = 0x10000, scoped, tag = 'input window, operand 7']
    #allocation11 [shape = 'u8[262144]{0}', space=vmem, size = 0x40000, scoped, tag = 'input window, operand 9']
    #allocation12 [shape = 's32[2]{0}', space=sflag, size = 0x8, scoped, tag = 'scoped memory for tpu_custom_call.1']
    #allocation13 [shape = 'u8[131072]{0}', space=vmem, size = 0x20000, scoped, tag = 'input window, operand 10']
    #allocation14 [shape = 'u8[1024]{0}', space=vmem, size = 0x400, scoped, tag = 'output window, operand 0, single buffered']
    %20 = vsyncpa [#allocation6], 0
    %21 = vsyncpa [#allocation9], 0
    %s22 = scalar_lea.sflag [#allocation9], 1
    %23 = vsyncpa %s22, 0
    %24 = vsyncpa [#allocation12], 0
    %s25 = scalar_lea.sflag [#allocation12], 1
    %26 = vsyncpa %s25, 0
    %27 = vsyncpa [#allocation7], 0
    loop: start=0, step=1, limit=4
    $region2: #{tpu_custom_call.1} parent=1 // loop_pre_header
      _
    $region3: #{tpu_custom_call.1} parent=1 // loop_header
      %s29 = sphi 0, %s33
      %p30 = scmp.ge.s32.totalorder %s29, 4
      %s37 = sphi 0, %s37
      %s39 = sphi 0, %s37
      %s40 = sphi 0, %s39
      %s54 = sphi 0, %s40
      %s58 = sphi 0, %s58
      %s60 = sphi 0, %s58
      %s61 = sphi 0, %s60
      %s75 = sphi 0, %s61
      %s79 = sphi 0, %s79
      %s81 = sphi 0, %s79
      %s82 = sphi 0, %s81
      %s96 = sphi 0, %s82
      %s100 = sphi 0, %s100
      %s102 = sphi 0, %s100
      %s103 = sphi 0, %s102
      %s117 = sphi 0, %s103
      %s121 = sphi 0, %s121
      %s123 = sphi 0, %s121
      %s124 = sphi 0, %s123
      %s138 = sphi 0, %s124
      %s144 = sphi 0, %s146
      %s147 = sphi 0, %s144
      %s148 = sphi 0, %s147
      %s164 = sphi 0, %s148
      %s170 = sphi 0, %s172
      %s173 = sphi 0, %s170
      %s174 = sphi 0, %s173
      %s190 = sphi 0, %s174
      %s196 = sphi 0, %s198
      %s199 = sphi 0, %s196
      %s200 = sphi 0, %s199
      %s216 = sphi 0, %s200
      %s222 = sphi 0, %s224
      %s225 = sphi 0, %s222
      %s226 = sphi 0, %s225
      %s242 = sphi 0, %s226
      %s248 = sphi 0, %s250
      %s251 = sphi 0, %s248
      %s252 = sphi 0, %s251
      %s268 = sphi 0, %s252
      %s274 = sphi 0, %s276
      %s277 = sphi 0, %s274
      %s278 = sphi 0, %s277
      %s294 = sphi 0, %s278
      %s298 = sphi 0, %s298
      %s300 = sphi 0, %s298
      %s301 = sphi 0, %s300
      %s315 = sphi 0, %s301
      %s319 = sphi 0, %s319
      %s321 = sphi 0, %s319
      %s322 = sphi 0, %s321
      %s336 = sphi 0, %s322
      %s340 = sphi 0, %s340
      %s342 = sphi 0, %s340
      %s343 = sphi 0, %s342
      %s357 = sphi 0, %s343
      %s361 = sphi 0, %s361
      %s363 = sphi 0, %s361
      %s364 = sphi 0, %s363
      %s378 = sphi 0, %s364
    $region4: #{tpu_custom_call.1} parent=1 // loop_header_branch
      %32 = sbr.rel (%p30) target = $region8
    $region5: #{tpu_custom_call.1} parent=1 // loop_body
      %s34 = ssub.s32 %s29, 1
      %s35 = ssub.s32 %s29, 2
      %s36 = sadd.s32 %s29, 1
      %s38 = sadd.s32 %s37, 1
      %p41 = scmp.eq.s32.totalorder %s29, 1
      %p42 = scmp.ne.s32.totalorder %s37, %s39
      %p43 = scmp.eq.s32.totalorder %s29, 0
      %p44 = por %p42, %p43
      %p45 = scmp.ne.s32.totalorder %s37, %s39
      %p46 = scmp.eq.s32.totalorder %s34, 1
      %p47 = por %p45, %p46
      %p48 = scmp.ne.s32.totalorder %s39, %s40
      %p49 = scmp.eq.s32.totalorder %s34, 0
      %p50 = por %p48, %p49
      %p51 = scmp.ne.s32.totalorder %s39, %s40
      %p52 = scmp.eq.s32.totalorder %s35, 1
      %p53 = por %p51, %p52
      %p55 = scmp.ne.s32.totalorder %s40, %s54
      %p56 = scmp.eq.s32.totalorder %s35, 0
      %p57 = por %p55, %p56
      %s59 = sadd.s32 %s58, 1
      %p62 = scmp.eq.s32.totalorder %s29, 1
      %p63 = scmp.ne.s32.totalorder %s58, %s60
      %p64 = scmp.eq.s32.totalorder %s29, 0
      %p65 = por %p63, %p64
      %p66 = scmp.ne.s32.totalorder %s58, %s60
      %p67 = scmp.eq.s32.totalorder %s34, 1
      %p68 = por %p66, %p67
      %p69 = scmp.ne.s32.totalorder %s60, %s61
      %p70 = scmp.eq.s32.totalorder %s34, 0
      %p71 = por %p69, %p70
      %p72 = scmp.ne.s32.totalorder %s60, %s61
      %p73 = scmp.eq.s32.totalorder %s35, 1
      %p74 = por %p72, %p73
      %p76 = scmp.ne.s32.totalorder %s61, %s75
      %p77 = scmp.eq.s32.totalorder %s35, 0
      %p78 = por %p76, %p77
      %s80 = sadd.s32 %s79, 1
      %p83 = scmp.eq.s32.totalorder %s29, 1
      %p84 = scmp.ne.s32.totalorder %s79, %s81
      %p85 = scmp.eq.s32.totalorder %s29, 0
      %p86 = por %p84, %p85
      %p87 = scmp.ne.s32.totalorder %s79, %s81
      %p88 = scmp.eq.s32.totalorder %s34, 1
      %p89 = por %p87, %p88
      %p90 = scmp.ne.s32.totalorder %s81, %s82
      %p91 = scmp.eq.s32.totalorder %s34, 0
      %p92 = por %p90, %p91
      %p93 = scmp.ne.s32.totalorder %s81, %s82
      %p94 = scmp.eq.s32.totalorder %s35, 1
      %p95 = por %p93, %p94
      %p97 = scmp.ne.s32.totalorder %s82, %s96
      %p98 = scmp.eq.s32.totalorder %s35, 0
      %p99 = por %p97, %p98
      %s101 = sadd.s32 %s100, 1
      %p104 = scmp.eq.s32.totalorder %s29, 1
      %p105 = scmp.ne.s32.totalorder %s100, %s102
      %p106 = scmp.eq.s32.totalorder %s29, 0
      %p107 = por %p105, %p106
      %p108 = scmp.ne.s32.totalorder %s100, %s102
      %p109 = scmp.eq.s32.totalorder %s34, 1
      %p110 = por %p108, %p109
      %p111 = scmp.ne.s32.totalorder %s102, %s103
      %p112 = scmp.eq.s32.totalorder %s34, 0
      %p113 = por %p111, %p112
      %p114 = scmp.ne.s32.totalorder %s102, %s103
      %p115 = scmp.eq.s32.totalorder %s35, 1
      %p116 = por %p114, %p115
      %p118 = scmp.ne.s32.totalorder %s103, %s117
      %p119 = scmp.eq.s32.totalorder %s35, 0
      %p120 = por %p118, %p119
      %s122 = sadd.s32 %s121, 1
      %p125 = scmp.eq.s32.totalorder %s29, 1
      %p126 = scmp.ne.s32.totalorder %s121, %s123
      %p127 = scmp.eq.s32.totalorder %s29, 0
      %p128 = por %p126, %p127
      %p129 = scmp.ne.s32.totalorder %s121, %s123
      %p130 = scmp.eq.s32.totalorder %s34, 1
      %p131 = por %p129, %p130
      %p132 = scmp.ne.s32.totalorder %s123, %s124
      %p133 = scmp.eq.s32.totalorder %s34, 0
      %p134 = por %p132, %p133
      %p135 = scmp.ne.s32.totalorder %s123, %s124
      %p136 = scmp.eq.s32.totalorder %s35, 1
      %p137 = por %p135, %p136
      %p139 = scmp.ne.s32.totalorder %s124, %s138
      %p140 = scmp.eq.s32.totalorder %s35, 0
      %p141 = por %p139, %p140
      %s142 = ssub.s32 %s29, %s36
      %p143 = scmp.eq.s32.totalorder %s142, 0
      %s145 = sadd.s32 %s144, 1
      %s146 = scalar_select %p143, %s144, %s145
      %p149 = pneg %p143
      %p150 = scmp.eq.s32.totalorder %s29, 1
      %p151 = por %p149, %p150
      %p152 = scmp.ne.s32.totalorder %s144, %s147
      %p153 = scmp.eq.s32.totalorder %s29, 0
      %p154 = por %p152, %p153
      %p155 = scmp.ne.s32.totalorder %s144, %s147
      %p156 = scmp.eq.s32.totalorder %s34, 1
      %p157 = por %p155, %p156
      %p158 = scmp.ne.s32.totalorder %s147, %s148
      %p159 = scmp.eq.s32.totalorder %s34, 0
      %p160 = por %p158, %p159
      %p161 = scmp.ne.s32.totalorder %s147, %s148
      %p162 = scmp.eq.s32.totalorder %s35, 1
      %p163 = por %p161, %p162
      %p165 = scmp.ne.s32.totalorder %s148, %s164
      %p166 = scmp.eq.s32.totalorder %s35, 0
      %p167 = por %p165, %p166
      %s168 = ssub.s32 %s29, %s36
      %p169 = scmp.eq.s32.totalorder %s168, 0
      %s171 = sadd.s32 %s170, 1
      %s172 = scalar_select %p169, %s170, %s171
      %p175 = pneg %p169
      %p176 = scmp.eq.s32.totalorder %s29, 1
      %p177 = por %p175, %p176
      %p178 = scmp.ne.s32.totalorder %s170, %s173
      %p179 = scmp.eq.s32.totalorder %s29, 0
      %p180 = por %p178, %p179
      %p181 = scmp.ne.s32.totalorder %s170, %s173
      %p182 = scmp.eq.s32.totalorder %s34, 1
      %p183 = por %p181, %p182
      %p184 = scmp.ne.s32.totalorder %s173, %s174
      %p185 = scmp.eq.s32.totalorder %s34, 0
      %p186 = por %p184, %p185
      %p187 = scmp.ne.s32.totalorder %s173, %s174
      %p188 = scmp.eq.s32.totalorder %s35, 1
      %p189 = por %p187, %p188
      %p191 = scmp.ne.s32.totalorder %s174, %s190
      %p192 = scmp.eq.s32.totalorder %s35, 0
      %p193 = por %p191, %p192
      %s194 = ssub.s32 %s29, %s36
      %p195 = scmp.eq.s32.totalorder %s194, 0
      %s197 = sadd.s32 %s196, 1
      %s198 = scalar_select %p195, %s196, %s197
      %p201 = pneg %p195
      %p202 = scmp.eq.s32.totalorder %s29, 1
      %p203 = por %p201, %p202
      %p204 = scmp.ne.s32.totalorder %s196, %s199
      %p205 = scmp.eq.s32.totalorder %s29, 0
      %p206 = por %p204, %p205
      %p207 = scmp.ne.s32.totalorder %s196, %s199
      %p208 = scmp.eq.s32.totalorder %s34, 1
      %p209 = por %p207, %p208
      %p210 = scmp.ne.s32.totalorder %s199, %s200
      %p211 = scmp.eq.s32.totalorder %s34, 0
      %p212 = por %p210, %p211
      %p213 = scmp.ne.s32.totalorder %s199, %s200
      %p214 = scmp.eq.s32.totalorder %s35, 1
      %p215 = por %p213, %p214
      %p217 = scmp.ne.s32.totalorder %s200, %s216
      %p218 = scmp.eq.s32.totalorder %s35, 0
      %p219 = por %p217, %p218
      %s220 = ssub.s32 %s29, %s36
      %p221 = scmp.eq.s32.totalorder %s220, 0
      %s223 = sadd.s32 %s222, 1
      %s224 = scalar_select %p221, %s222, %s223
      %p227 = pneg %p221
      %p228 = scmp.eq.s32.totalorder %s29, 1
      %p229 = por %p227, %p228
      %p230 = scmp.ne.s32.totalorder %s222, %s225
      %p231 = scmp.eq.s32.totalorder %s29, 0
      %p232 = por %p230, %p231
      %p233 = scmp.ne.s32.totalorder %s222, %s225
      %p234 = scmp.eq.s32.totalorder %s34, 1
      %p235 = por %p233, %p234
      %p236 = scmp.ne.s32.totalorder %s225, %s226
      %p237 = scmp.eq.s32.totalorder %s34, 0
      %p238 = por %p236, %p237
      %p239 = scmp.ne.s32.totalorder %s225, %s226
      %p240 = scmp.eq.s32.totalorder %s35, 1
      %p241 = por %p239, %p240
      %p243 = scmp.ne.s32.totalorder %s226, %s242
      %p244 = scmp.eq.s32.totalorder %s35, 0
      %p245 = por %p243, %p244
      %s246 = ssub.s32 %s29, %s36
      %p247 = scmp.eq.s32.totalorder %s246, 0
      %s249 = sadd.s32 %s248, 1
      %s250 = scalar_select %p247, %s248, %s249
      %p253 = pneg %p247
      %p254 = scmp.eq.s32.totalorder %s29, 1
      %p255 = por %p253, %p254
      %p256 = scmp.ne.s32.totalorder %s248, %s251
      %p257 = scmp.eq.s32.totalorder %s29, 0
      %p258 = por %p256, %p257
      %p259 = scmp.ne.s32.totalorder %s248, %s251
      %p260 = scmp.eq.s32.totalorder %s34, 1
      %p261 = por %p259, %p260
      %p262 = scmp.ne.s32.totalorder %s251, %s252
      %p263 = scmp.eq.s32.totalorder %s34, 0
      %p264 = por %p262, %p263
      %p265 = scmp.ne.s32.totalorder %s251, %s252
      %p266 = scmp.eq.s32.totalorder %s35, 1
      %p267 = por %p265, %p266
      %p269 = scmp.ne.s32.totalorder %s252, %s268
      %p270 = scmp.eq.s32.totalorder %s35, 0
      %p271 = por %p269, %p270
      %s272 = ssub.s32 %s29, %s36
      %p273 = scmp.eq.s32.totalorder %s272, 0
      %s275 = sadd.s32 %s274, 1
      %s276 = scalar_select %p273, %s274, %s275
      %p279 = pneg %p273
      %p280 = scmp.eq.s32.totalorder %s29, 1
      %p281 = por %p279, %p280
      %p282 = scmp.ne.s32.totalorder %s274, %s277
      %p283 = scmp.eq.s32.totalorder %s29, 0
      %p284 = por %p282, %p283
      %p285 = scmp.ne.s32.totalorder %s274, %s277
      %p286 = scmp.eq.s32.totalorder %s34, 1
      %p287 = por %p285, %p286
      %p288 = scmp.ne.s32.totalorder %s277, %s278
      %p289 = scmp.eq.s32.totalorder %s34, 0
      %p290 = por %p288, %p289
      %p291 = scmp.ne.s32.totalorder %s277, %s278
      %p292 = scmp.eq.s32.totalorder %s35, 1
      %p293 = por %p291, %p292
      %p295 = scmp.ne.s32.totalorder %s278, %s294
      %p296 = scmp.eq.s32.totalorder %s35, 0
      %p297 = por %p295, %p296
      %s299 = sadd.s32 %s298, 1
      %p302 = scmp.eq.s32.totalorder %s29, 1
      %p303 = scmp.ne.s32.totalorder %s298, %s300
      %p304 = scmp.eq.s32.totalorder %s29, 0
      %p305 = por %p303, %p304
      %p306 = scmp.ne.s32.totalorder %s298, %s300
      %p307 = scmp.eq.s32.totalorder %s34, 1
      %p308 = por %p306, %p307
      %p309 = scmp.ne.s32.totalorder %s300, %s301
      %p310 = scmp.eq.s32.totalorder %s34, 0
      %p311 = por %p309, %p310
      %p312 = scmp.ne.s32.totalorder %s300, %s301
      %p313 = scmp.eq.s32.totalorder %s35, 1
      %p314 = por %p312, %p313
      %p316 = scmp.ne.s32.totalorder %s301, %s315
      %p317 = scmp.eq.s32.totalorder %s35, 0
      %p318 = por %p316, %p317
      %s320 = sadd.s32 %s319, 1
      %p323 = scmp.eq.s32.totalorder %s29, 1
      %p324 = scmp.ne.s32.totalorder %s319, %s321
      %p325 = scmp.eq.s32.totalorder %s29, 0
      %p326 = por %p324, %p325
      %p327 = scmp.ne.s32.totalorder %s319, %s321
      %p328 = scmp.eq.s32.totalorder %s34, 1
      %p329 = por %p327, %p328
      %p330 = scmp.ne.s32.totalorder %s321, %s322
      %p331 = scmp.eq.s32.totalorder %s34, 0
      %p332 = por %p330, %p331
      %p333 = scmp.ne.s32.totalorder %s321, %s322
      %p334 = scmp.eq.s32.totalorder %s35, 1
      %p335 = por %p333, %p334
      %p337 = scmp.ne.s32.totalorder %s322, %s336
      %p338 = scmp.eq.s32.totalorder %s35, 0
      %p339 = por %p337, %p338
      %s341 = sadd.s32 %s340, 1
      %p344 = scmp.eq.s32.totalorder %s29, 1
      %p345 = scmp.ne.s32.totalorder %s340, %s342
      %p346 = scmp.eq.s32.totalorder %s29, 0
      %p347 = por %p345, %p346
      %p348 = scmp.ne.s32.totalorder %s340, %s342
      %p349 = scmp.eq.s32.totalorder %s34, 1
      %p350 = por %p348, %p349
      %p351 = scmp.ne.s32.totalorder %s342, %s343
      %p352 = scmp.eq.s32.totalorder %s34, 0
      %p353 = por %p351, %p352
      %p354 = scmp.ne.s32.totalorder %s342, %s343
      %p355 = scmp.eq.s32.totalorder %s35, 1
      %p356 = por %p354, %p355
      %p358 = scmp.ne.s32.totalorder %s343, %s357
      %p359 = scmp.eq.s32.totalorder %s35, 0
      %p360 = por %p358, %p359
      %s362 = sadd.s32 %s361, 1
      %p365 = scmp.eq.s32.totalorder %s29, 1
      %p366 = scmp.ne.s32.totalorder %s361, %s363
      %p367 = scmp.eq.s32.totalorder %s29, 0
      %p368 = por %p366, %p367
      %p369 = scmp.ne.s32.totalorder %s361, %s363
      %p370 = scmp.eq.s32.totalorder %s34, 1
      %p371 = por %p369, %p370
      %p372 = scmp.ne.s32.totalorder %s363, %s364
      %p373 = scmp.eq.s32.totalorder %s34, 0
      %p374 = por %p372, %p373
      %p375 = scmp.ne.s32.totalorder %s363, %s364
      %p376 = scmp.eq.s32.totalorder %s35, 1
      %p377 = por %p375, %p376
      %p379 = scmp.ne.s32.totalorder %s364, %s378
      %p380 = scmp.eq.s32.totalorder %s35, 0
      %p381 = por %p379, %p380
      %p382 = scmp.le.s32.totalorder 1, %s29
      %p383 = scmp.lt.s32.totalorder %s29, 3
      %p384 = pnand %p382, %p383
      %p385 = pneg %p384
      // Predicated region
      $region9: #{tpu_custom_call.1} parent=5 // pred_check
        _
      $region10: #{tpu_custom_call.1} parent=5 // pred_check_branch
        %387 = sbr.rel (%p384) target = $region12
      $region11: #{tpu_custom_call.1} parent=5 // pred_region
        %s388 = ssub.s32 %s29, 1
        // Predicated region
        $region13: #{tpu_custom_call.1} parent=11 // pred_check
          %p389 = pneg %p50
        $region14: #{tpu_custom_call.1} parent=11 // pred_check_branch
          %391 = sbr.rel (%p389) target = $region16
        $region15: #{tpu_custom_call.1} parent=11 // pred_region
          _
        $region16: #{tpu_custom_call.1} parent=11 // pred_fallthru
          _
        // Predicated region
        $region17: #{tpu_custom_call.1} parent=11 // pred_check
          %p392 = pneg %p71
        $region18: #{tpu_custom_call.1} parent=11 // pred_check_branch
          %394 = sbr.rel (%p392) target = $region20
        $region19: #{tpu_custom_call.1} parent=11 // pred_region
          %s396 = ssub.s32 16, 16
          %397 = vsyncadd [#allocation6], %s396
          %s399 = sshll.u32 [#allocation5], 4
          %s400 = int_to_ptr.vmem [resolvable:$true] %s399
          %402 = dma.hbm_to_vmem [thread:$0]  %s1, 16, %s400, [#allocation6]
        $region20: #{tpu_custom_call.1} parent=11 // pred_fallthru
          _
        // Predicated region
        $region21: #{tpu_custom_call.1} parent=11 // pred_check
          %p403 = pneg %p92
        $region22: #{tpu_custom_call.1} parent=11 // pred_check_branch
          %405 = sbr.rel (%p403) target = $region24
        $region23: #{tpu_custom_call.1} parent=11 // pred_region
          _
        $region24: #{tpu_custom_call.1} parent=11 // pred_fallthru
          _
        // Predicated region
        $region25: #{tpu_custom_call.1} parent=11 // pred_check
          %p406 = pneg %p113
        $region26: #{tpu_custom_call.1} parent=11 // pred_check_branch
          %408 = sbr.rel (%p406) target = $region28
        $region27: #{tpu_custom_call.1} parent=11 // pred_region
          _
        $region28: #{tpu_custom_call.1} parent=11 // pred_fallthru
          _
        // Predicated region
        $region29: #{tpu_custom_call.1} parent=11 // pred_check
          %p409 = pneg %p134
        $region30: #{tpu_custom_call.1} parent=11 // pred_check_branch
          %411 = sbr.rel (%p409) target = $region32
        $region31: #{tpu_custom_call.1} parent=11 // pred_region
          _
        $region32: #{tpu_custom_call.1} parent=11 // pred_fallthru
          _
        // Predicated region
        $region33: #{tpu_custom_call.1} parent=11 // pred_check
          %p412 = pneg %p311
        $region34: #{tpu_custom_call.1} parent=11 // pred_check_branch
          %414 = sbr.rel (%p412) target = $region36
        $region35: #{tpu_custom_call.1} parent=11 // pred_region
          _
        $region36: #{tpu_custom_call.1} parent=11 // pred_fallthru
          _
        // Predicated region
        $region37: #{tpu_custom_call.1} parent=11 // pred_check
          %p415 = pneg %p332
        $region38: #{tpu_custom_call.1} parent=11 // pred_check_branch
          %417 = sbr.rel (%p415) target = $region40
        $region39: #{tpu_custom_call.1} parent=11 // pred_region
          _
        $region40: #{tpu_custom_call.1} parent=11 // pred_fallthru
          _
        // Predicated region
        $region41: #{tpu_custom_call.1} parent=11 // pred_check
          %p418 = pneg %p353
        $region42: #{tpu_custom_call.1} parent=11 // pred_check_branch
          %420 = sbr.rel (%p418) target = $region44
        $region43: #{tpu_custom_call.1} parent=11 // pred_region
          _
        $region44: #{tpu_custom_call.1} parent=11 // pred_fallthru
          _
      $region12: #{tpu_custom_call.1} parent=5 // pred_fallthru
        _
      %p421 = scmp.lt.s32.totalorder %s29, 2
      // Predicated region
      $region45: #{tpu_custom_call.1} parent=5 // pred_check
        %p422 = pneg %p421
      $region46: #{tpu_custom_call.1} parent=5 // pred_check_branch
        %424 = sbr.rel (%p422) target = $region48
      $region47: #{tpu_custom_call.1} parent=5 // pred_region
        // Predicated region
        $region49: #{tpu_custom_call.1} parent=47 // pred_check
          %p425 = pneg %p154
        $region50: #{tpu_custom_call.1} parent=47 // pred_check_branch
          %427 = sbr.rel (%p425) target = $region52
        $region51: #{tpu_custom_call.1} parent=47 // pred_region
          %p428 = scmp.lt.s32.totalorder %s29, 1
          %s429 = scalar_select %p428, %s29, 1
          %s430 = scalar_lea.vmem %s5, %s429
        $region52: #{tpu_custom_call.1} parent=47 // pred_fallthru
          _
        // Predicated region
        $region53: #{tpu_custom_call.1} parent=47 // pred_check
          %p431 = pneg %p180
        $region54: #{tpu_custom_call.1} parent=47 // pred_check_branch
          %433 = sbr.rel (%p431) target = $region56
        $region55: #{tpu_custom_call.1} parent=47 // pred_region
          %s434 = sand.u32 %s29, 1
          %s435 = scalar_lea.sflag [#allocation9], %s434
          %s436 = sand.u32 %s170, 1
          %s437 = smul.addr %s436, 192
          %s438 = scalar_lea.vmem [#allocation8], %s437
          %s440 = ssub.s32 3072, 3072
          %441 = vsyncadd %s435, %s440
          %s442 = smul.addr %s29, 48
          %s443 = smul.addr %s442, 64
          %s444 = scalar_lea.hbm %s6, %s443
          %s445 = sshll.u32 %s438, 4
          %s446 = int_to_ptr.vmem [resolvable:$true] %s445
          %451 = dma.hbm_to_vmem [thread:$0]  %s444, 3072, %s446, %s435, 192, 192, 12
        $region56: #{tpu_custom_call.1} parent=47 // pred_fallthru
          _
        // Predicated region
        $region57: #{tpu_custom_call.1} parent=47 // pred_check
          %p452 = pneg %p206
        $region58: #{tpu_custom_call.1} parent=47 // pred_check_branch
          %454 = sbr.rel (%p452) target = $region60
        $region59: #{tpu_custom_call.1} parent=47 // pred_region
          %s455 = sand.u32 %s29, 1
          %s456 = scalar_lea.sflag [#allocation9], %s455
          %s457 = sand.u32 %s196, 1
          %s458 = smul.addr %s457, 64
          %s459 = scalar_lea.vmem [#allocation10], %s458
          %s461 = ssub.s32 1024, 1024
          %462 = vsyncadd %s456, %s461
          %s463 = smul.addr %s29, 16
          %s464 = smul.addr %s463, 64
          %s465 = scalar_lea.hbm %s7, %s464
          %s466 = sshll.u32 %s459, 4
          %s467 = int_to_ptr.vmem [resolvable:$true] %s466
          %472 = dma.hbm_to_vmem [thread:$0]  %s465, 1024, %s467, %s456, 64, 64, 4
        $region60: #{tpu_custom_call.1} parent=47 // pred_fallthru
          _
        // Predicated region
        $region61: #{tpu_custom_call.1} parent=47 // pred_check
          %p473 = pneg %p232
        $region62: #{tpu_custom_call.1} parent=47 // pred_check_branch
          %475 = sbr.rel (%p473) target = $region64
        $region63: #{tpu_custom_call.1} parent=47 // pred_region
          %p476 = scmp.lt.s32.totalorder %s29, 1
          %s477 = scalar_select %p476, %s29, 1
          %s478 = scalar_lea.vmem %s8, %s477
        $region64: #{tpu_custom_call.1} parent=47 // pred_fallthru
          _
        // Predicated region
        $region65: #{tpu_custom_call.1} parent=47 // pred_check
          %p479 = pneg %p258
        $region66: #{tpu_custom_call.1} parent=47 // pred_check_branch
          %481 = sbr.rel (%p479) target = $region68
        $region67: #{tpu_custom_call.1} parent=47 // pred_region
          %s482 = sand.u32 %s29, 1
          %s483 = scalar_lea.sflag [#allocation12], %s482
          %s484 = sand.u32 %s248, 1
          %s485 = smul.addr %s484, 256
          %s486 = scalar_lea.vmem [#allocation11], %s485
          %s488 = ssub.s32 4096, 4096
          %489 = vsyncadd %s483, %s488
          %s490 = smul.addr %s29, 64
          %s491 = smul.addr %s490, 64
          %s492 = scalar_lea.hbm %s9, %s491
          %s493 = sshll.u32 %s486, 4
          %s494 = int_to_ptr.vmem [resolvable:$true] %s493
          %499 = dma.hbm_to_vmem [thread:$0]  %s492, 4096, %s494, %s483, 256, 256, 16
        $region68: #{tpu_custom_call.1} parent=47 // pred_fallthru
          _
        // Predicated region
        $region69: #{tpu_custom_call.1} parent=47 // pred_check
          %p500 = pneg %p284
        $region70: #{tpu_custom_call.1} parent=47 // pred_check_branch
          %502 = sbr.rel (%p500) target = $region72
        $region71: #{tpu_custom_call.1} parent=47 // pred_region
          %s503 = sand.u32 %s29, 1
          %s504 = scalar_lea.sflag [#allocation12], %s503
          %s505 = sand.u32 %s274, 1
          %s506 = smul.addr %s505, 128
          %s507 = scalar_lea.vmem [#allocation13], %s506
          %s509 = ssub.s32 2048, 2048
          %510 = vsyncadd %s504, %s509
          %s511 = smul.addr %s29, 32
          %s512 = smul.addr %s511, 64
          %s513 = scalar_lea.hbm %s10, %s512
          %s514 = sshll.u32 %s507, 4
          %s515 = int_to_ptr.vmem [resolvable:$true] %s514
          %520 = dma.hbm_to_vmem [thread:$0]  %s513, 2048, %s515, %s504, 64, 64, 4
        $region72: #{tpu_custom_call.1} parent=47 // pred_fallthru
          _
      $region48: #{tpu_custom_call.1} parent=5 // pred_fallthru
        _
      %p521 = scmp.le.s32.totalorder 1, %s29
      %p522 = scmp.lt.s32.totalorder %s29, 3
      %p523 = pnand %p521, %p522
      %p524 = pneg %p523
      // Predicated region
      $region73: #{tpu_custom_call.1} parent=5 // pred_check
        _
      $region74: #{tpu_custom_call.1} parent=5 // pred_check_branch
        %526 = sbr.rel (%p523) target = $region76
      $region75: #{tpu_custom_call.1} parent=5 // pred_region
        %s527 = ssub.s32 %s29, 1
        // Predicated region
        $region77: #{tpu_custom_call.1} parent=75 // pred_check
          %p528 = pneg %p71
        $region78: #{tpu_custom_call.1} parent=75 // pred_check_branch
          %530 = sbr.rel (%p528) target = $region80
        $region79: #{tpu_custom_call.1} parent=75 // pred_region
          %531 = dma.done [#allocation6], 16
        $region80: #{tpu_custom_call.1} parent=75 // pred_fallthru
          _
        %s532 = sand.u32 %s34, 1
        %s533 = scalar_lea.sflag [#allocation9], %s532
        %s534 = sand.u32 %s173, 1
        %s535 = smul.addr %s534, 192
        %s536 = scalar_lea.vmem [#allocation8], %s535
        // Predicated region
        $region81: #{tpu_custom_call.1} parent=75 // pred_check
          %p537 = pneg %p186
        $region82: #{tpu_custom_call.1} parent=75 // pred_check_branch
          %539 = sbr.rel (%p537) target = $region84
        $region83: #{tpu_custom_call.1} parent=75 // pred_region
          %540 = dma.done %s533, 3072
        $region84: #{tpu_custom_call.1} parent=75 // pred_fallthru
          _
        %s541 = sand.u32 %s34, 1
        %s542 = scalar_lea.sflag [#allocation9], %s541
        %s543 = sand.u32 %s199, 1
        %s544 = smul.addr %s543, 64
        %s545 = scalar_lea.vmem [#allocation10], %s544
        // Predicated region
        $region85: #{tpu_custom_call.1} parent=75 // pred_check
          %p546 = pneg %p212
        $region86: #{tpu_custom_call.1} parent=75 // pred_check_branch
          %548 = sbr.rel (%p546) target = $region88
        $region87: #{tpu_custom_call.1} parent=75 // pred_region
          %549 = dma.done %s542, 1024
        $region88: #{tpu_custom_call.1} parent=75 // pred_fallthru
          _
        %s550 = sand.u32 %s34, 1
        %s551 = scalar_lea.sflag [#allocation12], %s550
        %s552 = sand.u32 %s251, 1
        %s553 = smul.addr %s552, 256
        %s554 = scalar_lea.vmem [#allocation11], %s553
        // Predicated region
        $region89: #{tpu_custom_call.1} parent=75 // pred_check
          %p555 = pneg %p264
        $region90: #{tpu_custom_call.1} parent=75 // pred_check_branch
          %557 = sbr.rel (%p555) target = $region92
        $region91: #{tpu_custom_call.1} parent=75 // pred_region
          %558 = dma.done %s551, 4096
        $region92: #{tpu_custom_call.1} parent=75 // pred_fallthru
          _
        %s559 = sand.u32 %s34, 1
        %s560 = scalar_lea.sflag [#allocation12], %s559
        %s561 = sand.u32 %s277, 1
        %s562 = smul.addr %s561, 128
        %s563 = scalar_lea.vmem [#allocation13], %s562
        // Predicated region
        $region93: #{tpu_custom_call.1} parent=75 // pred_check
          %p564 = pneg %p290
        $region94: #{tpu_custom_call.1} parent=75 // pred_check_branch
          %566 = sbr.rel (%p564) target = $region96
        $region95: #{tpu_custom_call.1} parent=75 // pred_region
          %567 = dma.done %s560, 2048
        $region96: #{tpu_custom_call.1} parent=75 // pred_fallthru
          _
        %p568 = pneg %p50
        %p569 = pneg %p47
        %p570 = pneg %p71
        %p571 = pneg %p68
        %p572 = pneg %p92
        %p573 = pneg %p89
        %p574 = pneg %p113
        %p575 = pneg %p110
        %p576 = pneg %p134
        %p577 = pneg %p131
        %p578 = scmp.lt.s32.totalorder %s34, 1
        %s579 = scalar_select %p578, %s34, 1
        %s580 = scalar_lea.vmem %s5, %s579
        %p581 = pneg %p160
        %p582 = pneg %p157
        %s583 = sand.u32 %s34, 1
        %s584 = scalar_lea.sflag [#allocation9], %s583
        %s585 = sand.u32 %s173, 1
        %s586 = smul.addr %s585, 192
        %s587 = scalar_lea.vmem [#allocation8], %s586
        %p588 = pneg %p186
        %p589 = pneg %p183
        %s590 = sand.u32 %s34, 1
        %s591 = scalar_lea.sflag [#allocation9], %s590
        %s592 = sand.u32 %s199, 1
        %s593 = smul.addr %s592, 64
        %s594 = scalar_lea.vmem [#allocation10], %s593
        %p595 = pneg %p212
        %p596 = pneg %p209
        %p597 = scmp.lt.s32.totalorder %s34, 1
        %s598 = scalar_select %p597, %s34, 1
        %s599 = scalar_lea.vmem %s8, %s598
        %p600 = pneg %p238
        %p601 = pneg %p235
        %s602 = sand.u32 %s34, 1
        %s603 = scalar_lea.sflag [#allocation12], %s602
        %s604 = sand.u32 %s251, 1
        %s605 = smul.addr %s604, 256
        %s606 = scalar_lea.vmem [#allocation11], %s605
        %p607 = pneg %p264
        %p608 = pneg %p261
        %s609 = sand.u32 %s34, 1
        %s610 = scalar_lea.sflag [#allocation12], %s609
        %s611 = sand.u32 %s277, 1
        %s612 = smul.addr %s611, 128
        %s613 = scalar_lea.vmem [#allocation13], %s612
        %p614 = pneg %p290
        %p615 = pneg %p287
        %p616 = pneg %p311
        %p617 = pneg %p308
        %p618 = pneg %p332
        %p619 = pneg %p329
        %p620 = pneg %p353
        %p621 = pneg %p350
        %p622 = pneg %p374
        %p623 = pneg %p371
        %p624 = scmp.lt.s32.totalorder %s34, 1
        %s625 = scalar_select %p624, %s34, 1
        %s626 = scalar_lea.vmem %s5, %s625
        %p627 = scmp.lt.s32.totalorder %s34, 1
        %s628 = scalar_select %p627, %s34, 1
        %s629 = scalar_lea.vmem %s8, %s628
        %p631 = scmp.eq.s32.totalorder %s34, 0
        // Predicated region
        $region97: #{tpu_custom_call.1} parent=75 // pred_check
          %p632 = pneg %p631
        $region98: #{tpu_custom_call.1} parent=75 // pred_check_branch
          %634 = sbr.rel (%p632) target = $region100
        $region99: #{tpu_custom_call.1} parent=75 // pred_region
          %v635 = vld [vmem:[%s0] sm:$0xff]
          %v636 = vld [vmem:[%s0 + $0x8] sm:$0xff]
          %v637 = vld [vmem:[%s0 + $0x10] sm:$0xff]
          %v638 = vld [vmem:[%s0 + $0x18] sm:$0xff]
          %v639 = vld [vmem:[%s0 + $0x20] sm:$0xff]
          %v640 = vld [vmem:[%s0 + $0x28] sm:$0xff]
          %v641 = vld [vmem:[%s0 + $0x30] sm:$0xff]
          %v642 = vld [vmem:[%s0 + $0x38] sm:$0xff]
          %v643 = vld [vmem:[%s0 + $0x40] sm:$0xff]
          %v644 = vld [vmem:[%s0 + $0x48] sm:$0xff]
          %v645 = vld [vmem:[%s0 + $0x50] sm:$0xff]
          %v646 = vld [vmem:[%s0 + $0x58] sm:$0xff]
          %v647 = vld [vmem:[%s0 + $0x60] sm:$0xff]
          %v648 = vld [vmem:[%s0 + $0x68] sm:$0xff]
          %v649 = vld [vmem:[%s0 + $0x70] sm:$0xff]
          %v650 = vld [vmem:[%s0 + $0x78] sm:$0xff]
          %651 = vst [vmem:[#allocation2] sm:$0xff] %v635
          %652 = vst [vmem:[#allocation2 + $0x8] sm:$0xff] %v636
          %653 = vst [vmem:[#allocation2 + $0x10] sm:$0xff] %v637
          %654 = vst [vmem:[#allocation2 + $0x18] sm:$0xff] %v638
          %655 = vst [vmem:[#allocation2 + $0x20] sm:$0xff] %v639
          %656 = vst [vmem:[#allocation2 + $0x28] sm:$0xff] %v640
          %657 = vst [vmem:[#allocation2 + $0x30] sm:$0xff] %v641
          %658 = vst [vmem:[#allocation2 + $0x38] sm:$0xff] %v642
          %659 = vst [vmem:[#allocation2 + $0x40] sm:$0xff] %v643
          %660 = vst [vmem:[#allocation2 + $0x48] sm:$0xff] %v644
          %661 = vst [vmem:[#allocation2 + $0x50] sm:$0xff] %v645
          %662 = vst [vmem:[#allocation2 + $0x58] sm:$0xff] %v646
          %663 = vst [vmem:[#allocation2 + $0x60] sm:$0xff] %v647
          %664 = vst [vmem:[#allocation2 + $0x68] sm:$0xff] %v648
          %665 = vst [vmem:[#allocation2 + $0x70] sm:$0xff] %v649
          %666 = vst [vmem:[#allocation2 + $0x78] sm:$0xff] %v650
          %v667 = vlaneseq
          %v668 = vshrl.u32 %v667, 7
          %v669 = vadd.s32 %v668, 8
          %v670 = vadd.s32 %v668, 16
          %v671 = vadd.s32 %v668, 24
          %v672 = vadd.s32 %v668, 32
          %v673 = vadd.s32 %v668, 40
          %v674 = vadd.s32 %v668, 48
          %v675 = vadd.s32 %v668, 56
          %v676 = vadd.s32 %v668, 64
          %v677 = vadd.s32 %v668, 72
          %v678 = vadd.s32 %v668, 80
          %v679 = vadd.s32 %v668, 88
          %v680 = vadd.s32 %v668, 96
          %v681 = vadd.s32 %v668, 104
          %v682 = vadd.s32 %v668, 112
          %v683 = vadd.s32 %v668, 120
          %v684 = vlaneseq
          %v685 = vand.u32 %v684, 127
          %v686 = vld [vmem:[%s2] sm:$0xff]
          %v687 = vld [vmem:[%s2 + $0x8] sm:$0xff]
          %v688 = vld [vmem:[%s2 + $0x10] sm:$0xff]
          %v689 = vld [vmem:[%s2 + $0x18] sm:$0xff]
          %v690 = vld [vmem:[%s2 + $0x20] sm:$0xff]
          %v691 = vld [vmem:[%s2 + $0x28] sm:$0xff]
          %v692 = vld [vmem:[%s2 + $0x30] sm:$0xff]
          %v693 = vld [vmem:[%s2 + $0x38] sm:$0xff]
          %v694 = vld [vmem:[%s2 + $0x40] sm:$0xff]
          %v695 = vld [vmem:[%s2 + $0x48] sm:$0xff]
          %v696 = vld [vmem:[%s2 + $0x50] sm:$0xff]
          %v697 = vld [vmem:[%s2 + $0x58] sm:$0xff]
          %v698 = vld [vmem:[%s2 + $0x60] sm:$0xff]
          %v699 = vld [vmem:[%s2 + $0x68] sm:$0xff]
          %v700 = vld [vmem:[%s2 + $0x70] sm:$0xff]
          %v701 = vld [vmem:[%s2 + $0x78] sm:$0xff]
          %v702 = vld [vmem:[#allocation5] sm:$0x1]
          %703 = vset.pattern.permute.xlu0 0
          %704 = vperm.xlu0 %703, %v686
          %v705 = vpop.permute.xlu0 %704
          %706 = vset.pattern.permute.xlu0 0
          %707 = vperm.xlu0 %706, %v687
          %v708 = vpop.permute.xlu0 %707
          %709 = vset.pattern.permute.xlu0 0
          %710 = vperm.xlu0 %709, %v688
          %v711 = vpop.permute.xlu0 %710
          %712 = vset.pattern.permute.xlu0 0
          %713 = vperm.xlu0 %712, %v689
          %v714 = vpop.permute.xlu0 %713
          %715 = vset.pattern.permute.xlu0 0
          %716 = vperm.xlu0 %715, %v690
          %v717 = vpop.permute.xlu0 %716
          %718 = vset.pattern.permute.xlu0 0
          %719 = vperm.xlu0 %718, %v691
          %v720 = vpop.permute.xlu0 %719
          %721 = vset.pattern.permute.xlu0 0
          %722 = vperm.xlu0 %721, %v692
          %v723 = vpop.permute.xlu0 %722
          %724 = vset.pattern.permute.xlu0 0
          %725 = vperm.xlu0 %724, %v693
          %v726 = vpop.permute.xlu0 %725
          %727 = vset.pattern.permute.xlu0 0
          %728 = vperm.xlu0 %727, %v694
          %v729 = vpop.permute.xlu0 %728
          %730 = vset.pattern.permute.xlu0 0
          %731 = vperm.xlu0 %730, %v695
          %v732 = vpop.permute.xlu0 %731
          %733 = vset.pattern.permute.xlu0 0
          %734 = vperm.xlu0 %733, %v696
          %v735 = vpop.permute.xlu0 %734
          %736 = vset.pattern.permute.xlu0 0
          %737 = vperm.xlu0 %736, %v697
          %v738 = vpop.permute.xlu0 %737
          %739 = vset.pattern.permute.xlu0 0
          %740 = vperm.xlu0 %739, %v698
          %v741 = vpop.permute.xlu0 %740
          %742 = vset.pattern.permute.xlu0 0
          %743 = vperm.xlu0 %742, %v699
          %v744 = vpop.permute.xlu0 %743
          %745 = vset.pattern.permute.xlu0 0
          %746 = vperm.xlu0 %745, %v700
          %v747 = vpop.permute.xlu0 %746
          %748 = vset.pattern.permute.xlu0 0
          %749 = vperm.xlu0 %748, %v701
          %v750 = vpop.permute.xlu0 %749
          %v751 = vlaneseq
          %v752 = vshrl.u32 %v751, 7
          %v753 = vsub.s32 0, %v752
          %v754 = vrot.slane %v702, %v753
          %vm755 = vcmp.eq.s32.totalorder %v705, %v754
          %vm756 = vcmp.eq.s32.totalorder %v708, %v754
          %vm757 = vcmp.eq.s32.totalorder %v711, %v754
          %vm758 = vcmp.eq.s32.totalorder %v714, %v754
          %vm759 = vcmp.eq.s32.totalorder %v717, %v754
          %vm760 = vcmp.eq.s32.totalorder %v720, %v754
          %vm761 = vcmp.eq.s32.totalorder %v723, %v754
          %vm762 = vcmp.eq.s32.totalorder %v726, %v754
          %vm763 = vcmp.eq.s32.totalorder %v729, %v754
          %vm764 = vcmp.eq.s32.totalorder %v732, %v754
          %vm765 = vcmp.eq.s32.totalorder %v735, %v754
          %vm766 = vcmp.eq.s32.totalorder %v738, %v754
          %vm767 = vcmp.eq.s32.totalorder %v741, %v754
          %vm768 = vcmp.eq.s32.totalorder %v744, %v754
          %vm769 = vcmp.eq.s32.totalorder %v747, %v754
          %vm770 = vcmp.eq.s32.totalorder %v750, %v754
          %vm771 = vcmp.ge.s32.totalorder %v668, %v685
          %vm772 = vcmp.ge.s32.totalorder %v669, %v685
          %vm773 = vcmp.ge.s32.totalorder %v670, %v685
          %vm774 = vcmp.ge.s32.totalorder %v671, %v685
          %vm775 = vcmp.ge.s32.totalorder %v672, %v685
          %vm776 = vcmp.ge.s32.totalorder %v673, %v685
          %vm777 = vcmp.ge.s32.totalorder %v674, %v685
          %vm778 = vcmp.ge.s32.totalorder %v675, %v685
          %vm779 = vcmp.ge.s32.totalorder %v676, %v685
          %vm780 = vcmp.ge.s32.totalorder %v677, %v685
          %vm781 = vcmp.ge.s32.totalorder %v678, %v685
          %vm782 = vcmp.ge.s32.totalorder %v679, %v685
          %vm783 = vcmp.ge.s32.totalorder %v680, %v685
          %vm784 = vcmp.ge.s32.totalorder %v681, %v685
          %vm785 = vcmp.ge.s32.totalorder %v682, %v685
          %vm786 = vcmp.ge.s32.totalorder %v683, %v685
          %v787 = vld [vmem:[%s3] sm:$0x1]
          %vm788 = vcmp.gt.f32.partialorder %v787, 0.5
          %vm789 = vmand %vm755, %vm771
          %vm790 = vmand %vm756, %vm772
          %vm791 = vmand %vm757, %vm773
          %vm792 = vmand %vm758, %vm774
          %vm793 = vmand %vm759, %vm775
          %vm794 = vmand %vm760, %vm776
          %vm795 = vmand %vm761, %vm777
          %vm796 = vmand %vm762, %vm778
          %vm797 = vmand %vm763, %vm779
          %vm798 = vmand %vm764, %vm780
          %vm799 = vmand %vm765, %vm781
          %vm800 = vmand %vm766, %vm782
          %vm801 = vmand %vm767, %vm783
          %vm802 = vmand %vm768, %vm784
          %vm803 = vmand %vm769, %vm785
          %vm804 = vmand %vm770, %vm786
          %v805 = vsel %vm788, 1, 0
          %v806 = vlaneseq
          %v807 = vshrl.u32 %v806, 7
          %v808 = vsub.s32 0, %v807
          %v809 = vrot.slane %v805, %v808
          %vm810 = vcmp.eq.s32.totalorder %v809, 1
          %vm811 = vmand %vm789, %vm810
          %vm812 = vmand %vm790, %vm810
          %vm813 = vmand %vm791, %vm810
          %vm814 = vmand %vm792, %vm810
          %vm815 = vmand %vm793, %vm810
          %vm816 = vmand %vm794, %vm810
          %vm817 = vmand %vm795, %vm810
          %vm818 = vmand %vm796, %vm810
          %vm819 = vmand %vm797, %vm810
          %vm820 = vmand %vm798, %vm810
          %vm821 = vmand %vm799, %vm810
          %vm822 = vmand %vm800, %vm810
          %vm823 = vmand %vm801, %vm810
          %vm824 = vmand %vm802, %vm810
          %vm825 = vmand %vm803, %vm810
          %vm826 = vmand %vm804, %vm810
          %v827 = vsel %vm811, 0.0, -1e+30
          %v828 = vsel %vm812, 0.0, -1e+30
          %v829 = vsel %vm813, 0.0, -1e+30
          %v830 = vsel %vm814, 0.0, -1e+30
          %v831 = vsel %vm815, 0.0, -1e+30
          %v832 = vsel %vm816, 0.0, -1e+30
          %v833 = vsel %vm817, 0.0, -1e+30
          %v834 = vsel %vm818, 0.0, -1e+30
          %v835 = vsel %vm819, 0.0, -1e+30
          %v836 = vsel %vm820, 0.0, -1e+30
          %v837 = vsel %vm821, 0.0, -1e+30
          %v838 = vsel %vm822, 0.0, -1e+30
          %v839 = vsel %vm823, 0.0, -1e+30
          %v840 = vsel %vm824, 0.0, -1e+30
          %v841 = vsel %vm825, 0.0, -1e+30
          %v842 = vsel %vm826, 0.0, -1e+30
          %843 = vst [vmem:[#allocation3] sm:$0xff] %v827
          %844 = vst [vmem:[#allocation3 + $0x8] sm:$0xff] %v828
          %845 = vst [vmem:[#allocation3 + $0x10] sm:$0xff] %v829
          %846 = vst [vmem:[#allocation3 + $0x18] sm:$0xff] %v830
          %847 = vst [vmem:[#allocation3 + $0x20] sm:$0xff] %v831
          %848 = vst [vmem:[#allocation3 + $0x28] sm:$0xff] %v832
          %849 = vst [vmem:[#allocation3 + $0x30] sm:$0xff] %v833
          %850 = vst [vmem:[#allocation3 + $0x38] sm:$0xff] %v834
          %851 = vst [vmem:[#allocation3 + $0x40] sm:$0xff] %v835
          %852 = vst [vmem:[#allocation3 + $0x48] sm:$0xff] %v836
          %853 = vst [vmem:[#allocation3 + $0x50] sm:$0xff] %v837
          %854 = vst [vmem:[#allocation3 + $0x58] sm:$0xff] %v838
          %855 = vst [vmem:[#allocation3 + $0x60] sm:$0xff] %v839
          %856 = vst [vmem:[#allocation3 + $0x68] sm:$0xff] %v840
          %857 = vst [vmem:[#allocation3 + $0x70] sm:$0xff] %v841
          %858 = vst [vmem:[#allocation3 + $0x78] sm:$0xff] %v842
        $region100: #{tpu_custom_call.1} parent=75 // pred_fallthru
          _
        %v859 = vld [vmem:[#allocation2] sm:$0xff]
        %v860 = vld [vmem:[#allocation2 + $0x8] sm:$0xff]
        %v861 = vld [vmem:[#allocation2 + $0x10] sm:$0xff]
        %v862 = vld [vmem:[#allocation2 + $0x18] sm:$0xff]
        %v863 = vld [vmem:[#allocation2 + $0x20] sm:$0xff]
        %v864 = vld [vmem:[#allocation2 + $0x28] sm:$0xff]
        %v865 = vld [vmem:[#allocation2 + $0x30] sm:$0xff]
        %v866 = vld [vmem:[#allocation2 + $0x38] sm:$0xff]
        %v867 = vld [vmem:[#allocation2 + $0x40] sm:$0xff]
        %v868 = vld [vmem:[#allocation2 + $0x48] sm:$0xff]
        %v869 = vld [vmem:[#allocation2 + $0x50] sm:$0xff]
        %v870 = vld [vmem:[#allocation2 + $0x58] sm:$0xff]
        %v871 = vld [vmem:[#allocation2 + $0x60] sm:$0xff]
        %v872 = vld [vmem:[#allocation2 + $0x68] sm:$0xff]
        %v873 = vld [vmem:[#allocation2 + $0x70] sm:$0xff]
        %v874 = vld [vmem:[#allocation2 + $0x78] sm:$0xff]
        %v875 = vld [vmem:[#allocation3] sm:$0xff]
        %v876 = vld [vmem:[#allocation3 + $0x8] sm:$0xff]
        %v877 = vld [vmem:[#allocation3 + $0x10] sm:$0xff]
        %v878 = vld [vmem:[#allocation3 + $0x18] sm:$0xff]
        %v879 = vld [vmem:[#allocation3 + $0x20] sm:$0xff]
        %v880 = vld [vmem:[#allocation3 + $0x28] sm:$0xff]
        %v881 = vld [vmem:[#allocation3 + $0x30] sm:$0xff]
        %v882 = vld [vmem:[#allocation3 + $0x38] sm:$0xff]
        %v883 = vld [vmem:[#allocation3 + $0x40] sm:$0xff]
        %v884 = vld [vmem:[#allocation3 + $0x48] sm:$0xff]
        %v885 = vld [vmem:[#allocation3 + $0x50] sm:$0xff]
        %v886 = vld [vmem:[#allocation3 + $0x58] sm:$0xff]
        %v887 = vld [vmem:[#allocation3 + $0x60] sm:$0xff]
        %v888 = vld [vmem:[#allocation3 + $0x68] sm:$0xff]
        %v889 = vld [vmem:[#allocation3 + $0x70] sm:$0xff]
        %v890 = vld [vmem:[#allocation3 + $0x78] sm:$0xff]
        %v891 = vlaneseq
        %v892 = vand.u32 %v891, 127
        %vm893 = vcmp.ge.s32.totalorder %v892, 0
        %vm894 = vcmp.lt.s32.totalorder %v892, 32
        %vm895 = vmand %vm893, %vm894
        %v896 = vsel %vm895, 1, 0
        %v897 = vcvt.s32.f32 %v896
        %vm898 = vcmp.ge.s32.totalorder %v892, 32
        %vm899 = vcmp.lt.s32.totalorder %v892, 64
        %vm900 = vmand %vm898, %vm899
        %v901 = vsel %vm900, 1, 0
        %v902 = vcvt.s32.f32 %v901
        %vm903 = vcmp.ge.s32.totalorder %v892, 64
        %vm904 = vcmp.lt.s32.totalorder %v892, 96
        %vm905 = vmand %vm903, %vm904
        %v906 = vsel %vm905, 1, 0
        %v907 = vcvt.s32.f32 %v906
        %vm908 = vcmp.ge.s32.totalorder %v892, 96
        %vm909 = vcmp.lt.s32.totalorder %v892, 128
        %vm910 = vmand %vm908, %vm909
        %v911 = vsel %vm910, 1, 0
        %v912 = vcvt.s32.f32 %v911
        %v913 = vld [vmem:[%s626] sm:$0x1]
        %v914 = vmul.f32 %v859, %v859
        %v915 = vmul.f32 %v860, %v860
        %v916 = vmul.f32 %v861, %v861
        %v917 = vmul.f32 %v862, %v862
        %v918 = vmul.f32 %v863, %v863
        %v919 = vmul.f32 %v864, %v864
        %v920 = vmul.f32 %v865, %v865
        %v921 = vmul.f32 %v866, %v866
        %v922 = vmul.f32 %v867, %v867
        %v923 = vmul.f32 %v868, %v868
        %v924 = vmul.f32 %v869, %v869
        %v925 = vmul.f32 %v870, %v870
        %v926 = vmul.f32 %v871, %v871
        %v927 = vmul.f32 %v872, %v872
        %v928 = vmul.f32 %v873, %v873
        %v929 = vmul.f32 %v874, %v874
        %930 = vadd.xlane.f32.xlu0 %v914
        %v931 = vpop.xlane.xlu0 %930
        %932 = vadd.xlane.f32.xlu0 %v915
        %v933 = vpop.xlane.xlu0 %932
        %934 = vadd.xlane.f32.xlu0 %v916
        %v935 = vpop.xlane.xlu0 %934
        %936 = vadd.xlane.f32.xlu0 %v917
        %v937 = vpop.xlane.xlu0 %936
        %938 = vadd.xlane.f32.xlu0 %v918
        %v939 = vpop.xlane.xlu0 %938
        %940 = vadd.xlane.f32.xlu0 %v919
        %v941 = vpop.xlane.xlu0 %940
        %942 = vadd.xlane.f32.xlu0 %v920
        %v943 = vpop.xlane.xlu0 %942
        %944 = vadd.xlane.f32.xlu0 %v921
        %v945 = vpop.xlane.xlu0 %944
        %946 = vadd.xlane.f32.xlu0 %v922
        %v947 = vpop.xlane.xlu0 %946
        %948 = vadd.xlane.f32.xlu0 %v923
        %v949 = vpop.xlane.xlu0 %948
        %950 = vadd.xlane.f32.xlu0 %v924
        %v951 = vpop.xlane.xlu0 %950
        %952 = vadd.xlane.f32.xlu0 %v925
        %v953 = vpop.xlane.xlu0 %952
        %954 = vadd.xlane.f32.xlu0 %v926
        %v955 = vpop.xlane.xlu0 %954
        %956 = vadd.xlane.f32.xlu0 %v927
        %v957 = vpop.xlane.xlu0 %956
        %958 = vadd.xlane.f32.xlu0 %v928
        %v959 = vpop.xlane.xlu0 %958
        %960 = vadd.xlane.f32.xlu0 %v929
        %v961 = vpop.xlane.xlu0 %960
        %v962 = vrcp.pop 128.0
        %v963 = vmul.f32 %v931, %v962
        %v964 = vmul.f32 %v933, %v962
        %v965 = vmul.f32 %v935, %v962
        %v966 = vmul.f32 %v937, %v962
        %v967 = vmul.f32 %v939, %v962
        %v968 = vmul.f32 %v941, %v962
        %v969 = vmul.f32 %v943, %v962
        %v970 = vmul.f32 %v945, %v962
        %v971 = vmul.f32 %v947, %v962
        %v972 = vmul.f32 %v949, %v962
        %v973 = vmul.f32 %v951, %v962
        %v974 = vmul.f32 %v953, %v962
        %v975 = vmul.f32 %v955, %v962
        %v976 = vmul.f32 %v957, %v962
        %v977 = vmul.f32 %v959, %v962
        %v978 = vmul.f32 %v961, %v962
        %v979 = vadd.f32 %v963, 1e-06
        %v980 = vadd.f32 %v964, 1e-06
        %v981 = vadd.f32 %v965, 1e-06
        %v982 = vadd.f32 %v966, 1e-06
        %v983 = vadd.f32 %v967, 1e-06
        %v984 = vadd.f32 %v968, 1e-06
        %v985 = vadd.f32 %v969, 1e-06
        %v986 = vadd.f32 %v970, 1e-06
        %v987 = vadd.f32 %v971, 1e-06
        %v988 = vadd.f32 %v972, 1e-06
        %v989 = vadd.f32 %v973, 1e-06
        %v990 = vadd.f32 %v974, 1e-06
        %v991 = vadd.f32 %v975, 1e-06
        %v992 = vadd.f32 %v976, 1e-06
        %v993 = vadd.f32 %v977, 1e-06
        %v994 = vadd.f32 %v978, 1e-06
        %v995 = vrsqrt.pop %v979
        %v996 = vrsqrt.pop %v980
        %v997 = vrsqrt.pop %v981
        %v998 = vrsqrt.pop %v982
        %v999 = vrsqrt.pop %v983
        %v1000 = vrsqrt.pop %v984
        %v1001 = vrsqrt.pop %v985
        %v1002 = vrsqrt.pop %v986
        %v1003 = vrsqrt.pop %v987
        %v1004 = vrsqrt.pop %v988
        %v1005 = vrsqrt.pop %v989
        %v1006 = vrsqrt.pop %v990
        %v1007 = vrsqrt.pop %v991
        %v1008 = vrsqrt.pop %v992
        %v1009 = vrsqrt.pop %v993
        %v1010 = vrsqrt.pop %v994
        %v1011 = vmul.f32 %v859, %v995
        %v1012 = vmul.f32 %v860, %v996
        %v1013 = vmul.f32 %v861, %v997
        %v1014 = vmul.f32 %v862, %v998
        %v1015 = vmul.f32 %v863, %v999
        %v1016 = vmul.f32 %v864, %v1000
        %v1017 = vmul.f32 %v865, %v1001
        %v1018 = vmul.f32 %v866, %v1002
        %v1019 = vmul.f32 %v867, %v1003
        %v1020 = vmul.f32 %v868, %v1004
        %v1021 = vmul.f32 %v869, %v1005
        %v1022 = vmul.f32 %v870, %v1006
        %v1023 = vmul.f32 %v871, %v1007
        %v1024 = vmul.f32 %v872, %v1008
        %v1025 = vmul.f32 %v873, %v1009
        %v1026 = vmul.f32 %v874, %v1010
        %v1028 = vlaneseq
        %v1029 = vshrl.u32 %v1028, 7
        %v1030 = vsub.s32 0, %v1029
        %v1031 = vrot.slane %v913, %v1030
        %v1033 = vmul.f32 %v1011, %v1031
        %v1034 = vmul.f32 %v1012, %v1031
        %v1035 = vmul.f32 %v1013, %v1031
        %v1036 = vmul.f32 %v1014, %v1031
        %v1037 = vmul.f32 %v1015, %v1031
        %v1038 = vmul.f32 %v1016, %v1031
        %v1039 = vmul.f32 %v1017, %v1031
        %v1040 = vmul.f32 %v1018, %v1031
        %v1041 = vmul.f32 %v1019, %v1031
        %v1042 = vmul.f32 %v1020, %v1031
        %v1043 = vmul.f32 %v1021, %v1031
        %v1044 = vmul.f32 %v1022, %v1031
        %v1045 = vmul.f32 %v1023, %v1031
        %v1046 = vmul.f32 %v1024, %v1031
        %v1047 = vmul.f32 %v1025, %v1031
        %v1048 = vmul.f32 %v1026, %v1031
        %v1049 = vpack.c.bf16 %v1034, %v1033
        %v1050 = vpack.c.bf16 %v1036, %v1035
        %v1051 = vpack.c.bf16 %v1038, %v1037
        %v1052 = vpack.c.bf16 %v1040, %v1039
        %v1053 = vpack.c.bf16 %v1042, %v1041
        %v1054 = vpack.c.bf16 %v1044, %v1043
        %v1055 = vpack.c.bf16 %v1046, %v1045
        %v1056 = vpack.c.bf16 %v1048, %v1047
        %v1057 = vld [vmem:[%s536] sm:$0xff]
        %v1058 = vld [vmem:[%s536 + $0x8] sm:$0xf]
        %v1059 = vld [vmem:[%s536 + $0xc] sm:$0xff]
        %v1060 = vld [vmem:[%s536 + $0x14] sm:$0xf]
        %v1061 = vld [vmem:[%s536 + $0x18] sm:$0xff]
        %v1062 = vld [vmem:[%s536 + $0x20] sm:$0xf]
        %v1063 = vld [vmem:[%s536 + $0x24] sm:$0xff]
        %v1064 = vld [vmem:[%s536 + $0x2c] sm:$0xf]
        %v1065 = vld [vmem:[%s536 + $0x30] sm:$0xff]
        %v1066 = vld [vmem:[%s536 + $0x38] sm:$0xf]
        %v1067 = vld [vmem:[%s536 + $0x3c] sm:$0xff]
        %v1068 = vld [vmem:[%s536 + $0x44] sm:$0xf]
        %v1069 = vld [vmem:[%s536 + $0x48] sm:$0xff]
        %v1070 = vld [vmem:[%s536 + $0x50] sm:$0xf]
        %v1071 = vld [vmem:[%s536 + $0x54] sm:$0xff]
        %v1072 = vld [vmem:[%s536 + $0x5c] sm:$0xf]
        %v1073 = vld [vmem:[%s536 + $0x60] sm:$0xff]
        %v1074 = vld [vmem:[%s536 + $0x68] sm:$0xf]
        %v1075 = vld [vmem:[%s536 + $0x6c] sm:$0xff]
        %v1076 = vld [vmem:[%s536 + $0x74] sm:$0xf]
        %v1077 = vld [vmem:[%s536 + $0x78] sm:$0xff]
        %v1078 = vld [vmem:[%s536 + $0x80] sm:$0xf]
        %v1079 = vld [vmem:[%s536 + $0x84] sm:$0xff]
        %v1080 = vld [vmem:[%s536 + $0x8c] sm:$0xf]
        %v1081 = vld [vmem:[%s536 + $0x90] sm:$0xff]
        %v1082 = vld [vmem:[%s536 + $0x98] sm:$0xf]
        %v1083 = vld [vmem:[%s536 + $0x9c] sm:$0xff]
        %v1084 = vld [vmem:[%s536 + $0xa4] sm:$0xf]
        %v1085 = vld [vmem:[%s536 + $0xa8] sm:$0xff]
        %v1086 = vld [vmem:[%s536 + $0xb0] sm:$0xf]
        %v1087 = vld [vmem:[%s536 + $0xb4] sm:$0xff]
        %v1088 = vld [vmem:[%s536 + $0xbc] sm:$0xf]
        %v1121 = vunpack.c.l.b16 %v1057
        %v1122 = vunpack.c.h.b16 %v1057
        %v1123 = vunpack.c.l.b16 %v1058
        %v1124 = vunpack.c.l.b16 %v1059
        %v1125 = vunpack.c.h.b16 %v1059
        %v1126 = vunpack.c.l.b16 %v1060
        %v1127 = vunpack.c.l.b16 %v1061
        %v1128 = vunpack.c.h.b16 %v1061
        %v1129 = vunpack.c.l.b16 %v1062
        %v1130 = vunpack.c.l.b16 %v1063
        %v1131 = vunpack.c.h.b16 %v1063
        %v1132 = vunpack.c.l.b16 %v1064
        %v1133 = vunpack.c.l.b16 %v1065
        %v1134 = vunpack.c.h.b16 %v1065
        %v1135 = vunpack.c.l.b16 %v1066
        %v1136 = vunpack.c.l.b16 %v1067
        %v1137 = vunpack.c.h.b16 %v1067
        %v1138 = vunpack.c.l.b16 %v1068
        %v1139 = vunpack.c.l.b16 %v1069
        %v1140 = vunpack.c.h.b16 %v1069
        %v1141 = vunpack.c.l.b16 %v1070
        %v1142 = vunpack.c.l.b16 %v1071
        %v1143 = vunpack.c.h.b16 %v1071
        %v1144 = vunpack.c.l.b16 %v1072
        %v1145 = vunpack.c.l.b16 %v1073
        %v1146 = vunpack.c.h.b16 %v1073
        %v1147 = vunpack.c.l.b16 %v1074
        %v1148 = vunpack.c.l.b16 %v1075
        %v1149 = vunpack.c.h.b16 %v1075
        %v1150 = vunpack.c.l.b16 %v1076
        %v1151 = vunpack.c.l.b16 %v1077
        %v1152 = vunpack.c.h.b16 %v1077
        %v1153 = vunpack.c.l.b16 %v1078
        %v1154 = vunpack.c.l.b16 %v1079
        %v1155 = vunpack.c.h.b16 %v1079
        %v1156 = vunpack.c.l.b16 %v1080
        %v1157 = vunpack.c.l.b16 %v1081
        %v1158 = vunpack.c.h.b16 %v1081
        %v1159 = vunpack.c.l.b16 %v1082
        %v1160 = vunpack.c.l.b16 %v1083
        %v1161 = vunpack.c.h.b16 %v1083
        %v1162 = vunpack.c.l.b16 %v1084
        %v1163 = vunpack.c.l.b16 %v1085
        %v1164 = vunpack.c.h.b16 %v1085
        %v1165 = vunpack.c.l.b16 %v1086
        %v1166 = vunpack.c.l.b16 %v1087
        %v1167 = vunpack.c.h.b16 %v1087
        %v1168 = vunpack.c.l.b16 %v1088
        %v1169 = vpack.c.b16 %v1124, %v1121
        %v1170 = vpack.c.b16 %v1125, %v1122
        %v1171 = vpack.c.b16 %v1126, %v1123
        %v1172 = vpack.c.b16 %v1130, %v1127
        %v1173 = vpack.c.b16 %v1131, %v1128
        %v1174 = vpack.c.b16 %v1132, %v1129
        %v1175 = vpack.c.b16 %v1136, %v1133
        %v1176 = vpack.c.b16 %v1137, %v1134
        %v1177 = vpack.c.b16 %v1138, %v1135
        %v1178 = vpack.c.b16 %v1142, %v1139
        %v1179 = vpack.c.b16 %v1143, %v1140
        %v1180 = vpack.c.b16 %v1144, %v1141
        %v1181 = vpack.c.b16 %v1148, %v1145
        %v1182 = vpack.c.b16 %v1149, %v1146
        %v1183 = vpack.c.b16 %v1150, %v1147
        %v1184 = vpack.c.b16 %v1154, %v1151
        %v1185 = vpack.c.b16 %v1155, %v1152
        %v1186 = vpack.c.b16 %v1156, %v1153
        %v1187 = vpack.c.b16 %v1160, %v1157
        %v1188 = vpack.c.b16 %v1161, %v1158
        %v1189 = vpack.c.b16 %v1162, %v1159
        %v1190 = vpack.c.b16 %v1166, %v1163
        %v1191 = vpack.c.b16 %v1167, %v1164
        %v1192 = vpack.c.b16 %v1168, %v1165
        %1217 = vmatprep.subr.bf16.mxu0 %v1170
        %1218 = vmatpush1.bf16.msra.mxu0 %v1169
        %1219 = vmatprep.subr.bf16.mxu0 %v1173
        %1220 = vmatpush1.bf16.msra.mxu0 %v1172
        %1221 = vmatprep.subr.bf16.mxu0 %v1176
        %1222 = vmatpush1.bf16.msra.mxu0 %v1175
        %1223 = vmatprep.subr.bf16.mxu0 %v1179
        %1224 = vmatpush1.bf16.msra.mxu0 %v1178
        %1225 = vmatprep.subr.bf16.mxu0 %v1182
        %1226 = vmatpush1.bf16.msra.mxu0 %v1181
        %1227 = vmatprep.subr.bf16.mxu0 %v1185
        %1228 = vmatpush1.bf16.msra.mxu0 %v1184
        %1229 = vmatprep.subr.bf16.mxu0 %v1188
        %1230 = vmatpush1.bf16.msra.mxu0 %v1187
        %1231 = vmatprep.subr.bf16.mxu0 %v1191
        %1232 = vmatpush1.bf16.msra.mxu0 %v1190
        %1233 = vmatprep.subr.bf16.mxu0 0
        %1234 = vmatpush1.bf16.msra.mxu0 0
        %1235 = vmatprep.subr.bf16.mxu0 0
        %1236 = vmatpush1.bf16.msra.mxu0 0
        %1237 = vmatprep.subr.bf16.mxu0 0
        %1238 = vmatpush1.bf16.msra.mxu0 0
        %1239 = vmatprep.subr.bf16.mxu0 0
        %1240 = vmatpush1.bf16.msra.mxu0 0
        %1241 = vmatprep.subr.bf16.mxu0 0
        %1242 = vmatpush1.bf16.msra.mxu0 0
        %1243 = vmatprep.subr.bf16.mxu0 0
        %1244 = vmatpush1.bf16.msra.mxu0 0
        %1245 = vmatprep.subr.bf16.mxu0 0
        %1246 = vmatpush1.bf16.msra.mxu0 0
        %1247 = vmatprep.subr.bf16.mxu0 0
        %1248 = vmatpush1.bf16.msra.mxu0 0
        %1249 = vmatprep.mubr.bf16.mxu0 0
        %1250 = vmatmul.mubr.bf16.gmra.mrb[0].mxu0 %v1049
        %v1251 = vpop.f32.mrb[0].mxu0
        %v1252 = vadd.f32 0.0, %v1251
        %v1253 = vpop.f32.mrb[0].mxu0
        %v1254 = vadd.f32 0.0, %v1253
        %v1255 = vpop.f32.mrb[0].mxu0
        %v1256 = vadd.f32 0.0, %v1255
        %v1257 = vpop.f32.mrb[0].mxu0
        %v1258 = vadd.f32 0.0, %v1257
        %1259 = vmatprep.mubr.bf16.mxu0 0
        %1260 = vmatmul.mubr.bf16.gmra.mrb[0].mxu0 %v1050
        %v1261 = vpop.f32.mrb[0].mxu0
        %v1262 = vadd.f32 0.0, %v1261
        %v1263 = vpop.f32.mrb[0].mxu0
        %v1264 = vadd.f32 0.0, %v1263
        %v1265 = vpop.f32.mrb[0].mxu0
        %v1266 = vadd.f32 0.0, %v1265
        %v1267 = vpop.f32.mrb[0].mxu0
        %v1268 = vadd.f32 0.0, %v1267
        %1269 = vmatprep.mubr.bf16.mxu0 0
        %1270 = vmatmul.mubr.bf16.gmra.mrb[0].mxu0 %v1051
        %v1271 = vpop.f32.mrb[0].mxu0
        %v1272 = vadd.f32 0.0, %v1271
        %v1273 = vpop.f32.mrb[0].mxu0
        %v1274 = vadd.f32 0.0, %v1273
        %v1275 = vpop.f32.mrb[0].mxu0
        %v1276 = vadd.f32 0.0, %v1275
        %v1277 = vpop.f32.mrb[0].mxu0
        %v1278 = vadd.f32 0.0, %v1277
        %1279 = vmatprep.mubr.bf16.mxu0 0
        %1280 = vmatmul.mubr.bf16.gmra.mrb[0].mxu0 %v1052
        %v1281 = vpop.f32.mrb[0].mxu0
        %v1282 = vadd.f32 0.0, %v1281
        %v1283 = vpop.f32.mrb[0].mxu0
        %v1284 = vadd.f32 0.0, %v1283
        %v1285 = vpop.f32.mrb[0].mxu0
        %v1286 = vadd.f32 0.0, %v1285
        %v1287 = vpop.f32.mrb[0].mxu0
        %v1288 = vadd.f32 0.0, %v1287
        %1289 = vmatprep.mubr.bf16.mxu0 0
        %1290 = vmatmul.mubr.bf16.gmra.mrb[0].mxu0 %v1053
        %v1291 = vpop.f32.mrb[0].mxu0
        %v1292 = vadd.f32 0.0, %v1291
        %v1293 = vpop.f32.mrb[0].mxu0
        %v1294 = vadd.f32 0.0, %v1293
        %v1295 = vpop.f32.mrb[0].mxu0
        %v1296 = vadd.f32 0.0, %v1295
        %v1297 = vpop.f32.mrb[0].mxu0
        %v1298 = vadd.f32 0.0, %v1297
        %1299 = vmatprep.mubr.bf16.mxu0 0
        %1300 = vmatmul.mubr.bf16.gmra.mrb[0].mxu0 %v1054
        %v1301 = vpop.f32.mrb[0].mxu0
        %v1302 = vadd.f32 0.0, %v1301
        %v1303 = vpop.f32.mrb[0].mxu0
        %v1304 = vadd.f32 0.0, %v1303
        %v1305 = vpop.f32.mrb[0].mxu0
        %v1306 = vadd.f32 0.0, %v1305
        %v1307 = vpop.f32.mrb[0].mxu0
        %v1308 = vadd.f32 0.0, %v1307
        %1309 = vmatprep.mubr.bf16.mxu0 0
        %1310 = vmatmul.mubr.bf16.gmra.mrb[0].mxu0 %v1055
        %v1311 = vpop.f32.mrb[0].mxu0
        %v1312 = vadd.f32 0.0, %v1311
        %v1313 = vpop.f32.mrb[0].mxu0
        %v1314 = vadd.f32 0.0, %v1313
        %v1315 = vpop.f32.mrb[0].mxu0
        %v1316 = vadd.f32 0.0, %v1315
        %v1317 = vpop.f32.mrb[0].mxu0
        %v1318 = vadd.f32 0.0, %v1317
        %1319 = vmatprep.mubr.bf16.mxu0 0
        %1320 = vmatmul.mubr.bf16.gmra.mrb[0].mxu0 %v1056
        %v1321 = vpop.f32.mrb[0].mxu0
        %v1322 = vadd.f32 0.0, %v1321
        %v1323 = vpop.f32.mrb[0].mxu0
        %v1324 = vadd.f32 0.0, %v1323
        %v1325 = vpop.f32.mrb[0].mxu0
        %v1326 = vadd.f32 0.0, %v1325
        %v1327 = vpop.f32.mrb[0].mxu0
        %v1328 = vadd.f32 0.0, %v1327
        %1329 = vdwg.mxu0
        %1330 = vmatprep.subr.bf16.mxu0 0
        %1331 = vmatpush1.bf16.msra.mxu0 %v1171
        %1332 = vmatprep.subr.bf16.mxu0 0
        %1333 = vmatpush1.bf16.msra.mxu0 %v1174
        %1334 = vmatprep.subr.bf16.mxu0 0
        %1335 = vmatpush1.bf16.msra.mxu0 %v1177
        %1336 = vmatprep.subr.bf16.mxu0 0
        %1337 = vmatpush1.bf16.msra.mxu0 %v1180
        %1338 = vmatprep.subr.bf16.mxu0 0
        %1339 = vmatpush1.bf16.msra.mxu0 %v1183
        %1340 = vmatprep.subr.bf16.mxu0 0
        %1341 = vmatpush1.bf16.msra.mxu0 %v1186
        %1342 = vmatprep.subr.bf16.mxu0 0
        %1343 = vmatpush1.bf16.msra.mxu0 %v1189
        %1344 = vmatprep.subr.bf16.mxu0 0
        %1345 = vmatpush1.bf16.msra.mxu0 %v1192
        %1346 = vmatprep.subr.bf16.mxu0 0
        %1347 = vmatpush1.bf16.msra.mxu0 0
        %1348 = vmatprep.subr.bf16.mxu0 0
        %1349 = vmatpush1.bf16.msra.mxu0 0
        %1350 = vmatprep.subr.bf16.mxu0 0
        %1351 = vmatpush1.bf16.msra.mxu0 0
        %1352 = vmatprep.subr.bf16.mxu0 0
        %1353 = vmatpush1.bf16.msra.mxu0 0
        %1354 = vmatprep.subr.bf16.mxu0 0
        %1355 = vmatpush1.bf16.msra.mxu0 0
        %1356 = vmatprep.subr.bf16.mxu0 0
        %1357 = vmatpush1.bf16.msra.mxu0 0
        %1358 = vmatprep.subr.bf16.mxu0 0
        %1359 = vmatpush1.bf16.msra.mxu0 0
        %1360 = vmatprep.subr.bf16.mxu0 0
        %1361 = vmatpush1.bf16.msra.mxu0 0
        %1362 = vmatprep.mubr.bf16.mxu0 0
        %1363 = vmatmul.mubr.bf16.gmra.mrb[0].mxu0 %v1049
        %v1364 = vpop.f32.mrb[0].mxu0
        %v1365 = vadd.f32 0.0, %v1364
        %v1366 = vpop.f32.mrb[0].mxu0
        %v1367 = vpop.f32.mrb[0].mxu0
        %v1368 = vadd.f32 0.0, %v1367
        %v1369 = vpop.f32.mrb[0].mxu0
        %1370 = vmatprep.mubr.bf16.mxu0 0
        %1371 = vmatmul.mubr.bf16.gmra.mrb[0].mxu0 %v1050
        %v1372 = vpop.f32.mrb[0].mxu0
        %v1373 = vadd.f32 0.0, %v1372
        %v1374 = vpop.f32.mrb[0].mxu0
        %v1375 = vpop.f32.mrb[0].mxu0
        %v1376 = vadd.f32 0.0, %v1375
        %v1377 = vpop.f32.mrb[0].mxu0
        %1378 = vmatprep.mubr.bf16.mxu0 0
        %1379 = vmatmul.mubr.bf16.gmra.mrb[0].mxu0 %v1051
        %v1380 = vpop.f32.mrb[0].mxu0
        %v1381 = vadd.f32 0.0, %v1380
        %v1382 = vpop.f32.mrb[0].mxu0
        %v1383 = vpop.f32.mrb[0].mxu0
        %v1384 = vadd.f32 0.0, %v1383
        %v1385 = vpop.f32.mrb[0].mxu0
        %1386 = vmatprep.mubr.bf16.mxu0 0
        %1387 = vmatmul.mubr.bf16.gmra.mrb[0].mxu0 %v1052
        %v1388 = vpop.f32.mrb[0].mxu0
        %v1389 = vadd.f32 0.0, %v1388
        %v1390 = vpop.f32.mrb[0].mxu0
        %v1391 = vpop.f32.mrb[0].mxu0
        %v1392 = vadd.f32 0.0, %v1391
        %v1393 = vpop.f32.mrb[0].mxu0
        %1394 = vmatprep.mubr.bf16.mxu0 0
        %1395 = vmatmul.mubr.bf16.gmra.mrb[0].mxu0 %v1053
        %v1396 = vpop.f32.mrb[0].mxu0
        %v1397 = vadd.f32 0.0, %v1396
        %v1398 = vpop.f32.mrb[0].mxu0
        %v1399 = vpop.f32.mrb[0].mxu0
        %v1400 = vadd.f32 0.0, %v1399
        %v1401 = vpop.f32.mrb[0].mxu0
        %1402 = vmatprep.mubr.bf16.mxu0 0
        %1403 = vmatmul.mubr.bf16.gmra.mrb[0].mxu0 %v1054
        %v1404 = vpop.f32.mrb[0].mxu0
        %v1405 = vadd.f32 0.0, %v1404
        %v1406 = vpop.f32.mrb[0].mxu0
        %v1407 = vpop.f32.mrb[0].mxu0
        %v1408 = vadd.f32 0.0, %v1407
        %v1409 = vpop.f32.mrb[0].mxu0
        %1410 = vmatprep.mubr.bf16.mxu0 0
        %1411 = vmatmul.mubr.bf16.gmra.mrb[0].mxu0 %v1055
        %v1412 = vpop.f32.mrb[0].mxu0
        %v1413 = vadd.f32 0.0, %v1412
        %v1414 = vpop.f32.mrb[0].mxu0
        %v1415 = vpop.f32.mrb[0].mxu0
        %v1416 = vadd.f32 0.0, %v1415
        %v1417 = vpop.f32.mrb[0].mxu0
        %1418 = vmatprep.mubr.bf16.mxu0 0
        %1419 = vmatmul.mubr.bf16.gmra.mrb[0].mxu0 %v1056
        %v1420 = vpop.f32.mrb[0].mxu0
        %v1421 = vadd.f32 0.0, %v1420
        %v1422 = vpop.f32.mrb[0].mxu0
        %v1423 = vpop.f32.mrb[0].mxu0
        %v1424 = vadd.f32 0.0, %v1423
        %v1425 = vpop.f32.mrb[0].mxu0
        %1426 = vdwg.mxu0
        %v1427 = vpack.c.bf16 %v1256, %v1252
        %v1428 = vpack.c.bf16 %v1266, %v1262
        %v1429 = vpack.c.bf16 %v1276, %v1272
        %v1430 = vpack.c.bf16 %v1286, %v1282
        %v1431 = vpack.c.bf16 %v1296, %v1292
        %v1432 = vpack.c.bf16 %v1306, %v1302
        %v1433 = vpack.c.bf16 %v1316, %v1312
        %v1434 = vpack.c.bf16 %v1326, %v1322
        %v1435 = vmul.f32 %v1254, %v897
        %v1436 = vmul.f32 %v1258, %v897
        %v1437 = vmul.f32 %v1264, %v897
        %v1438 = vmul.f32 %v1268, %v897
        %v1439 = vmul.f32 %v1274, %v897
        %v1440 = vmul.f32 %v1278, %v897
        %v1441 = vmul.f32 %v1284, %v897
        %v1442 = vmul.f32 %v1288, %v897
        %v1443 = vmul.f32 %v1294, %v897
        %v1444 = vmul.f32 %v1298, %v897
        %v1445 = vmul.f32 %v1304, %v897
        %v1446 = vmul.f32 %v1308, %v897
        %v1447 = vmul.f32 %v1314, %v897
        %v1448 = vmul.f32 %v1318, %v897
        %v1449 = vmul.f32 %v1324, %v897
        %v1450 = vmul.f32 %v1328, %v897
        %v1451 = vpack.c.bf16 %v1436, %v1435
        %v1452 = vpack.c.bf16 %v1438, %v1437
        %v1453 = vpack.c.bf16 %v1440, %v1439
        %v1454 = vpack.c.bf16 %v1442, %v1441
        %v1455 = vpack.c.bf16 %v1444, %v1443
        %v1456 = vpack.c.bf16 %v1446, %v1445
        %v1457 = vpack.c.bf16 %v1448, %v1447
        %v1458 = vpack.c.bf16 %v1450, %v1449
        %v1459 = vmul.f32 %v1254, %v902
        %v1460 = vmul.f32 %v1258, %v902
        %v1461 = vmul.f32 %v1264, %v902
        %v1462 = vmul.f32 %v1268, %v902
        %v1463 = vmul.f32 %v1274, %v902
        %v1464 = vmul.f32 %v1278, %v902
        %v1465 = vmul.f32 %v1284, %v902
        %v1466 = vmul.f32 %v1288, %v902
        %v1467 = vmul.f32 %v1294, %v902
        %v1468 = vmul.f32 %v1298, %v902
        %v1469 = vmul.f32 %v1304, %v902
        %v1470 = vmul.f32 %v1308, %v902
        %v1471 = vmul.f32 %v1314, %v902
        %v1472 = vmul.f32 %v1318, %v902
        %v1473 = vmul.f32 %v1324, %v902
        %v1474 = vmul.f32 %v1328, %v902
        %v1475 = vpack.c.bf16 %v1460, %v1459
        %v1476 = vpack.c.bf16 %v1462, %v1461
        %v1477 = vpack.c.bf16 %v1464, %v1463
        %v1478 = vpack.c.bf16 %v1466, %v1465
        %v1479 = vpack.c.bf16 %v1468, %v1467
        %v1480 = vpack.c.bf16 %v1470, %v1469
        %v1481 = vpack.c.bf16 %v1472, %v1471
        %v1482 = vpack.c.bf16 %v1474, %v1473
        %v1483 = vmul.f32 %v1254, %v907
        %v1484 = vmul.f32 %v1258, %v907
        %v1485 = vmul.f32 %v1264, %v907
        %v1486 = vmul.f32 %v1268, %v907
        %v1487 = vmul.f32 %v1274, %v907
        %v1488 = vmul.f32 %v1278, %v907
        %v1489 = vmul.f32 %v1284, %v907
        %v1490 = vmul.f32 %v1288, %v907
        %v1491 = vmul.f32 %v1294, %v907
        %v1492 = vmul.f32 %v1298, %v907
        %v1493 = vmul.f32 %v1304, %v907
        %v1494 = vmul.f32 %v1308, %v907
        %v1495 = vmul.f32 %v1314, %v907
        %v1496 = vmul.f32 %v1318, %v907
        %v1497 = vmul.f32 %v1324, %v907
        %v1498 = vmul.f32 %v1328, %v907
        %v1499 = vpack.c.bf16 %v1484, %v1483
        %v1500 = vpack.c.bf16 %v1486, %v1485
        %v1501 = vpack.c.bf16 %v1488, %v1487
        %v1502 = vpack.c.bf16 %v1490, %v1489
        %v1503 = vpack.c.bf16 %v1492, %v1491
        %v1504 = vpack.c.bf16 %v1494, %v1493
        %v1505 = vpack.c.bf16 %v1496, %v1495
        %v1506 = vpack.c.bf16 %v1498, %v1497
        %v1507 = vmul.f32 %v1254, %v912
        %v1508 = vmul.f32 %v1258, %v912
        %v1509 = vmul.f32 %v1264, %v912
        %v1510 = vmul.f32 %v1268, %v912
        %v1511 = vmul.f32 %v1274, %v912
        %v1512 = vmul.f32 %v1278, %v912
        %v1513 = vmul.f32 %v1284, %v912
        %v1514 = vmul.f32 %v1288, %v912
        %v1515 = vmul.f32 %v1294, %v912
        %v1516 = vmul.f32 %v1298, %v912
        %v1517 = vmul.f32 %v1304, %v912
        %v1518 = vmul.f32 %v1308, %v912
        %v1519 = vmul.f32 %v1314, %v912
        %v1520 = vmul.f32 %v1318, %v912
        %v1521 = vmul.f32 %v1324, %v912
        %v1522 = vmul.f32 %v1328, %v912
        %v1523 = vpack.c.bf16 %v1508, %v1507
        %v1524 = vpack.c.bf16 %v1510, %v1509
        %v1525 = vpack.c.bf16 %v1512, %v1511
        %v1526 = vpack.c.bf16 %v1514, %v1513
        %v1527 = vpack.c.bf16 %v1516, %v1515
        %v1528 = vpack.c.bf16 %v1518, %v1517
        %v1529 = vpack.c.bf16 %v1520, %v1519
        %v1530 = vpack.c.bf16 %v1522, %v1521
        %v1531 = vmul.f32 %v1365, %v897
        %v1532 = vmul.f32 %v1368, %v897
        %v1533 = vmul.f32 %v1373, %v897
        %v1534 = vmul.f32 %v1376, %v897
        %v1535 = vmul.f32 %v1381, %v897
        %v1536 = vmul.f32 %v1384, %v897
        %v1537 = vmul.f32 %v1389, %v897
        %v1538 = vmul.f32 %v1392, %v897
        %v1539 = vmul.f32 %v1397, %v897
        %v1540 = vmul.f32 %v1400, %v897
        %v1541 = vmul.f32 %v1405, %v897
        %v1542 = vmul.f32 %v1408, %v897
        %v1543 = vmul.f32 %v1413, %v897
        %v1544 = vmul.f32 %v1416, %v897
        %v1545 = vmul.f32 %v1421, %v897
        %v1546 = vmul.f32 %v1424, %v897
        %v1547 = vpack.c.bf16 %v1532, %v1531
        %v1548 = vpack.c.bf16 %v1534, %v1533
        %v1549 = vpack.c.bf16 %v1536, %v1535
        %v1550 = vpack.c.bf16 %v1538, %v1537
        %v1551 = vpack.c.bf16 %v1540, %v1539
        %v1552 = vpack.c.bf16 %v1542, %v1541
        %v1553 = vpack.c.bf16 %v1544, %v1543
        %v1554 = vpack.c.bf16 %v1546, %v1545
        %v1555 = vmul.f32 %v1365, %v902
        %v1556 = vmul.f32 %v1368, %v902
        %v1557 = vmul.f32 %v1373, %v902
        %v1558 = vmul.f32 %v1376, %v902
        %v1559 = vmul.f32 %v1381, %v902
        %v1560 = vmul.f32 %v1384, %v902
        %v1561 = vmul.f32 %v1389, %v902
        %v1562 = vmul.f32 %v1392, %v902
        %v1563 = vmul.f32 %v1397, %v902
        %v1564 = vmul.f32 %v1400, %v902
        %v1565 = vmul.f32 %v1405, %v902
        %v1566 = vmul.f32 %v1408, %v902
        %v1567 = vmul.f32 %v1413, %v902
        %v1568 = vmul.f32 %v1416, %v902
        %v1569 = vmul.f32 %v1421, %v902
        %v1570 = vmul.f32 %v1424, %v902
        %v1571 = vpack.c.bf16 %v1556, %v1555
        %v1572 = vpack.c.bf16 %v1558, %v1557
        %v1573 = vpack.c.bf16 %v1560, %v1559
        %v1574 = vpack.c.bf16 %v1562, %v1561
        %v1575 = vpack.c.bf16 %v1564, %v1563
        %v1576 = vpack.c.bf16 %v1566, %v1565
        %v1577 = vpack.c.bf16 %v1568, %v1567
        %v1578 = vpack.c.bf16 %v1570, %v1569
        %v1579 = vmul.f32 %v1365, %v907
        %v1580 = vmul.f32 %v1368, %v907
        %v1581 = vmul.f32 %v1373, %v907
        %v1582 = vmul.f32 %v1376, %v907
        %v1583 = vmul.f32 %v1381, %v907
        %v1584 = vmul.f32 %v1384, %v907
        %v1585 = vmul.f32 %v1389, %v907
        %v1586 = vmul.f32 %v1392, %v907
        %v1587 = vmul.f32 %v1397, %v907
        %v1588 = vmul.f32 %v1400, %v907
        %v1589 = vmul.f32 %v1405, %v907
        %v1590 = vmul.f32 %v1408, %v907
        %v1591 = vmul.f32 %v1413, %v907
        %v1592 = vmul.f32 %v1416, %v907
        %v1593 = vmul.f32 %v1421, %v907
        %v1594 = vmul.f32 %v1424, %v907
        %v1595 = vpack.c.bf16 %v1580, %v1579
        %v1596 = vpack.c.bf16 %v1582, %v1581
        %v1597 = vpack.c.bf16 %v1584, %v1583
        %v1598 = vpack.c.bf16 %v1586, %v1585
        %v1599 = vpack.c.bf16 %v1588, %v1587
        %v1600 = vpack.c.bf16 %v1590, %v1589
        %v1601 = vpack.c.bf16 %v1592, %v1591
        %v1602 = vpack.c.bf16 %v1594, %v1593
        %v1603 = vmul.f32 %v1365, %v912
        %v1604 = vmul.f32 %v1368, %v912
        %v1605 = vmul.f32 %v1373, %v912
        %v1606 = vmul.f32 %v1376, %v912
        %v1607 = vmul.f32 %v1381, %v912
        %v1608 = vmul.f32 %v1384, %v912
        %v1609 = vmul.f32 %v1389, %v912
        %v1610 = vmul.f32 %v1392, %v912
        %v1611 = vmul.f32 %v1397, %v912
        %v1612 = vmul.f32 %v1400, %v912
        %v1613 = vmul.f32 %v1405, %v912
        %v1614 = vmul.f32 %v1408, %v912
        %v1615 = vmul.f32 %v1413, %v912
        %v1616 = vmul.f32 %v1416, %v912
        %v1617 = vmul.f32 %v1421, %v912
        %v1618 = vmul.f32 %v1424, %v912
        %v1619 = vpack.c.bf16 %v1604, %v1603
        %v1620 = vpack.c.bf16 %v1606, %v1605
        %v1621 = vpack.c.bf16 %v1608, %v1607
        %v1622 = vpack.c.bf16 %v1610, %v1609
        %v1623 = vpack.c.bf16 %v1612, %v1611
        %v1624 = vpack.c.bf16 %v1614, %v1613
        %v1625 = vpack.c.bf16 %v1616, %v1615
        %v1626 = vpack.c.bf16 %v1618, %v1617
        %1627 = vmatprep.subr.bf16.mxu0 0
        %1628 = vmatpush1.bf16.xpose.msra.mxu0 %v1451
        %1629 = vmatprep.subr.bf16.mxu0 0
        %1630 = vmatpush1.bf16.xpose.msra.mxu0 %v1452
        %1631 = vmatprep.subr.bf16.mxu0 0
        %1632 = vmatpush1.bf16.xpose.msra.mxu0 %v1453
        %1633 = vmatprep.subr.bf16.mxu0 0
        %1634 = vmatpush1.bf16.xpose.msra.mxu0 %v1454
        %1635 = vmatprep.subr.bf16.mxu0 0
        %1636 = vmatpush1.bf16.xpose.msra.mxu0 %v1455
        %1637 = vmatprep.subr.bf16.mxu0 0
        %1638 = vmatpush1.bf16.xpose.msra.mxu0 %v1456
        %1639 = vmatprep.subr.bf16.mxu0 0
        %1640 = vmatpush1.bf16.xpose.msra.mxu0 %v1457
        %1641 = vmatprep.subr.bf16.mxu0 0
        %1642 = vmatpush1.bf16.xpose.msra.mxu0 %v1458
        %1643 = vmatprep.subr.bf16.mxu0 0
        %1644 = vmatpush1.bf16.xpose.msra.mxu0 %v1475
        %1645 = vmatprep.subr.bf16.mxu0 0
        %1646 = vmatpush1.bf16.xpose.msra.mxu0 %v1476
        %1647 = vmatprep.subr.bf16.mxu0 0
        %1648 = vmatpush1.bf16.xpose.msra.mxu0 %v1477
        %1649 = vmatprep.subr.bf16.mxu0 0
        %1650 = vmatpush1.bf16.xpose.msra.mxu0 %v1478
        %1651 = vmatprep.subr.bf16.mxu0 0
        %1652 = vmatpush1.bf16.xpose.msra.mxu0 %v1479
        %1653 = vmatprep.subr.bf16.mxu0 0
        %1654 = vmatpush1.bf16.xpose.msra.mxu0 %v1480
        %1655 = vmatprep.subr.bf16.mxu0 0
        %1656 = vmatpush1.bf16.xpose.msra.mxu0 %v1481
        %1657 = vmatprep.subr.bf16.mxu0 0
        %1658 = vmatpush1.bf16.xpose.msra.mxu0 %v1482
        %1659 = vmatprep.mubr.bf16.mxu0 0
        %1660 = vmatmul.mubr.bf16.gmra.mrb[0].mxu0 %v1427
        %v1661 = vpop.f32.mrb[0].mxu0
        %v1662 = vadd.f32 0.0, %v1661
        %v1663 = vpop.f32.mrb[0].mxu0
        %v1664 = vadd.f32 0.0, %v1663
        %v1665 = vpop.f32.mrb[0].mxu0
        %v1666 = vadd.f32 0.0, %v1665
        %v1667 = vpop.f32.mrb[0].mxu0
        %v1668 = vadd.f32 0.0, %v1667
        %1669 = vmatprep.mubr.bf16.mxu0 0
        %1670 = vmatmul.mubr.bf16.gmra.mrb[0].mxu0 %v1428
        %v1671 = vpop.f32.mrb[0].mxu0
        %v1672 = vadd.f32 0.0, %v1671
        %v1673 = vpop.f32.mrb[0].mxu0
        %v1674 = vadd.f32 0.0, %v1673
        %v1675 = vpop.f32.mrb[0].mxu0
        %v1676 = vadd.f32 0.0, %v1675
        %v1677 = vpop.f32.mrb[0].mxu0
        %v1678 = vadd.f32 0.0, %v1677
        %1679 = vmatprep.mubr.bf16.mxu0 0
        %1680 = vmatmul.mubr.bf16.gmra.mrb[0].mxu0 %v1429
        %v1681 = vpop.f32.mrb[0].mxu0
        %v1682 = vadd.f32 0.0, %v1681
        %v1683 = vpop.f32.mrb[0].mxu0
        %v1684 = vadd.f32 0.0, %v1683
        %v1685 = vpop.f32.mrb[0].mxu0
        %v1686 = vadd.f32 0.0, %v1685
        %v1687 = vpop.f32.mrb[0].mxu0
        %v1688 = vadd.f32 0.0, %v1687
        %1689 = vmatprep.mubr.bf16.mxu0 0
        %1690 = vmatmul.mubr.bf16.gmra.mrb[0].mxu0 %v1430
        %v1691 = vpop.f32.mrb[0].mxu0
        %v1692 = vadd.f32 0.0, %v1691
        %v1693 = vpop.f32.mrb[0].mxu0
        %v1694 = vadd.f32 0.0, %v1693
        %v1695 = vpop.f32.mrb[0].mxu0
        %v1696 = vadd.f32 0.0, %v1695
        %v1697 = vpop.f32.mrb[0].mxu0
        %v1698 = vadd.f32 0.0, %v1697
        %1699 = vmatprep.mubr.bf16.mxu0 0
        %1700 = vmatmul.mubr.bf16.gmra.mrb[0].mxu0 %v1431
        %v1701 = vpop.f32.mrb[0].mxu0
        %v1702 = vadd.f32 0.0, %v1701
        %v1703 = vpop.f32.mrb[0].mxu0
        %v1704 = vadd.f32 0.0, %v1703
        %v1705 = vpop.f32.mrb[0].mxu0
        %v1706 = vadd.f32 0.0, %v1705
        %v1707 = vpop.f32.mrb[0].mxu0
        %v1708 = vadd.f32 0.0, %v1707
        %1709 = vmatprep.mubr.bf16.mxu0 0
        %1710 = vmatmul.mubr.bf16.gmra.mrb[0].mxu0 %v1432
        %v1711 = vpop.f32.mrb[0].mxu0
        %v1712 = vadd.f32 0.0, %v1711
        %v1713 = vpop.f32.mrb[0].mxu0
        %v1714 = vadd.f32 0.0, %v1713
        %v1715 = vpop.f32.mrb[0].mxu0
        %v1716 = vadd.f32 0.0, %v1715
        %v1717 = vpop.f32.mrb[0].mxu0
        %v1718 = vadd.f32 0.0, %v1717
        %1719 = vmatprep.mubr.bf16.mxu0 0
        %1720 = vmatmul.mubr.bf16.gmra.mrb[0].mxu0 %v1433
        %v1721 = vpop.f32.mrb[0].mxu0
        %v1722 = vadd.f32 0.0, %v1721
        %v1723 = vpop.f32.mrb[0].mxu0
        %v1724 = vadd.f32 0.0, %v1723
        %v1725 = vpop.f32.mrb[0].mxu0
        %v1726 = vadd.f32 0.0, %v1725
        %v1727 = vpop.f32.mrb[0].mxu0
        %v1728 = vadd.f32 0.0, %v1727
        %1729 = vmatprep.mubr.bf16.mxu0 0
        %1730 = vmatmul.mubr.bf16.gmra.mrb[0].mxu0 %v1434
        %v1731 = vpop.f32.mrb[0].mxu0
        %v1732 = vadd.f32 0.0, %v1731
        %v1733 = vpop.f32.mrb[0].mxu0
        %v1734 = vadd.f32 0.0, %v1733
        %v1735 = vpop.f32.mrb[0].mxu0
        %v1736 = vadd.f32 0.0, %v1735
        %v1737 = vpop.f32.mrb[0].mxu0
        %v1738 = vadd.f32 0.0, %v1737
        %1739 = vdwg.mxu0
        %1740 = vmatprep.subr.bf16.mxu0 0
        %1741 = vmatpush1.bf16.xpose.msra.mxu0 %v1499
        %1742 = vmatprep.subr.bf16.mxu0 0
        %1743 = vmatpush1.bf16.xpose.msra.mxu0 %v1500
        %1744 = vmatprep.subr.bf16.mxu0 0
        %1745 = vmatpush1.bf16.xpose.msra.mxu0 %v1501
        %1746 = vmatprep.subr.bf16.mxu0 0
        %1747 = vmatpush1.bf16.xpose.msra.mxu0 %v1502
        %1748 = vmatprep.subr.bf16.mxu0 0
        %1749 = vmatpush1.bf16.xpose.msra.mxu0 %v1503
        %1750 = vmatprep.subr.bf16.mxu0 0
        %1751 = vmatpush1.bf16.xpose.msra.mxu0 %v1504
        %1752 = vmatprep.subr.bf16.mxu0 0
        %1753 = vmatpush1.bf16.xpose.msra.mxu0 %v1505
        %1754 = vmatprep.subr.bf16.mxu0 0
        %1755 = vmatpush1.bf16.xpose.msra.mxu0 %v1506
        %1756 = vmatprep.subr.bf16.mxu0 0
        %1757 = vmatpush1.bf16.xpose.msra.mxu0 %v1523
        %1758 = vmatprep.subr.bf16.mxu0 0
        %1759 = vmatpush1.bf16.xpose.msra.mxu0 %v1524
        %1760 = vmatprep.subr.bf16.mxu0 0
        %1761 = vmatpush1.bf16.xpose.msra.mxu0 %v1525
        %1762 = vmatprep.subr.bf16.mxu0 0
        %1763 = vmatpush1.bf16.xpose.msra.mxu0 %v1526
        %1764 = vmatprep.subr.bf16.mxu0 0
        %1765 = vmatpush1.bf16.xpose.msra.mxu0 %v1527
        %1766 = vmatprep.subr.bf16.mxu0 0
        %1767 = vmatpush1.bf16.xpose.msra.mxu0 %v1528
        %1768 = vmatprep.subr.bf16.mxu0 0
        %1769 = vmatpush1.bf16.xpose.msra.mxu0 %v1529
        %1770 = vmatprep.subr.bf16.mxu0 0
        %1771 = vmatpush1.bf16.xpose.msra.mxu0 %v1530
        %1772 = vmatprep.mubr.bf16.mxu0 0
        %1773 = vmatmul.mubr.bf16.gmra.mrb[0].mxu0 %v1427
        %v1774 = vpop.f32.mrb[0].mxu0
        %v1775 = vadd.f32 0.0, %v1774
        %v1776 = vpop.f32.mrb[0].mxu0
        %v1777 = vadd.f32 0.0, %v1776
        %v1778 = vpop.f32.mrb[0].mxu0
        %v1779 = vadd.f32 0.0, %v1778
        %v1780 = vpop.f32.mrb[0].mxu0
        %v1781 = vadd.f32 0.0, %v1780
        %1782 = vmatprep.mubr.bf16.mxu0 0
        %1783 = vmatmul.mubr.bf16.gmra.mrb[0].mxu0 %v1428
        %v1784 = vpop.f32.mrb[0].mxu0
        %v1785 = vadd.f32 0.0, %v1784
        %v1786 = vpop.f32.mrb[0].mxu0
        %v1787 = vadd.f32 0.0, %v1786
        %v1788 = vpop.f32.mrb[0].mxu0
        %v1789 = vadd.f32 0.0, %v1788
        %v1790 = vpop.f32.mrb[0].mxu0
        %v1791 = vadd.f32 0.0, %v1790
        %1792 = vmatprep.mubr.bf16.mxu0 0
        %1793 = vmatmul.mubr.bf16.gmra.mrb[0].mxu0 %v1429
        %v1794 = vpop.f32.mrb[0].mxu0
        %v1795 = vadd.f32 0.0, %v1794
        %v1796 = vpop.f32.mrb[0].mxu0
        %v1797 = vadd.f32 0.0, %v1796
        %v1798 = vpop.f32.mrb[0].mxu0
        %v1799 = vadd.f32 0.0, %v1798
        %v1800 = vpop.f32.mrb[0].mxu0
        %v1801 = vadd.f32 0.0, %v1800
        %1802 = vmatprep.mubr.bf16.mxu0 0
        %1803 = vmatmul.mubr.bf16.gmra.mrb[0].mxu0 %v1430
        %v1804 = vpop.f32.mrb[0].mxu0
        %v1805 = vadd.f32 0.0, %v1804
        %v1806 = vpop.f32.mrb[0].mxu0
        %v1807 = vadd.f32 0.0, %v1806
        %v1808 = vpop.f32.mrb[0].mxu0
        %v1809 = vadd.f32 0.0, %v1808
        %v1810 = vpop.f32.mrb[0].mxu0
        %v1811 = vadd.f32 0.0, %v1810
        %1812 = vmatprep.mubr.bf16.mxu0 0
        %1813 = vmatmul.mubr.bf16.gmra.mrb[0].mxu0 %v1431
        %v1814 = vpop.f32.mrb[0].mxu0
        %v1815 = vadd.f32 0.0, %v1814
        %v1816 = vpop.f32.mrb[0].mxu0
        %v1817 = vadd.f32 0.0, %v1816
        %v1818 = vpop.f32.mrb[0].mxu0
        %v1819 = vadd.f32 0.0, %v1818
        %v1820 = vpop.f32.mrb[0].mxu0
        %v1821 = vadd.f32 0.0, %v1820
        %1822 = vmatprep.mubr.bf16.mxu0 0
        %1823 = vmatmul.mubr.bf16.gmra.mrb[0].mxu0 %v1432
        %v1824 = vpop.f32.mrb[0].mxu0
        %v1825 = vadd.f32 0.0, %v1824
        %v1826 = vpop.f32.mrb[0].mxu0
        %v1827 = vadd.f32 0.0, %v1826
        %v1828 = vpop.f32.mrb[0].mxu0
        %v1829 = vadd.f32 0.0, %v1828
        %v1830 = vpop.f32.mrb[0].mxu0
        %v1831 = vadd.f32 0.0, %v1830
        %1832 = vmatprep.mubr.bf16.mxu0 0
        %1833 = vmatmul.mubr.bf16.gmra.mrb[0].mxu0 %v1433
        %v1834 = vpop.f32.mrb[0].mxu0
        %v1835 = vadd.f32 0.0, %v1834
        %v1836 = vpop.f32.mrb[0].mxu0
        %v1837 = vadd.f32 0.0, %v1836
        %v1838 = vpop.f32.mrb[0].mxu0
        %v1839 = vadd.f32 0.0, %v1838
        %v1840 = vpop.f32.mrb[0].mxu0
        %v1841 = vadd.f32 0.0, %v1840
        %1842 = vmatprep.mubr.bf16.mxu0 0
        %1843 = vmatmul.mubr.bf16.gmra.mrb[0].mxu0 %v1434
        %v1844 = vpop.f32.mrb[0].mxu0
        %v1845 = vadd.f32 0.0, %v1844
        %v1846 = vpop.f32.mrb[0].mxu0
        %v1847 = vadd.f32 0.0, %v1846
        %v1848 = vpop.f32.mrb[0].mxu0
        %v1849 = vadd.f32 0.0, %v1848
        %v1850 = vpop.f32.mrb[0].mxu0
        %v1851 = vadd.f32 0.0, %v1850
        %1852 = vdwg.mxu0
        %v1853 = vadd.f32 %v1662, %v875
        %v1854 = vadd.f32 %v1666, %v876
        %v1855 = vadd.f32 %v1672, %v877
        %v1856 = vadd.f32 %v1676, %v878
        %v1857 = vadd.f32 %v1682, %v879
        %v1858 = vadd.f32 %v1686, %v880
        %v1859 = vadd.f32 %v1692, %v881
        %v1860 = vadd.f32 %v1696, %v882
        %v1861 = vadd.f32 %v1702, %v883
        %v1862 = vadd.f32 %v1706, %v884
        %v1863 = vadd.f32 %v1712, %v885
        %v1864 = vadd.f32 %v1716, %v886
        %v1865 = vadd.f32 %v1722, %v887
        %v1866 = vadd.f32 %v1726, %v888
        %v1867 = vadd.f32 %v1732, %v889
        %v1868 = vadd.f32 %v1736, %v890
        %1869 = vmax.xlane.f32.xlu0 %v1853
        %v1870 = vpop.xlane.xlu0 %1869
        %1871 = vmax.xlane.f32.xlu0 %v1854
        %v1872 = vpop.xlane.xlu0 %1871
        %1873 = vmax.xlane.f32.xlu0 %v1855
        %v1874 = vpop.xlane.xlu0 %1873
        %1875 = vmax.xlane.f32.xlu0 %v1856
        %v1876 = vpop.xlane.xlu0 %1875
        %1877 = vmax.xlane.f32.xlu0 %v1857
        %v1878 = vpop.xlane.xlu0 %1877
        %1879 = vmax.xlane.f32.xlu0 %v1858
        %v1880 = vpop.xlane.xlu0 %1879
        %1881 = vmax.xlane.f32.xlu0 %v1859
        %v1882 = vpop.xlane.xlu0 %1881
        %1883 = vmax.xlane.f32.xlu0 %v1860
        %v1884 = vpop.xlane.xlu0 %1883
        %1885 = vmax.xlane.f32.xlu0 %v1861
        %v1886 = vpop.xlane.xlu0 %1885
        %1887 = vmax.xlane.f32.xlu0 %v1862
        %v1888 = vpop.xlane.xlu0 %1887
        %1889 = vmax.xlane.f32.xlu0 %v1863
        %v1890 = vpop.xlane.xlu0 %1889
        %1891 = vmax.xlane.f32.xlu0 %v1864
        %v1892 = vpop.xlane.xlu0 %1891
        %1893 = vmax.xlane.f32.xlu0 %v1865
        %v1894 = vpop.xlane.xlu0 %1893
        %1895 = vmax.xlane.f32.xlu0 %v1866
        %v1896 = vpop.xlane.xlu0 %1895
        %1897 = vmax.xlane.f32.xlu0 %v1867
        %v1898 = vpop.xlane.xlu0 %1897
        %1899 = vmax.xlane.f32.xlu0 %v1868
        %v1900 = vpop.xlane.xlu0 %1899
        %v1901 = vsub.f32 %v1853, %v1870
        %v1902 = vsub.f32 %v1854, %v1872
        %v1903 = vsub.f32 %v1855, %v1874
        %v1904 = vsub.f32 %v1856, %v1876
        %v1905 = vsub.f32 %v1857, %v1878
        %v1906 = vsub.f32 %v1858, %v1880
        %v1907 = vsub.f32 %v1859, %v1882
        %v1908 = vsub.f32 %v1860, %v1884
        %v1909 = vsub.f32 %v1861, %v1886
        %v1910 = vsub.f32 %v1862, %v1888
        %v1911 = vsub.f32 %v1863, %v1890
        %v1912 = vsub.f32 %v1864, %v1892
        %v1913 = vsub.f32 %v1865, %v1894
        %v1914 = vsub.f32 %v1866, %v1896
        %v1915 = vsub.f32 %v1867, %v1898
        %v1916 = vsub.f32 %v1868, %v1900
        %v1917 = vmul.f32 %v1901, 1.442695
        %v1918 = vpow.pop %v1917
        %v1919 = vmul.f32 %v1902, 1.442695
        %v1920 = vpow.pop %v1919
        %v1921 = vmul.f32 %v1903, 1.442695
        %v1922 = vpow.pop %v1921
        %v1923 = vmul.f32 %v1904, 1.442695
        %v1924 = vpow.pop %v1923
        %v1925 = vmul.f32 %v1905, 1.442695
        %v1926 = vpow.pop %v1925
        %v1927 = vmul.f32 %v1906, 1.442695
        %v1928 = vpow.pop %v1927
        %v1929 = vmul.f32 %v1907, 1.442695
        %v1930 = vpow.pop %v1929
        %v1931 = vmul.f32 %v1908, 1.442695
        %v1932 = vpow.pop %v1931
        %v1933 = vmul.f32 %v1909, 1.442695
        %v1934 = vpow.pop %v1933
        %v1935 = vmul.f32 %v1910, 1.442695
        %v1936 = vpow.pop %v1935
        %v1937 = vmul.f32 %v1911, 1.442695
        %v1938 = vpow.pop %v1937
        %v1939 = vmul.f32 %v1912, 1.442695
        %v1940 = vpow.pop %v1939
        %v1941 = vmul.f32 %v1913, 1.442695
        %v1942 = vpow.pop %v1941
        %v1943 = vmul.f32 %v1914, 1.442695
        %v1944 = vpow.pop %v1943
        %v1945 = vmul.f32 %v1915, 1.442695
        %v1946 = vpow.pop %v1945
        %v1947 = vmul.f32 %v1916, 1.442695
        %v1948 = vpow.pop %v1947
        %1949 = vadd.xlane.f32.xlu0 %v1918
        %v1950 = vpop.xlane.xlu0 %1949
        %1951 = vadd.xlane.f32.xlu0 %v1920
        %v1952 = vpop.xlane.xlu0 %1951
        %1953 = vadd.xlane.f32.xlu0 %v1922
        %v1954 = vpop.xlane.xlu0 %1953
        %1955 = vadd.xlane.f32.xlu0 %v1924
        %v1956 = vpop.xlane.xlu0 %1955
        %1957 = vadd.xlane.f32.xlu0 %v1926
        %v1958 = vpop.xlane.xlu0 %1957
        %1959 = vadd.xlane.f32.xlu0 %v1928
        %v1960 = vpop.xlane.xlu0 %1959
        %1961 = vadd.xlane.f32.xlu0 %v1930
        %v1962 = vpop.xlane.xlu0 %1961
        %1963 = vadd.xlane.f32.xlu0 %v1932
        %v1964 = vpop.xlane.xlu0 %1963
        %1965 = vadd.xlane.f32.xlu0 %v1934
        %v1966 = vpop.xlane.xlu0 %1965
        %1967 = vadd.xlane.f32.xlu0 %v1936
        %v1968 = vpop.xlane.xlu0 %1967
        %1969 = vadd.xlane.f32.xlu0 %v1938
        %v1970 = vpop.xlane.xlu0 %1969
        %1971 = vadd.xlane.f32.xlu0 %v1940
        %v1972 = vpop.xlane.xlu0 %1971
        %1973 = vadd.xlane.f32.xlu0 %v1942
        %v1974 = vpop.xlane.xlu0 %1973
        %1975 = vadd.xlane.f32.xlu0 %v1944
        %v1976 = vpop.xlane.xlu0 %1975
        %1977 = vadd.xlane.f32.xlu0 %v1946
        %v1978 = vpop.xlane.xlu0 %1977
        %1979 = vadd.xlane.f32.xlu0 %v1948
        %v1980 = vpop.xlane.xlu0 %1979
        %v1981 = vrcp.pop %v1950
        %v1982 = vrcp.pop %v1952
        %v1983 = vrcp.pop %v1954
        %v1984 = vrcp.pop %v1956
        %v1985 = vrcp.pop %v1958
        %v1986 = vrcp.pop %v1960
        %v1987 = vrcp.pop %v1962
        %v1988 = vrcp.pop %v1964
        %v1989 = vrcp.pop %v1966
        %v1990 = vrcp.pop %v1968
        %v1991 = vrcp.pop %v1970
        %v1992 = vrcp.pop %v1972
        %v1993 = vrcp.pop %v1974
        %v1994 = vrcp.pop %v1976
        %v1995 = vrcp.pop %v1978
        %v1996 = vrcp.pop %v1980
        %v1997 = vmul.f32 %v1918, %v1981
        %v1998 = vmul.f32 %v1920, %v1982
        %v1999 = vmul.f32 %v1922, %v1983
        %v2000 = vmul.f32 %v1924, %v1984
        %v2001 = vmul.f32 %v1926, %v1985
        %v2002 = vmul.f32 %v1928, %v1986
        %v2003 = vmul.f32 %v1930, %v1987
        %v2004 = vmul.f32 %v1932, %v1988
        %v2005 = vmul.f32 %v1934, %v1989
        %v2006 = vmul.f32 %v1936, %v1990
        %v2007 = vmul.f32 %v1938, %v1991
        %v2008 = vmul.f32 %v1940, %v1992
        %v2009 = vmul.f32 %v1942, %v1993
        %v2010 = vmul.f32 %v1944, %v1994
        %v2011 = vmul.f32 %v1946, %v1995
        %v2012 = vmul.f32 %v1948, %v1996
        %v2013 = vpack.c.bf16 %v1998, %v1997
        %v2014 = vpack.c.bf16 %v2000, %v1999
        %v2015 = vpack.c.bf16 %v2002, %v2001
        %v2016 = vpack.c.bf16 %v2004, %v2003
        %v2017 = vpack.c.bf16 %v2006, %v2005
        %v2018 = vpack.c.bf16 %v2008, %v2007
        %v2019 = vpack.c.bf16 %v2010, %v2009
        %v2020 = vpack.c.bf16 %v2012, %v2011
        %v2021 = vadd.f32 %v1664, %v875
        %v2022 = vadd.f32 %v1668, %v876
        %v2023 = vadd.f32 %v1674, %v877
        %v2024 = vadd.f32 %v1678, %v878
        %v2025 = vadd.f32 %v1684, %v879
        %v2026 = vadd.f32 %v1688, %v880
        %v2027 = vadd.f32 %v1694, %v881
        %v2028 = vadd.f32 %v1698, %v882
        %v2029 = vadd.f32 %v1704, %v883
        %v2030 = vadd.f32 %v1708, %v884
        %v2031 = vadd.f32 %v1714, %v885
        %v2032 = vadd.f32 %v1718, %v886
        %v2033 = vadd.f32 %v1724, %v887
        %v2034 = vadd.f32 %v1728, %v888
        %v2035 = vadd.f32 %v1734, %v889
        %v2036 = vadd.f32 %v1738, %v890
        %2037 = vmax.xlane.f32.xlu0 %v2021
        %v2038 = vpop.xlane.xlu0 %2037
        %2039 = vmax.xlane.f32.xlu0 %v2022
        %v2040 = vpop.xlane.xlu0 %2039
        %2041 = vmax.xlane.f32.xlu0 %v2023
        %v2042 = vpop.xlane.xlu0 %2041
        %2043 = vmax.xlane.f32.xlu0 %v2024
        %v2044 = vpop.xlane.xlu0 %2043
        %2045 = vmax.xlane.f32.xlu0 %v2025
        %v2046 = vpop.xlane.xlu0 %2045
        %2047 = vmax.xlane.f32.xlu0 %v2026
        %v2048 = vpop.xlane.xlu0 %2047
        %2049 = vmax.xlane.f32.xlu0 %v2027
        %v2050 = vpop.xlane.xlu0 %2049
        %2051 = vmax.xlane.f32.xlu0 %v2028
        %v2052 = vpop.xlane.xlu0 %2051
        %2053 = vmax.xlane.f32.xlu0 %v2029
        %v2054 = vpop.xlane.xlu0 %2053
        %2055 = vmax.xlane.f32.xlu0 %v2030
        %v2056 = vpop.xlane.xlu0 %2055
        %2057 = vmax.xlane.f32.xlu0 %v2031
        %v2058 = vpop.xlane.xlu0 %2057
        %2059 = vmax.xlane.f32.xlu0 %v2032
        %v2060 = vpop.xlane.xlu0 %2059
        %2061 = vmax.xlane.f32.xlu0 %v2033
        %v2062 = vpop.xlane.xlu0 %2061
        %2063 = vmax.xlane.f32.xlu0 %v2034
        %v2064 = vpop.xlane.xlu0 %2063
        %2065 = vmax.xlane.f32.xlu0 %v2035
        %v2066 = vpop.xlane.xlu0 %2065
        %2067 = vmax.xlane.f32.xlu0 %v2036
        %v2068 = vpop.xlane.xlu0 %2067
        %v2069 = vsub.f32 %v2021, %v2038
        %v2070 = vsub.f32 %v2022, %v2040
        %v2071 = vsub.f32 %v2023, %v2042
        %v2072 = vsub.f32 %v2024, %v2044
        %v2073 = vsub.f32 %v2025, %v2046
        %v2074 = vsub.f32 %v2026, %v2048
        %v2075 = vsub.f32 %v2027, %v2050
        %v2076 = vsub.f32 %v2028, %v2052
        %v2077 = vsub.f32 %v2029, %v2054
        %v2078 = vsub.f32 %v2030, %v2056
        %v2079 = vsub.f32 %v2031, %v2058
        %v2080 = vsub.f32 %v2032, %v2060
        %v2081 = vsub.f32 %v2033, %v2062
        %v2082 = vsub.f32 %v2034, %v2064
        %v2083 = vsub.f32 %v2035, %v2066
        %v2084 = vsub.f32 %v2036, %v2068
        %v2085 = vmul.f32 %v2069, 1.442695
        %v2086 = vpow.pop %v2085
        %v2087 = vmul.f32 %v2070, 1.442695
        %v2088 = vpow.pop %v2087
        %v2089 = vmul.f32 %v2071, 1.442695
        %v2090 = vpow.pop %v2089
        %v2091 = vmul.f32 %v2072, 1.442695
        %v2092 = vpow.pop %v2091
        %v2093 = vmul.f32 %v2073, 1.442695
        %v2094 = vpow.pop %v2093
        %v2095 = vmul.f32 %v2074, 1.442695
        %v2096 = vpow.pop %v2095
        %v2097 = vmul.f32 %v2075, 1.442695
        %v2098 = vpow.pop %v2097
        %v2099 = vmul.f32 %v2076, 1.442695
        %v2100 = vpow.pop %v2099
        %v2101 = vmul.f32 %v2077, 1.442695
        %v2102 = vpow.pop %v2101
        %v2103 = vmul.f32 %v2078, 1.442695
        %v2104 = vpow.pop %v2103
        %v2105 = vmul.f32 %v2079, 1.442695
        %v2106 = vpow.pop %v2105
        %v2107 = vmul.f32 %v2080, 1.442695
        %v2108 = vpow.pop %v2107
        %v2109 = vmul.f32 %v2081, 1.442695
        %v2110 = vpow.pop %v2109
        %v2111 = vmul.f32 %v2082, 1.442695
        %v2112 = vpow.pop %v2111
        %v2113 = vmul.f32 %v2083, 1.442695
        %v2114 = vpow.pop %v2113
        %v2115 = vmul.f32 %v2084, 1.442695
        %v2116 = vpow.pop %v2115
        %2117 = vadd.xlane.f32.xlu0 %v2086
        %v2118 = vpop.xlane.xlu0 %2117
        %2119 = vadd.xlane.f32.xlu0 %v2088
        %v2120 = vpop.xlane.xlu0 %2119
        %2121 = vadd.xlane.f32.xlu0 %v2090
        %v2122 = vpop.xlane.xlu0 %2121
        %2123 = vadd.xlane.f32.xlu0 %v2092
        %v2124 = vpop.xlane.xlu0 %2123
        %2125 = vadd.xlane.f32.xlu0 %v2094
        %v2126 = vpop.xlane.xlu0 %2125
        %2127 = vadd.xlane.f32.xlu0 %v2096
        %v2128 = vpop.xlane.xlu0 %2127
        %2129 = vadd.xlane.f32.xlu0 %v2098
        %v2130 = vpop.xlane.xlu0 %2129
        %2131 = vadd.xlane.f32.xlu0 %v2100
        %v2132 = vpop.xlane.xlu0 %2131
        %2133 = vadd.xlane.f32.xlu0 %v2102
        %v2134 = vpop.xlane.xlu0 %2133
        %2135 = vadd.xlane.f32.xlu0 %v2104
        %v2136 = vpop.xlane.xlu0 %2135
        %2137 = vadd.xlane.f32.xlu0 %v2106
        %v2138 = vpop.xlane.xlu0 %2137
        %2139 = vadd.xlane.f32.xlu0 %v2108
        %v2140 = vpop.xlane.xlu0 %2139
        %2141 = vadd.xlane.f32.xlu0 %v2110
        %v2142 = vpop.xlane.xlu0 %2141
        %2143 = vadd.xlane.f32.xlu0 %v2112
        %v2144 = vpop.xlane.xlu0 %2143
        %2145 = vadd.xlane.f32.xlu0 %v2114
        %v2146 = vpop.xlane.xlu0 %2145
        %2147 = vadd.xlane.f32.xlu0 %v2116
        %v2148 = vpop.xlane.xlu0 %2147
        %v2149 = vrcp.pop %v2118
        %v2150 = vrcp.pop %v2120
        %v2151 = vrcp.pop %v2122
        %v2152 = vrcp.pop %v2124
        %v2153 = vrcp.pop %v2126
        %v2154 = vrcp.pop %v2128
        %v2155 = vrcp.pop %v2130
        %v2156 = vrcp.pop %v2132
        %v2157 = vrcp.pop %v2134
        %v2158 = vrcp.pop %v2136
        %v2159 = vrcp.pop %v2138
        %v2160 = vrcp.pop %v2140
        %v2161 = vrcp.pop %v2142
        %v2162 = vrcp.pop %v2144
        %v2163 = vrcp.pop %v2146
        %v2164 = vrcp.pop %v2148
        %v2165 = vmul.f32 %v2086, %v2149
        %v2166 = vmul.f32 %v2088, %v2150
        %v2167 = vmul.f32 %v2090, %v2151
        %v2168 = vmul.f32 %v2092, %v2152
        %v2169 = vmul.f32 %v2094, %v2153
        %v2170 = vmul.f32 %v2096, %v2154
        %v2171 = vmul.f32 %v2098, %v2155
        %v2172 = vmul.f32 %v2100, %v2156
        %v2173 = vmul.f32 %v2102, %v2157
        %v2174 = vmul.f32 %v2104, %v2158
        %v2175 = vmul.f32 %v2106, %v2159
        %v2176 = vmul.f32 %v2108, %v2160
        %v2177 = vmul.f32 %v2110, %v2161
        %v2178 = vmul.f32 %v2112, %v2162
        %v2179 = vmul.f32 %v2114, %v2163
        %v2180 = vmul.f32 %v2116, %v2164
        %v2181 = vpack.c.bf16 %v2166, %v2165
        %v2182 = vpack.c.bf16 %v2168, %v2167
        %v2183 = vpack.c.bf16 %v2170, %v2169
        %v2184 = vpack.c.bf16 %v2172, %v2171
        %v2185 = vpack.c.bf16 %v2174, %v2173
        %v2186 = vpack.c.bf16 %v2176, %v2175
        %v2187 = vpack.c.bf16 %v2178, %v2177
        %v2188 = vpack.c.bf16 %v2180, %v2179
        %v2189 = vadd.f32 %v1775, %v875
        %v2190 = vadd.f32 %v1779, %v876
        %v2191 = vadd.f32 %v1785, %v877
        %v2192 = vadd.f32 %v1789, %v878
        %v2193 = vadd.f32 %v1795, %v879
        %v2194 = vadd.f32 %v1799, %v880
        %v2195 = vadd.f32 %v1805, %v881
        %v2196 = vadd.f32 %v1809, %v882
        %v2197 = vadd.f32 %v1815, %v883
        %v2198 = vadd.f32 %v1819, %v884
        %v2199 = vadd.f32 %v1825, %v885
        %v2200 = vadd.f32 %v1829, %v886
        %v2201 = vadd.f32 %v1835, %v887
        %v2202 = vadd.f32 %v1839, %v888
        %v2203 = vadd.f32 %v1845, %v889
        %v2204 = vadd.f32 %v1849, %v890
        %2205 = vmax.xlane.f32.xlu0 %v2189
        %v2206 = vpop.xlane.xlu0 %2205
        %2207 = vmax.xlane.f32.xlu0 %v2190
        %v2208 = vpop.xlane.xlu0 %2207
        %2209 = vmax.xlane.f32.xlu0 %v2191
        %v2210 = vpop.xlane.xlu0 %2209
        %2211 = vmax.xlane.f32.xlu0 %v2192
        %v2212 = vpop.xlane.xlu0 %2211
        %2213 = vmax.xlane.f32.xlu0 %v2193
        %v2214 = vpop.xlane.xlu0 %2213
        %2215 = vmax.xlane.f32.xlu0 %v2194
        %v2216 = vpop.xlane.xlu0 %2215
        %2217 = vmax.xlane.f32.xlu0 %v2195
        %v2218 = vpop.xlane.xlu0 %2217
        %2219 = vmax.xlane.f32.xlu0 %v2196
        %v2220 = vpop.xlane.xlu0 %2219
        %2221 = vmax.xlane.f32.xlu0 %v2197
        %v2222 = vpop.xlane.xlu0 %2221
        %2223 = vmax.xlane.f32.xlu0 %v2198
        %v2224 = vpop.xlane.xlu0 %2223
        %2225 = vmax.xlane.f32.xlu0 %v2199
        %v2226 = vpop.xlane.xlu0 %2225
        %2227 = vmax.xlane.f32.xlu0 %v2200
        %v2228 = vpop.xlane.xlu0 %2227
        %2229 = vmax.xlane.f32.xlu0 %v2201
        %v2230 = vpop.xlane.xlu0 %2229
        %2231 = vmax.xlane.f32.xlu0 %v2202
        %v2232 = vpop.xlane.xlu0 %2231
        %2233 = vmax.xlane.f32.xlu0 %v2203
        %v2234 = vpop.xlane.xlu0 %2233
        %2235 = vmax.xlane.f32.xlu0 %v2204
        %v2236 = vpop.xlane.xlu0 %2235
        %v2237 = vsub.f32 %v2189, %v2206
        %v2238 = vsub.f32 %v2190, %v2208
        %v2239 = vsub.f32 %v2191, %v2210
        %v2240 = vsub.f32 %v2192, %v2212
        %v2241 = vsub.f32 %v2193, %v2214
        %v2242 = vsub.f32 %v2194, %v2216
        %v2243 = vsub.f32 %v2195, %v2218
        %v2244 = vsub.f32 %v2196, %v2220
        %v2245 = vsub.f32 %v2197, %v2222
        %v2246 = vsub.f32 %v2198, %v2224
        %v2247 = vsub.f32 %v2199, %v2226
        %v2248 = vsub.f32 %v2200, %v2228
        %v2249 = vsub.f32 %v2201, %v2230
        %v2250 = vsub.f32 %v2202, %v2232
        %v2251 = vsub.f32 %v2203, %v2234
        %v2252 = vsub.f32 %v2204, %v2236
        %v2253 = vmul.f32 %v2237, 1.442695
        %v2254 = vpow.pop %v2253
        %v2255 = vmul.f32 %v2238, 1.442695
        %v2256 = vpow.pop %v2255
        %v2257 = vmul.f32 %v2239, 1.442695
        %v2258 = vpow.pop %v2257
        %v2259 = vmul.f32 %v2240, 1.442695
        %v2260 = vpow.pop %v2259
        %v2261 = vmul.f32 %v2241, 1.442695
        %v2262 = vpow.pop %v2261
        %v2263 = vmul.f32 %v2242, 1.442695
        %v2264 = vpow.pop %v2263
        %v2265 = vmul.f32 %v2243, 1.442695
        %v2266 = vpow.pop %v2265
        %v2267 = vmul.f32 %v2244, 1.442695
        %v2268 = vpow.pop %v2267
        %v2269 = vmul.f32 %v2245, 1.442695
        %v2270 = vpow.pop %v2269
        %v2271 = vmul.f32 %v2246, 1.442695
        %v2272 = vpow.pop %v2271
        %v2273 = vmul.f32 %v2247, 1.442695
        %v2274 = vpow.pop %v2273
        %v2275 = vmul.f32 %v2248, 1.442695
        %v2276 = vpow.pop %v2275
        %v2277 = vmul.f32 %v2249, 1.442695
        %v2278 = vpow.pop %v2277
        %v2279 = vmul.f32 %v2250, 1.442695
        %v2280 = vpow.pop %v2279
        %v2281 = vmul.f32 %v2251, 1.442695
        %v2282 = vpow.pop %v2281
        %v2283 = vmul.f32 %v2252, 1.442695
        %v2284 = vpow.pop %v2283
        %2285 = vadd.xlane.f32.xlu0 %v2254
        %v2286 = vpop.xlane.xlu0 %2285
        %2287 = vadd.xlane.f32.xlu0 %v2256
        %v2288 = vpop.xlane.xlu0 %2287
        %2289 = vadd.xlane.f32.xlu0 %v2258
        %v2290 = vpop.xlane.xlu0 %2289
        %2291 = vadd.xlane.f32.xlu0 %v2260
        %v2292 = vpop.xlane.xlu0 %2291
        %2293 = vadd.xlane.f32.xlu0 %v2262
        %v2294 = vpop.xlane.xlu0 %2293
        %2295 = vadd.xlane.f32.xlu0 %v2264
        %v2296 = vpop.xlane.xlu0 %2295
        %2297 = vadd.xlane.f32.xlu0 %v2266
        %v2298 = vpop.xlane.xlu0 %2297
        %2299 = vadd.xlane.f32.xlu0 %v2268
        %v2300 = vpop.xlane.xlu0 %2299
        %2301 = vadd.xlane.f32.xlu0 %v2270
        %v2302 = vpop.xlane.xlu0 %2301
        %2303 = vadd.xlane.f32.xlu0 %v2272
        %v2304 = vpop.xlane.xlu0 %2303
        %2305 = vadd.xlane.f32.xlu0 %v2274
        %v2306 = vpop.xlane.xlu0 %2305
        %2307 = vadd.xlane.f32.xlu0 %v2276
        %v2308 = vpop.xlane.xlu0 %2307
        %2309 = vadd.xlane.f32.xlu0 %v2278
        %v2310 = vpop.xlane.xlu0 %2309
        %2311 = vadd.xlane.f32.xlu0 %v2280
        %v2312 = vpop.xlane.xlu0 %2311
        %2313 = vadd.xlane.f32.xlu0 %v2282
        %v2314 = vpop.xlane.xlu0 %2313
        %2315 = vadd.xlane.f32.xlu0 %v2284
        %v2316 = vpop.xlane.xlu0 %2315
        %v2317 = vrcp.pop %v2286
        %v2318 = vrcp.pop %v2288
        %v2319 = vrcp.pop %v2290
        %v2320 = vrcp.pop %v2292
        %v2321 = vrcp.pop %v2294
        %v2322 = vrcp.pop %v2296
        %v2323 = vrcp.pop %v2298
        %v2324 = vrcp.pop %v2300
        %v2325 = vrcp.pop %v2302
        %v2326 = vrcp.pop %v2304
        %v2327 = vrcp.pop %v2306
        %v2328 = vrcp.pop %v2308
        %v2329 = vrcp.pop %v2310
        %v2330 = vrcp.pop %v2312
        %v2331 = vrcp.pop %v2314
        %v2332 = vrcp.pop %v2316
        %v2333 = vmul.f32 %v2254, %v2317
        %v2334 = vmul.f32 %v2256, %v2318
        %v2335 = vmul.f32 %v2258, %v2319
        %v2336 = vmul.f32 %v2260, %v2320
        %v2337 = vmul.f32 %v2262, %v2321
        %v2338 = vmul.f32 %v2264, %v2322
        %v2339 = vmul.f32 %v2266, %v2323
        %v2340 = vmul.f32 %v2268, %v2324
        %v2341 = vmul.f32 %v2270, %v2325
        %v2342 = vmul.f32 %v2272, %v2326
        %v2343 = vmul.f32 %v2274, %v2327
        %v2344 = vmul.f32 %v2276, %v2328
        %v2345 = vmul.f32 %v2278, %v2329
        %v2346 = vmul.f32 %v2280, %v2330
        %v2347 = vmul.f32 %v2282, %v2331
        %v2348 = vmul.f32 %v2284, %v2332
        %v2349 = vpack.c.bf16 %v2334, %v2333
        %v2350 = vpack.c.bf16 %v2336, %v2335
        %v2351 = vpack.c.bf16 %v2338, %v2337
        %v2352 = vpack.c.bf16 %v2340, %v2339
        %v2353 = vpack.c.bf16 %v2342, %v2341
        %v2354 = vpack.c.bf16 %v2344, %v2343
        %v2355 = vpack.c.bf16 %v2346, %v2345
        %v2356 = vpack.c.bf16 %v2348, %v2347
        %v2357 = vadd.f32 %v1777, %v875
        %v2358 = vadd.f32 %v1781, %v876
        %v2359 = vadd.f32 %v1787, %v877
        %v2360 = vadd.f32 %v1791, %v878
        %v2361 = vadd.f32 %v1797, %v879
        %v2362 = vadd.f32 %v1801, %v880
        %v2363 = vadd.f32 %v1807, %v881
        %v2364 = vadd.f32 %v1811, %v882
        %v2365 = vadd.f32 %v1817, %v883
        %v2366 = vadd.f32 %v1821, %v884
        %v2367 = vadd.f32 %v1827, %v885
        %v2368 = vadd.f32 %v1831, %v886
        %v2369 = vadd.f32 %v1837, %v887
        %v2370 = vadd.f32 %v1841, %v888
        %v2371 = vadd.f32 %v1847, %v889
        %v2372 = vadd.f32 %v1851, %v890
        %2373 = vmax.xlane.f32.xlu0 %v2357
        %v2374 = vpop.xlane.xlu0 %2373
        %2375 = vmax.xlane.f32.xlu0 %v2358
        %v2376 = vpop.xlane.xlu0 %2375
        %2377 = vmax.xlane.f32.xlu0 %v2359
        %v2378 = vpop.xlane.xlu0 %2377
        %2379 = vmax.xlane.f32.xlu0 %v2360
        %v2380 = vpop.xlane.xlu0 %2379
        %2381 = vmax.xlane.f32.xlu0 %v2361
        %v2382 = vpop.xlane.xlu0 %2381
        %2383 = vmax.xlane.f32.xlu0 %v2362
        %v2384 = vpop.xlane.xlu0 %2383
        %2385 = vmax.xlane.f32.xlu0 %v2363
        %v2386 = vpop.xlane.xlu0 %2385
        %2387 = vmax.xlane.f32.xlu0 %v2364
        %v2388 = vpop.xlane.xlu0 %2387
        %2389 = vmax.xlane.f32.xlu0 %v2365
        %v2390 = vpop.xlane.xlu0 %2389
        %2391 = vmax.xlane.f32.xlu0 %v2366
        %v2392 = vpop.xlane.xlu0 %2391
        %2393 = vmax.xlane.f32.xlu0 %v2367
        %v2394 = vpop.xlane.xlu0 %2393
        %2395 = vmax.xlane.f32.xlu0 %v2368
        %v2396 = vpop.xlane.xlu0 %2395
        %2397 = vmax.xlane.f32.xlu0 %v2369
        %v2398 = vpop.xlane.xlu0 %2397
        %2399 = vmax.xlane.f32.xlu0 %v2370
        %v2400 = vpop.xlane.xlu0 %2399
        %2401 = vmax.xlane.f32.xlu0 %v2371
        %v2402 = vpop.xlane.xlu0 %2401
        %2403 = vmax.xlane.f32.xlu0 %v2372
        %v2404 = vpop.xlane.xlu0 %2403
        %v2405 = vsub.f32 %v2357, %v2374
        %v2406 = vsub.f32 %v2358, %v2376
        %v2407 = vsub.f32 %v2359, %v2378
        %v2408 = vsub.f32 %v2360, %v2380
        %v2409 = vsub.f32 %v2361, %v2382
        %v2410 = vsub.f32 %v2362, %v2384
        %v2411 = vsub.f32 %v2363, %v2386
        %v2412 = vsub.f32 %v2364, %v2388
        %v2413 = vsub.f32 %v2365, %v2390
        %v2414 = vsub.f32 %v2366, %v2392
        %v2415 = vsub.f32 %v2367, %v2394
        %v2416 = vsub.f32 %v2368, %v2396
        %v2417 = vsub.f32 %v2369, %v2398
        %v2418 = vsub.f32 %v2370, %v2400
        %v2419 = vsub.f32 %v2371, %v2402
        %v2420 = vsub.f32 %v2372, %v2404
        %v2421 = vmul.f32 %v2405, 1.442695
        %v2422 = vpow.pop %v2421
        %v2423 = vmul.f32 %v2406, 1.442695
        %v2424 = vpow.pop %v2423
        %v2425 = vmul.f32 %v2407, 1.442695
        %v2426 = vpow.pop %v2425
        %v2427 = vmul.f32 %v2408, 1.442695
        %v2428 = vpow.pop %v2427
        %v2429 = vmul.f32 %v2409, 1.442695
        %v2430 = vpow.pop %v2429
        %v2431 = vmul.f32 %v2410, 1.442695
        %v2432 = vpow.pop %v2431
        %v2433 = vmul.f32 %v2411, 1.442695
        %v2434 = vpow.pop %v2433
        %v2435 = vmul.f32 %v2412, 1.442695
        %v2436 = vpow.pop %v2435
        %v2437 = vmul.f32 %v2413, 1.442695
        %v2438 = vpow.pop %v2437
        %v2439 = vmul.f32 %v2414, 1.442695
        %v2440 = vpow.pop %v2439
        %v2441 = vmul.f32 %v2415, 1.442695
        %v2442 = vpow.pop %v2441
        %v2443 = vmul.f32 %v2416, 1.442695
        %v2444 = vpow.pop %v2443
        %v2445 = vmul.f32 %v2417, 1.442695
        %v2446 = vpow.pop %v2445
        %v2447 = vmul.f32 %v2418, 1.442695
        %v2448 = vpow.pop %v2447
        %v2449 = vmul.f32 %v2419, 1.442695
        %v2450 = vpow.pop %v2449
        %v2451 = vmul.f32 %v2420, 1.442695
        %v2452 = vpow.pop %v2451
        %2453 = vadd.xlane.f32.xlu0 %v2422
        %v2454 = vpop.xlane.xlu0 %2453
        %2455 = vadd.xlane.f32.xlu0 %v2424
        %v2456 = vpop.xlane.xlu0 %2455
        %2457 = vadd.xlane.f32.xlu0 %v2426
        %v2458 = vpop.xlane.xlu0 %2457
        %2459 = vadd.xlane.f32.xlu0 %v2428
        %v2460 = vpop.xlane.xlu0 %2459
        %2461 = vadd.xlane.f32.xlu0 %v2430
        %v2462 = vpop.xlane.xlu0 %2461
        %2463 = vadd.xlane.f32.xlu0 %v2432
        %v2464 = vpop.xlane.xlu0 %2463
        %2465 = vadd.xlane.f32.xlu0 %v2434
        %v2466 = vpop.xlane.xlu0 %2465
        %2467 = vadd.xlane.f32.xlu0 %v2436
        %v2468 = vpop.xlane.xlu0 %2467
        %2469 = vadd.xlane.f32.xlu0 %v2438
        %v2470 = vpop.xlane.xlu0 %2469
        %2471 = vadd.xlane.f32.xlu0 %v2440
        %v2472 = vpop.xlane.xlu0 %2471
        %2473 = vadd.xlane.f32.xlu0 %v2442
        %v2474 = vpop.xlane.xlu0 %2473
        %2475 = vadd.xlane.f32.xlu0 %v2444
        %v2476 = vpop.xlane.xlu0 %2475
        %2477 = vadd.xlane.f32.xlu0 %v2446
        %v2478 = vpop.xlane.xlu0 %2477
        %2479 = vadd.xlane.f32.xlu0 %v2448
        %v2480 = vpop.xlane.xlu0 %2479
        %2481 = vadd.xlane.f32.xlu0 %v2450
        %v2482 = vpop.xlane.xlu0 %2481
        %2483 = vadd.xlane.f32.xlu0 %v2452
        %v2484 = vpop.xlane.xlu0 %2483
        %v2485 = vrcp.pop %v2454
        %v2486 = vrcp.pop %v2456
        %v2487 = vrcp.pop %v2458
        %v2488 = vrcp.pop %v2460
        %v2489 = vrcp.pop %v2462
        %v2490 = vrcp.pop %v2464
        %v2491 = vrcp.pop %v2466
        %v2492 = vrcp.pop %v2468
        %v2493 = vrcp.pop %v2470
        %v2494 = vrcp.pop %v2472
        %v2495 = vrcp.pop %v2474
        %v2496 = vrcp.pop %v2476
        %v2497 = vrcp.pop %v2478
        %v2498 = vrcp.pop %v2480
        %v2499 = vrcp.pop %v2482
        %v2500 = vrcp.pop %v2484
        %v2501 = vmul.f32 %v2422, %v2485
        %v2502 = vmul.f32 %v2424, %v2486
        %v2503 = vmul.f32 %v2426, %v2487
        %v2504 = vmul.f32 %v2428, %v2488
        %v2505 = vmul.f32 %v2430, %v2489
        %v2506 = vmul.f32 %v2432, %v2490
        %v2507 = vmul.f32 %v2434, %v2491
        %v2508 = vmul.f32 %v2436, %v2492
        %v2509 = vmul.f32 %v2438, %v2493
        %v2510 = vmul.f32 %v2440, %v2494
        %v2511 = vmul.f32 %v2442, %v2495
        %v2512 = vmul.f32 %v2444, %v2496
        %v2513 = vmul.f32 %v2446, %v2497
        %v2514 = vmul.f32 %v2448, %v2498
        %v2515 = vmul.f32 %v2450, %v2499
        %v2516 = vmul.f32 %v2452, %v2500
        %v2517 = vpack.c.bf16 %v2502, %v2501
        %v2518 = vpack.c.bf16 %v2504, %v2503
        %v2519 = vpack.c.bf16 %v2506, %v2505
        %v2520 = vpack.c.bf16 %v2508, %v2507
        %v2521 = vpack.c.bf16 %v2510, %v2509
        %v2522 = vpack.c.bf16 %v2512, %v2511
        %v2523 = vpack.c.bf16 %v2514, %v2513
        %v2524 = vpack.c.bf16 %v2516, %v2515
        %2525 = vmatprep.subr.bf16.mxu0 0
        %2526 = vmatpush1.bf16.msra.mxu0 %v1547
        %2527 = vmatprep.subr.bf16.mxu0 0
        %2528 = vmatpush1.bf16.msra.mxu0 %v1548
        %2529 = vmatprep.subr.bf16.mxu0 0
        %2530 = vmatpush1.bf16.msra.mxu0 %v1549
        %2531 = vmatprep.subr.bf16.mxu0 0
        %2532 = vmatpush1.bf16.msra.mxu0 %v1550
        %2533 = vmatprep.subr.bf16.mxu0 0
        %2534 = vmatpush1.bf16.msra.mxu0 %v1551
        %2535 = vmatprep.subr.bf16.mxu0 0
        %2536 = vmatpush1.bf16.msra.mxu0 %v1552
        %2537 = vmatprep.subr.bf16.mxu0 0
        %2538 = vmatpush1.bf16.msra.mxu0 %v1553
        %2539 = vmatprep.subr.bf16.mxu0 0
        %2540 = vmatpush1.bf16.msra.mxu0 %v1554
        %2541 = vmatprep.subr.bf16.mxu0 0
        %2542 = vmatpush1.bf16.msra.mxu0 %v1571
        %2543 = vmatprep.subr.bf16.mxu0 0
        %2544 = vmatpush1.bf16.msra.mxu0 %v1572
        %2545 = vmatprep.subr.bf16.mxu0 0
        %2546 = vmatpush1.bf16.msra.mxu0 %v1573
        %2547 = vmatprep.subr.bf16.mxu0 0
        %2548 = vmatpush1.bf16.msra.mxu0 %v1574
        %2549 = vmatprep.subr.bf16.mxu0 0
        %2550 = vmatpush1.bf16.msra.mxu0 %v1575
        %2551 = vmatprep.subr.bf16.mxu0 0
        %2552 = vmatpush1.bf16.msra.mxu0 %v1576
        %2553 = vmatprep.subr.bf16.mxu0 0
        %2554 = vmatpush1.bf16.msra.mxu0 %v1577
        %2555 = vmatprep.subr.bf16.mxu0 0
        %2556 = vmatpush1.bf16.msra.mxu0 %v1578
        %2557 = vmatprep.mubr.bf16.mxu0 %v2181
        %2558 = vmatmul.mubr.bf16.gmra.mrb[0].mxu0 %v2013
        %v2559 = vpop.f32.mrb[0].mxu0
        %v2560 = vadd.f32 0.0, %v2559
        %v2561 = vpop.f32.mrb[0].mxu0
        %v2562 = vpop.f32.mrb[0].mxu0
        %v2563 = vadd.f32 0.0, %v2562
        %v2564 = vpop.f32.mrb[0].mxu0
        %2565 = vmatprep.mubr.bf16.mxu0 %v2182
        %2566 = vmatmul.mubr.bf16.gmra.mrb[0].mxu0 %v2014
        %v2567 = vpop.f32.mrb[0].mxu0
        %v2568 = vadd.f32 0.0, %v2567
        %v2569 = vpop.f32.mrb[0].mxu0
        %v2570 = vpop.f32.mrb[0].mxu0
        %v2571 = vadd.f32 0.0, %v2570
        %v2572 = vpop.f32.mrb[0].mxu0
        %2573 = vmatprep.mubr.bf16.mxu0 %v2183
        %2574 = vmatmul.mubr.bf16.gmra.mrb[0].mxu0 %v2015
        %v2575 = vpop.f32.mrb[0].mxu0
        %v2576 = vadd.f32 0.0, %v2575
        %v2577 = vpop.f32.mrb[0].mxu0
        %v2578 = vpop.f32.mrb[0].mxu0
        %v2579 = vadd.f32 0.0, %v2578
        %v2580 = vpop.f32.mrb[0].mxu0
        %2581 = vmatprep.mubr.bf16.mxu0 %v2184
        %2582 = vmatmul.mubr.bf16.gmra.mrb[0].mxu0 %v2016
        %v2583 = vpop.f32.mrb[0].mxu0
        %v2584 = vadd.f32 0.0, %v2583
        %v2585 = vpop.f32.mrb[0].mxu0
        %v2586 = vpop.f32.mrb[0].mxu0
        %v2587 = vadd.f32 0.0, %v2586
        %v2588 = vpop.f32.mrb[0].mxu0
        %2589 = vmatprep.mubr.bf16.mxu0 %v2185
        %2590 = vmatmul.mubr.bf16.gmra.mrb[0].mxu0 %v2017
        %v2591 = vpop.f32.mrb[0].mxu0
        %v2592 = vadd.f32 0.0, %v2591
        %v2593 = vpop.f32.mrb[0].mxu0
        %v2594 = vpop.f32.mrb[0].mxu0
        %v2595 = vadd.f32 0.0, %v2594
        %v2596 = vpop.f32.mrb[0].mxu0
        %2597 = vmatprep.mubr.bf16.mxu0 %v2186
        %2598 = vmatmul.mubr.bf16.gmra.mrb[0].mxu0 %v2018
        %v2599 = vpop.f32.mrb[0].mxu0
        %v2600 = vadd.f32 0.0, %v2599
        %v2601 = vpop.f32.mrb[0].mxu0
        %v2602 = vpop.f32.mrb[0].mxu0
        %v2603 = vadd.f32 0.0, %v2602
        %v2604 = vpop.f32.mrb[0].mxu0
        %2605 = vmatprep.mubr.bf16.mxu0 %v2187
        %2606 = vmatmul.mubr.bf16.gmra.mrb[0].mxu0 %v2019
        %v2607 = vpop.f32.mrb[0].mxu0
        %v2608 = vadd.f32 0.0, %v2607
        %v2609 = vpop.f32.mrb[0].mxu0
        %v2610 = vpop.f32.mrb[0].mxu0
        %v2611 = vadd.f32 0.0, %v2610
        %v2612 = vpop.f32.mrb[0].mxu0
        %2613 = vmatprep.mubr.bf16.mxu0 %v2188
        %2614 = vmatmul.mubr.bf16.gmra.mrb[0].mxu0 %v2020
        %v2615 = vpop.f32.mrb[0].mxu0
        %v2616 = vadd.f32 0.0, %v2615
        %v2617 = vpop.f32.mrb[0].mxu0
        %v2618 = vpop.f32.mrb[0].mxu0
        %v2619 = vadd.f32 0.0, %v2618
        %v2620 = vpop.f32.mrb[0].mxu0
        %2621 = vdwg.mxu0
        %2622 = vmatprep.subr.bf16.mxu0 0
        %2623 = vmatpush1.bf16.msra.mxu0 %v1595
        %2624 = vmatprep.subr.bf16.mxu0 0
        %2625 = vmatpush1.bf16.msra.mxu0 %v1596
        %2626 = vmatprep.subr.bf16.mxu0 0
        %2627 = vmatpush1.bf16.msra.mxu0 %v1597
        %2628 = vmatprep.subr.bf16.mxu0 0
        %2629 = vmatpush1.bf16.msra.mxu0 %v1598
        %2630 = vmatprep.subr.bf16.mxu0 0
        %2631 = vmatpush1.bf16.msra.mxu0 %v1599
        %2632 = vmatprep.subr.bf16.mxu0 0
        %2633 = vmatpush1.bf16.msra.mxu0 %v1600
        %2634 = vmatprep.subr.bf16.mxu0 0
        %2635 = vmatpush1.bf16.msra.mxu0 %v1601
        %2636 = vmatprep.subr.bf16.mxu0 0
        %2637 = vmatpush1.bf16.msra.mxu0 %v1602
        %2638 = vmatprep.subr.bf16.mxu0 0
        %2639 = vmatpush1.bf16.msra.mxu0 %v1619
        %2640 = vmatprep.subr.bf16.mxu0 0
        %2641 = vmatpush1.bf16.msra.mxu0 %v1620
        %2642 = vmatprep.subr.bf16.mxu0 0
        %2643 = vmatpush1.bf16.msra.mxu0 %v1621
        %2644 = vmatprep.subr.bf16.mxu0 0
        %2645 = vmatpush1.bf16.msra.mxu0 %v1622
        %2646 = vmatprep.subr.bf16.mxu0 0
        %2647 = vmatpush1.bf16.msra.mxu0 %v1623
        %2648 = vmatprep.subr.bf16.mxu0 0
        %2649 = vmatpush1.bf16.msra.mxu0 %v1624
        %2650 = vmatprep.subr.bf16.mxu0 0
        %2651 = vmatpush1.bf16.msra.mxu0 %v1625
        %2652 = vmatprep.subr.bf16.mxu0 0
        %2653 = vmatpush1.bf16.msra.mxu0 %v1626
        %2654 = vmatprep.mubr.bf16.mxu0 %v2517
        %2655 = vmatmul.mubr.bf16.gmra.mrb[0].mxu0 %v2349
        %v2656 = vpop.f32.mrb[0].mxu0
        %v2657 = vadd.f32 %v2560, %v2656
        %v2658 = vpop.f32.mrb[0].mxu0
        %v2659 = vpop.f32.mrb[0].mxu0
        %v2660 = vadd.f32 %v2563, %v2659
        %v2661 = vpop.f32.mrb[0].mxu0
        %2662 = vmatprep.mubr.bf16.mxu0 %v2518
        %2663 = vmatmul.mubr.bf16.gmra.mrb[0].mxu0 %v2350
        %v2664 = vpop.f32.mrb[0].mxu0
        %v2665 = vadd.f32 %v2568, %v2664
        %v2666 = vpop.f32.mrb[0].mxu0
        %v2667 = vpop.f32.mrb[0].mxu0
        %v2668 = vadd.f32 %v2571, %v2667
        %v2669 = vpop.f32.mrb[0].mxu0
        %2670 = vmatprep.mubr.bf16.mxu0 %v2519
        %2671 = vmatmul.mubr.bf16.gmra.mrb[0].mxu0 %v2351
        %v2672 = vpop.f32.mrb[0].mxu0
        %v2673 = vadd.f32 %v2576, %v2672
        %v2674 = vpop.f32.mrb[0].mxu0
        %v2675 = vpop.f32.mrb[0].mxu0
        %v2676 = vadd.f32 %v2579, %v2675
        %v2677 = vpop.f32.mrb[0].mxu0
        %2678 = vmatprep.mubr.bf16.mxu0 %v2520
        %2679 = vmatmul.mubr.bf16.gmra.mrb[0].mxu0 %v2352
        %v2680 = vpop.f32.mrb[0].mxu0
        %v2681 = vadd.f32 %v2584, %v2680
        %v2682 = vpop.f32.mrb[0].mxu0
        %v2683 = vpop.f32.mrb[0].mxu0
        %v2684 = vadd.f32 %v2587, %v2683
        %v2685 = vpop.f32.mrb[0].mxu0
        %2686 = vmatprep.mubr.bf16.mxu0 %v2521
        %2687 = vmatmul.mubr.bf16.gmra.mrb[0].mxu0 %v2353
        %v2688 = vpop.f32.mrb[0].mxu0
        %v2689 = vadd.f32 %v2592, %v2688
        %v2690 = vpop.f32.mrb[0].mxu0
        %v2691 = vpop.f32.mrb[0].mxu0
        %v2692 = vadd.f32 %v2595, %v2691
        %v2693 = vpop.f32.mrb[0].mxu0
        %2694 = vmatprep.mubr.bf16.mxu0 %v2522
        %2695 = vmatmul.mubr.bf16.gmra.mrb[0].mxu0 %v2354
        %v2696 = vpop.f32.mrb[0].mxu0
        %v2697 = vadd.f32 %v2600, %v2696
        %v2698 = vpop.f32.mrb[0].mxu0
        %v2699 = vpop.f32.mrb[0].mxu0
        %v2700 = vadd.f32 %v2603, %v2699
        %v2701 = vpop.f32.mrb[0].mxu0
        %2702 = vmatprep.mubr.bf16.mxu0 %v2523
        %2703 = vmatmul.mubr.bf16.gmra.mrb[0].mxu0 %v2355
        %v2704 = vpop.f32.mrb[0].mxu0
        %v2705 = vadd.f32 %v2608, %v2704
        %v2706 = vpop.f32.mrb[0].mxu0
        %v2707 = vpop.f32.mrb[0].mxu0
        %v2708 = vadd.f32 %v2611, %v2707
        %v2709 = vpop.f32.mrb[0].mxu0
        %2710 = vmatprep.mubr.bf16.mxu0 %v2524
        %2711 = vmatmul.mubr.bf16.gmra.mrb[0].mxu0 %v2356
        %v2712 = vpop.f32.mrb[0].mxu0
        %v2713 = vadd.f32 %v2616, %v2712
        %v2714 = vpop.f32.mrb[0].mxu0
        %v2715 = vpop.f32.mrb[0].mxu0
        %v2716 = vadd.f32 %v2619, %v2715
        %v2717 = vpop.f32.mrb[0].mxu0
        %2718 = vdwg.mxu0
        %v2719 = vpack.c.bf16 %v2660, %v2657
        %v2720 = vpack.c.bf16 %v2668, %v2665
        %v2721 = vpack.c.bf16 %v2676, %v2673
        %v2722 = vpack.c.bf16 %v2684, %v2681
        %v2723 = vpack.c.bf16 %v2692, %v2689
        %v2724 = vpack.c.bf16 %v2700, %v2697
        %v2725 = vpack.c.bf16 %v2708, %v2705
        %v2726 = vpack.c.bf16 %v2716, %v2713
        %v2727 = vld [vmem:[%s545] sm:$0xf]
        %v2728 = vld [vmem:[%s545 + $0x4] sm:$0xf]
        %v2729 = vld [vmem:[%s545 + $0x8] sm:$0xf]
        %v2730 = vld [vmem:[%s545 + $0xc] sm:$0xf]
        %v2731 = vld [vmem:[%s545 + $0x10] sm:$0xf]
        %v2732 = vld [vmem:[%s545 + $0x14] sm:$0xf]
        %v2733 = vld [vmem:[%s545 + $0x18] sm:$0xf]
        %v2734 = vld [vmem:[%s545 + $0x1c] sm:$0xf]
        %v2735 = vld [vmem:[%s545 + $0x20] sm:$0xf]
        %v2736 = vld [vmem:[%s545 + $0x24] sm:$0xf]
        %v2737 = vld [vmem:[%s545 + $0x28] sm:$0xf]
        %v2738 = vld [vmem:[%s545 + $0x2c] sm:$0xf]
        %v2739 = vld [vmem:[%s545 + $0x30] sm:$0xf]
        %v2740 = vld [vmem:[%s545 + $0x34] sm:$0xf]
        %v2741 = vld [vmem:[%s545 + $0x38] sm:$0xf]
        %v2742 = vld [vmem:[%s545 + $0x3c] sm:$0xf]
        %v2759 = vunpack.c.l.b16 %v2727
        %v2760 = vunpack.c.l.b16 %v2728
        %v2761 = vunpack.c.l.b16 %v2729
        %v2762 = vunpack.c.l.b16 %v2730
        %v2763 = vunpack.c.l.b16 %v2731
        %v2764 = vunpack.c.l.b16 %v2732
        %v2765 = vunpack.c.l.b16 %v2733
        %v2766 = vunpack.c.l.b16 %v2734
        %v2767 = vunpack.c.l.b16 %v2735
        %v2768 = vunpack.c.l.b16 %v2736
        %v2769 = vunpack.c.l.b16 %v2737
        %v2770 = vunpack.c.l.b16 %v2738
        %v2771 = vunpack.c.l.b16 %v2739
        %v2772 = vunpack.c.l.b16 %v2740
        %v2773 = vunpack.c.l.b16 %v2741
        %v2774 = vunpack.c.l.b16 %v2742
        %v2775 = vpack.c.b16 %v2760, %v2759
        %v2776 = vpack.c.b16 %v2762, %v2761
        %v2777 = vpack.c.b16 %v2764, %v2763
        %v2778 = vpack.c.b16 %v2766, %v2765
        %v2779 = vpack.c.b16 %v2768, %v2767
        %v2780 = vpack.c.b16 %v2770, %v2769
        %v2781 = vpack.c.b16 %v2772, %v2771
        %v2782 = vpack.c.b16 %v2774, %v2773
        %2791 = vmatprep.subr.bf16.mxu0 0
        %2792 = vmatpush1.bf16.msra.mxu0 %v2775
        %2793 = vmatprep.subr.bf16.mxu0 0
        %2794 = vmatpush1.bf16.msra.mxu0 %v2776
        %2795 = vmatprep.subr.bf16.mxu0 0
        %2796 = vmatpush1.bf16.msra.mxu0 %v2777
        %2797 = vmatprep.subr.bf16.mxu0 0
        %2798 = vmatpush1.bf16.msra.mxu0 %v2778
        %2799 = vmatprep.subr.bf16.mxu0 0
        %2800 = vmatpush1.bf16.msra.mxu0 %v2779
        %2801 = vmatprep.subr.bf16.mxu0 0
        %2802 = vmatpush1.bf16.msra.mxu0 %v2780
        %2803 = vmatprep.subr.bf16.mxu0 0
        %2804 = vmatpush1.bf16.msra.mxu0 %v2781
        %2805 = vmatprep.subr.bf16.mxu0 0
        %2806 = vmatpush1.bf16.msra.mxu0 %v2782
        %2807 = vmatprep.subr.bf16.mxu0 0
        %2808 = vmatpush1.bf16.msra.mxu0 0
        %2809 = vmatprep.subr.bf16.mxu0 0
        %2810 = vmatpush1.bf16.msra.mxu0 0
        %2811 = vmatprep.subr.bf16.mxu0 0
        %2812 = vmatpush1.bf16.msra.mxu0 0
        %2813 = vmatprep.subr.bf16.mxu0 0
        %2814 = vmatpush1.bf16.msra.mxu0 0
        %2815 = vmatprep.subr.bf16.mxu0 0
        %2816 = vmatpush1.bf16.msra.mxu0 0
        %2817 = vmatprep.subr.bf16.mxu0 0
        %2818 = vmatpush1.bf16.msra.mxu0 0
        %2819 = vmatprep.subr.bf16.mxu0 0
        %2820 = vmatpush1.bf16.msra.mxu0 0
        %2821 = vmatprep.subr.bf16.mxu0 0
        %2822 = vmatpush1.bf16.msra.mxu0 0
        %2823 = vmatprep.mubr.bf16.mxu0 0
        %2824 = vmatmul.mubr.bf16.gmra.mrb[0].mxu0 %v2719
        %v2825 = vpop.f32.mrb[0].mxu0
        %v2826 = vadd.f32 0.0, %v2825
        %v2827 = vpop.f32.mrb[0].mxu0
        %v2828 = vpop.f32.mrb[0].mxu0
        %v2829 = vadd.f32 0.0, %v2828
        %v2830 = vpop.f32.mrb[0].mxu0
        %2831 = vmatprep.mubr.bf16.mxu0 0
        %2832 = vmatmul.mubr.bf16.gmra.mrb[0].mxu0 %v2720
        %v2833 = vpop.f32.mrb[0].mxu0
        %v2834 = vadd.f32 0.0, %v2833
        %v2835 = vpop.f32.mrb[0].mxu0
        %v2836 = vpop.f32.mrb[0].mxu0
        %v2837 = vadd.f32 0.0, %v2836
        %v2838 = vpop.f32.mrb[0].mxu0
        %2839 = vmatprep.mubr.bf16.mxu0 0
        %2840 = vmatmul.mubr.bf16.gmra.mrb[0].mxu0 %v2721
        %v2841 = vpop.f32.mrb[0].mxu0
        %v2842 = vadd.f32 0.0, %v2841
        %v2843 = vpop.f32.mrb[0].mxu0
        %v2844 = vpop.f32.mrb[0].mxu0
        %v2845 = vadd.f32 0.0, %v2844
        %v2846 = vpop.f32.mrb[0].mxu0
        %2847 = vmatprep.mubr.bf16.mxu0 0
        %2848 = vmatmul.mubr.bf16.gmra.mrb[0].mxu0 %v2722
        %v2849 = vpop.f32.mrb[0].mxu0
        %v2850 = vadd.f32 0.0, %v2849
        %v2851 = vpop.f32.mrb[0].mxu0
        %v2852 = vpop.f32.mrb[0].mxu0
        %v2853 = vadd.f32 0.0, %v2852
        %v2854 = vpop.f32.mrb[0].mxu0
        %2855 = vmatprep.mubr.bf16.mxu0 0
        %2856 = vmatmul.mubr.bf16.gmra.mrb[0].mxu0 %v2723
        %v2857 = vpop.f32.mrb[0].mxu0
        %v2858 = vadd.f32 0.0, %v2857
        %v2859 = vpop.f32.mrb[0].mxu0
        %v2860 = vpop.f32.mrb[0].mxu0
        %v2861 = vadd.f32 0.0, %v2860
        %v2862 = vpop.f32.mrb[0].mxu0
        %2863 = vmatprep.mubr.bf16.mxu0 0
        %2864 = vmatmul.mubr.bf16.gmra.mrb[0].mxu0 %v2724
        %v2865 = vpop.f32.mrb[0].mxu0
        %v2866 = vadd.f32 0.0, %v2865
        %v2867 = vpop.f32.mrb[0].mxu0
        %v2868 = vpop.f32.mrb[0].mxu0
        %v2869 = vadd.f32 0.0, %v2868
        %v2870 = vpop.f32.mrb[0].mxu0
        %2871 = vmatprep.mubr.bf16.mxu0 0
        %2872 = vmatmul.mubr.bf16.gmra.mrb[0].mxu0 %v2725
        %v2873 = vpop.f32.mrb[0].mxu0
        %v2874 = vadd.f32 0.0, %v2873
        %v2875 = vpop.f32.mrb[0].mxu0
        %v2876 = vpop.f32.mrb[0].mxu0
        %v2877 = vadd.f32 0.0, %v2876
        %v2878 = vpop.f32.mrb[0].mxu0
        %2879 = vmatprep.mubr.bf16.mxu0 0
        %2880 = vmatmul.mubr.bf16.gmra.mrb[0].mxu0 %v2726
        %v2881 = vpop.f32.mrb[0].mxu0
        %v2882 = vadd.f32 0.0, %v2881
        %v2883 = vpop.f32.mrb[0].mxu0
        %v2884 = vpop.f32.mrb[0].mxu0
        %v2885 = vadd.f32 0.0, %v2884
        %v2886 = vpop.f32.mrb[0].mxu0
        %2887 = vdwg.mxu0
        %v2888 = vadd.f32 %v859, %v2826
        %v2889 = vadd.f32 %v860, %v2829
        %v2890 = vadd.f32 %v861, %v2834
        %v2891 = vadd.f32 %v862, %v2837
        %v2892 = vadd.f32 %v863, %v2842
        %v2893 = vadd.f32 %v864, %v2845
        %v2894 = vadd.f32 %v865, %v2850
        %v2895 = vadd.f32 %v866, %v2853
        %v2896 = vadd.f32 %v867, %v2858
        %v2897 = vadd.f32 %v868, %v2861
        %v2898 = vadd.f32 %v869, %v2866
        %v2899 = vadd.f32 %v870, %v2869
        %v2900 = vadd.f32 %v871, %v2874
        %v2901 = vadd.f32 %v872, %v2877
        %v2902 = vadd.f32 %v873, %v2882
        %v2903 = vadd.f32 %v874, %v2885
        %v2904 = vld [vmem:[%s629] sm:$0x1]
        %v2905 = vmul.f32 %v2888, %v2888
        %v2906 = vmul.f32 %v2889, %v2889
        %v2907 = vmul.f32 %v2890, %v2890
        %v2908 = vmul.f32 %v2891, %v2891
        %v2909 = vmul.f32 %v2892, %v2892
        %v2910 = vmul.f32 %v2893, %v2893
        %v2911 = vmul.f32 %v2894, %v2894
        %v2912 = vmul.f32 %v2895, %v2895
        %v2913 = vmul.f32 %v2896, %v2896
        %v2914 = vmul.f32 %v2897, %v2897
        %v2915 = vmul.f32 %v2898, %v2898
        %v2916 = vmul.f32 %v2899, %v2899
        %v2917 = vmul.f32 %v2900, %v2900
        %v2918 = vmul.f32 %v2901, %v2901
        %v2919 = vmul.f32 %v2902, %v2902
        %v2920 = vmul.f32 %v2903, %v2903
        %2921 = vadd.xlane.f32.xlu0 %v2905
        %v2922 = vpop.xlane.xlu0 %2921
        %2923 = vadd.xlane.f32.xlu0 %v2906
        %v2924 = vpop.xlane.xlu0 %2923
        %2925 = vadd.xlane.f32.xlu0 %v2907
        %v2926 = vpop.xlane.xlu0 %2925
        %2927 = vadd.xlane.f32.xlu0 %v2908
        %v2928 = vpop.xlane.xlu0 %2927
        %2929 = vadd.xlane.f32.xlu0 %v2909
        %v2930 = vpop.xlane.xlu0 %2929
        %2931 = vadd.xlane.f32.xlu0 %v2910
        %v2932 = vpop.xlane.xlu0 %2931
        %2933 = vadd.xlane.f32.xlu0 %v2911
        %v2934 = vpop.xlane.xlu0 %2933
        %2935 = vadd.xlane.f32.xlu0 %v2912
        %v2936 = vpop.xlane.xlu0 %2935
        %2937 = vadd.xlane.f32.xlu0 %v2913
        %v2938 = vpop.xlane.xlu0 %2937
        %2939 = vadd.xlane.f32.xlu0 %v2914
        %v2940 = vpop.xlane.xlu0 %2939
        %2941 = vadd.xlane.f32.xlu0 %v2915
        %v2942 = vpop.xlane.xlu0 %2941
        %2943 = vadd.xlane.f32.xlu0 %v2916
        %v2944 = vpop.xlane.xlu0 %2943
        %2945 = vadd.xlane.f32.xlu0 %v2917
        %v2946 = vpop.xlane.xlu0 %2945
        %2947 = vadd.xlane.f32.xlu0 %v2918
        %v2948 = vpop.xlane.xlu0 %2947
        %2949 = vadd.xlane.f32.xlu0 %v2919
        %v2950 = vpop.xlane.xlu0 %2949
        %2951 = vadd.xlane.f32.xlu0 %v2920
        %v2952 = vpop.xlane.xlu0 %2951
        %v2953 = vmul.f32 %v2922, %v962
        %v2954 = vmul.f32 %v2924, %v962
        %v2955 = vmul.f32 %v2926, %v962
        %v2956 = vmul.f32 %v2928, %v962
        %v2957 = vmul.f32 %v2930, %v962
        %v2958 = vmul.f32 %v2932, %v962
        %v2959 = vmul.f32 %v2934, %v962
        %v2960 = vmul.f32 %v2936, %v962
        %v2961 = vmul.f32 %v2938, %v962
        %v2962 = vmul.f32 %v2940, %v962
        %v2963 = vmul.f32 %v2942, %v962
        %v2964 = vmul.f32 %v2944, %v962
        %v2965 = vmul.f32 %v2946, %v962
        %v2966 = vmul.f32 %v2948, %v962
        %v2967 = vmul.f32 %v2950, %v962
        %v2968 = vmul.f32 %v2952, %v962
        %v2969 = vadd.f32 %v2953, 1e-06
        %v2970 = vadd.f32 %v2954, 1e-06
        %v2971 = vadd.f32 %v2955, 1e-06
        %v2972 = vadd.f32 %v2956, 1e-06
        %v2973 = vadd.f32 %v2957, 1e-06
        %v2974 = vadd.f32 %v2958, 1e-06
        %v2975 = vadd.f32 %v2959, 1e-06
        %v2976 = vadd.f32 %v2960, 1e-06
        %v2977 = vadd.f32 %v2961, 1e-06
        %v2978 = vadd.f32 %v2962, 1e-06
        %v2979 = vadd.f32 %v2963, 1e-06
        %v2980 = vadd.f32 %v2964, 1e-06
        %v2981 = vadd.f32 %v2965, 1e-06
        %v2982 = vadd.f32 %v2966, 1e-06
        %v2983 = vadd.f32 %v2967, 1e-06
        %v2984 = vadd.f32 %v2968, 1e-06
        %v2985 = vrsqrt.pop %v2969
        %v2986 = vrsqrt.pop %v2970
        %v2987 = vrsqrt.pop %v2971
        %v2988 = vrsqrt.pop %v2972
        %v2989 = vrsqrt.pop %v2973
        %v2990 = vrsqrt.pop %v2974
        %v2991 = vrsqrt.pop %v2975
        %v2992 = vrsqrt.pop %v2976
        %v2993 = vrsqrt.pop %v2977
        %v2994 = vrsqrt.pop %v2978
        %v2995 = vrsqrt.pop %v2979
        %v2996 = vrsqrt.pop %v2980
        %v2997 = vrsqrt.pop %v2981
        %v2998 = vrsqrt.pop %v2982
        %v2999 = vrsqrt.pop %v2983
        %v3000 = vrsqrt.pop %v2984
        %v3001 = vmul.f32 %v2888, %v2985
        %v3002 = vmul.f32 %v2889, %v2986
        %v3003 = vmul.f32 %v2890, %v2987
        %v3004 = vmul.f32 %v2891, %v2988
        %v3005 = vmul.f32 %v2892, %v2989
        %v3006 = vmul.f32 %v2893, %v2990
        %v3007 = vmul.f32 %v2894, %v2991
        %v3008 = vmul.f32 %v2895, %v2992
        %v3009 = vmul.f32 %v2896, %v2993
        %v3010 = vmul.f32 %v2897, %v2994
        %v3011 = vmul.f32 %v2898, %v2995
        %v3012 = vmul.f32 %v2899, %v2996
        %v3013 = vmul.f32 %v2900, %v2997
        %v3014 = vmul.f32 %v2901, %v2998
        %v3015 = vmul.f32 %v2902, %v2999
        %v3016 = vmul.f32 %v2903, %v3000
        %v3018 = vlaneseq
        %v3019 = vshrl.u32 %v3018, 7
        %v3020 = vsub.s32 0, %v3019
        %v3021 = vrot.slane %v2904, %v3020
        %v3023 = vmul.f32 %v3001, %v3021
        %v3024 = vmul.f32 %v3002, %v3021
        %v3025 = vmul.f32 %v3003, %v3021
        %v3026 = vmul.f32 %v3004, %v3021
        %v3027 = vmul.f32 %v3005, %v3021
        %v3028 = vmul.f32 %v3006, %v3021
        %v3029 = vmul.f32 %v3007, %v3021
        %v3030 = vmul.f32 %v3008, %v3021
        %v3031 = vmul.f32 %v3009, %v3021
        %v3032 = vmul.f32 %v3010, %v3021
        %v3033 = vmul.f32 %v3011, %v3021
        %v3034 = vmul.f32 %v3012, %v3021
        %v3035 = vmul.f32 %v3013, %v3021
        %v3036 = vmul.f32 %v3014, %v3021
        %v3037 = vmul.f32 %v3015, %v3021
        %v3038 = vmul.f32 %v3016, %v3021
        %v3039 = vpack.c.bf16 %v3024, %v3023
        %v3040 = vpack.c.bf16 %v3026, %v3025
        %v3041 = vpack.c.bf16 %v3028, %v3027
        %v3042 = vpack.c.bf16 %v3030, %v3029
        %v3043 = vpack.c.bf16 %v3032, %v3031
        %v3044 = vpack.c.bf16 %v3034, %v3033
        %v3045 = vpack.c.bf16 %v3036, %v3035
        %v3046 = vpack.c.bf16 %v3038, %v3037
        %v3047 = vld [vmem:[%s554] sm:$0xff]
        %v3048 = vld [vmem:[%s554 + $0x8] sm:$0xff]
        %v3049 = vld [vmem:[%s554 + $0x10] sm:$0xff]
        %v3050 = vld [vmem:[%s554 + $0x18] sm:$0xff]
        %v3051 = vld [vmem:[%s554 + $0x20] sm:$0xff]
        %v3052 = vld [vmem:[%s554 + $0x28] sm:$0xff]
        %v3053 = vld [vmem:[%s554 + $0x30] sm:$0xff]
        %v3054 = vld [vmem:[%s554 + $0x38] sm:$0xff]
        %v3055 = vld [vmem:[%s554 + $0x40] sm:$0xff]
        %v3056 = vld [vmem:[%s554 + $0x48] sm:$0xff]
        %v3057 = vld [vmem:[%s554 + $0x50] sm:$0xff]
        %v3058 = vld [vmem:[%s554 + $0x58] sm:$0xff]
        %v3059 = vld [vmem:[%s554 + $0x60] sm:$0xff]
        %v3060 = vld [vmem:[%s554 + $0x68] sm:$0xff]
        %v3061 = vld [vmem:[%s554 + $0x70] sm:$0xff]
        %v3062 = vld [vmem:[%s554 + $0x78] sm:$0xff]
        %v3063 = vld [vmem:[%s554 + $0x80] sm:$0xff]
        %v3064 = vld [vmem:[%s554 + $0x88] sm:$0xff]
        %v3065 = vld [vmem:[%s554 + $0x90] sm:$0xff]
        %v3066 = vld [vmem:[%s554 + $0x98] sm:$0xff]
        %v3067 = vld [vmem:[%s554 + $0xa0] sm:$0xff]
        %v3068 = vld [vmem:[%s554 + $0xa8] sm:$0xff]
        %v3069 = vld [vmem:[%s554 + $0xb0] sm:$0xff]
        %v3070 = vld [vmem:[%s554 + $0xb8] sm:$0xff]
        %v3071 = vld [vmem:[%s554 + $0xc0] sm:$0xff]
        %v3072 = vld [vmem:[%s554 + $0xc8] sm:$0xff]
        %v3073 = vld [vmem:[%s554 + $0xd0] sm:$0xff]
        %v3074 = vld [vmem:[%s554 + $0xd8] sm:$0xff]
        %v3075 = vld [vmem:[%s554 + $0xe0] sm:$0xff]
        %v3076 = vld [vmem:[%s554 + $0xe8] sm:$0xff]
        %v3077 = vld [vmem:[%s554 + $0xf0] sm:$0xff]
        %v3078 = vld [vmem:[%s554 + $0xf8] sm:$0xff]
        %v3111 = vunpack.c.l.b16 %v3047
        %v3112 = vunpack.c.h.b16 %v3047
        %v3113 = vunpack.c.l.b16 %v3048
        %v3114 = vunpack.c.h.b16 %v3048
        %v3115 = vunpack.c.l.b16 %v3049
        %v3116 = vunpack.c.h.b16 %v3049
        %v3117 = vunpack.c.l.b16 %v3050
        %v3118 = vunpack.c.h.b16 %v3050
        %v3119 = vunpack.c.l.b16 %v3051
        %v3120 = vunpack.c.h.b16 %v3051
        %v3121 = vunpack.c.l.b16 %v3052
        %v3122 = vunpack.c.h.b16 %v3052
        %v3123 = vunpack.c.l.b16 %v3053
        %v3124 = vunpack.c.h.b16 %v3053
        %v3125 = vunpack.c.l.b16 %v3054
        %v3126 = vunpack.c.h.b16 %v3054
        %v3127 = vunpack.c.l.b16 %v3055
        %v3128 = vunpack.c.h.b16 %v3055
        %v3129 = vunpack.c.l.b16 %v3056
        %v3130 = vunpack.c.h.b16 %v3056
        %v3131 = vunpack.c.l.b16 %v3057
        %v3132 = vunpack.c.h.b16 %v3057
        %v3133 = vunpack.c.l.b16 %v3058
        %v3134 = vunpack.c.h.b16 %v3058
        %v3135 = vunpack.c.l.b16 %v3059
        %v3136 = vunpack.c.h.b16 %v3059
        %v3137 = vunpack.c.l.b16 %v3060
        %v3138 = vunpack.c.h.b16 %v3060
        %v3139 = vunpack.c.l.b16 %v3061
        %v3140 = vunpack.c.h.b16 %v3061
        %v3141 = vunpack.c.l.b16 %v3062
        %v3142 = vunpack.c.h.b16 %v3062
        %v3143 = vunpack.c.l.b16 %v3063
        %v3144 = vunpack.c.h.b16 %v3063
        %v3145 = vunpack.c.l.b16 %v3064
        %v3146 = vunpack.c.h.b16 %v3064
        %v3147 = vunpack.c.l.b16 %v3065
        %v3148 = vunpack.c.h.b16 %v3065
        %v3149 = vunpack.c.l.b16 %v3066
        %v3150 = vunpack.c.h.b16 %v3066
        %v3151 = vunpack.c.l.b16 %v3067
        %v3152 = vunpack.c.h.b16 %v3067
        %v3153 = vunpack.c.l.b16 %v3068
        %v3154 = vunpack.c.h.b16 %v3068
        %v3155 = vunpack.c.l.b16 %v3069
        %v3156 = vunpack.c.h.b16 %v3069
        %v3157 = vunpack.c.l.b16 %v3070
        %v3158 = vunpack.c.h.b16 %v3070
        %v3159 = vunpack.c.l.b16 %v3071
        %v3160 = vunpack.c.h.b16 %v3071
        %v3161 = vunpack.c.l.b16 %v3072
        %v3162 = vunpack.c.h.b16 %v3072
        %v3163 = vunpack.c.l.b16 %v3073
        %v3164 = vunpack.c.h.b16 %v3073
        %v3165 = vunpack.c.l.b16 %v3074
        %v3166 = vunpack.c.h.b16 %v3074
        %v3167 = vunpack.c.l.b16 %v3075
        %v3168 = vunpack.c.h.b16 %v3075
        %v3169 = vunpack.c.l.b16 %v3076
        %v3170 = vunpack.c.h.b16 %v3076
        %v3171 = vunpack.c.l.b16 %v3077
        %v3172 = vunpack.c.h.b16 %v3077
        %v3173 = vunpack.c.l.b16 %v3078
        %v3174 = vunpack.c.h.b16 %v3078
        %v3175 = vpack.c.b16 %v3115, %v3111
        %v3176 = vpack.c.b16 %v3116, %v3112
        %v3177 = vpack.c.b16 %v3117, %v3113
        %v3178 = vpack.c.b16 %v3118, %v3114
        %v3179 = vpack.c.b16 %v3123, %v3119
        %v3180 = vpack.c.b16 %v3124, %v3120
        %v3181 = vpack.c.b16 %v3125, %v3121
        %v3182 = vpack.c.b16 %v3126, %v3122
        %v3183 = vpack.c.b16 %v3131, %v3127
        %v3184 = vpack.c.b16 %v3132, %v3128
        %v3185 = vpack.c.b16 %v3133, %v3129
        %v3186 = vpack.c.b16 %v3134, %v3130
        %v3187 = vpack.c.b16 %v3139, %v3135
        %v3188 = vpack.c.b16 %v3140, %v3136
        %v3189 = vpack.c.b16 %v3141, %v3137
        %v3190 = vpack.c.b16 %v3142, %v3138
        %v3191 = vpack.c.b16 %v3147, %v3143
        %v3192 = vpack.c.b16 %v3148, %v3144
        %v3193 = vpack.c.b16 %v3149, %v3145
        %v3194 = vpack.c.b16 %v3150, %v3146
        %v3195 = vpack.c.b16 %v3155, %v3151
        %v3196 = vpack.c.b16 %v3156, %v3152
        %v3197 = vpack.c.b16 %v3157, %v3153
        %v3198 = vpack.c.b16 %v3158, %v3154
        %v3199 = vpack.c.b16 %v3163, %v3159
        %v3200 = vpack.c.b16 %v3164, %v3160
        %v3201 = vpack.c.b16 %v3165, %v3161
        %v3202 = vpack.c.b16 %v3166, %v3162
        %v3203 = vpack.c.b16 %v3171, %v3167
        %v3204 = vpack.c.b16 %v3172, %v3168
        %v3205 = vpack.c.b16 %v3173, %v3169
        %v3206 = vpack.c.b16 %v3174, %v3170
        %3239 = vmatprep.subr.bf16.mxu0 %v3176
        %3240 = vmatpush1.bf16.msra.mxu0 %v3175
        %3241 = vmatprep.subr.bf16.mxu0 %v3180
        %3242 = vmatpush1.bf16.msra.mxu0 %v3179
        %3243 = vmatprep.subr.bf16.mxu0 %v3184
        %3244 = vmatpush1.bf16.msra.mxu0 %v3183
        %3245 = vmatprep.subr.bf16.mxu0 %v3188
        %3246 = vmatpush1.bf16.msra.mxu0 %v3187
        %3247 = vmatprep.subr.bf16.mxu0 %v3192
        %3248 = vmatpush1.bf16.msra.mxu0 %v3191
        %3249 = vmatprep.subr.bf16.mxu0 %v3196
        %3250 = vmatpush1.bf16.msra.mxu0 %v3195
        %3251 = vmatprep.subr.bf16.mxu0 %v3200
        %3252 = vmatpush1.bf16.msra.mxu0 %v3199
        %3253 = vmatprep.subr.bf16.mxu0 %v3204
        %3254 = vmatpush1.bf16.msra.mxu0 %v3203
        %3255 = vmatprep.subr.bf16.mxu0 0
        %3256 = vmatpush1.bf16.msra.mxu0 0
        %3257 = vmatprep.subr.bf16.mxu0 0
        %3258 = vmatpush1.bf16.msra.mxu0 0
        %3259 = vmatprep.subr.bf16.mxu0 0
        %3260 = vmatpush1.bf16.msra.mxu0 0
        %3261 = vmatprep.subr.bf16.mxu0 0
        %3262 = vmatpush1.bf16.msra.mxu0 0
        %3263 = vmatprep.subr.bf16.mxu0 0
        %3264 = vmatpush1.bf16.msra.mxu0 0
        %3265 = vmatprep.subr.bf16.mxu0 0
        %3266 = vmatpush1.bf16.msra.mxu0 0
        %3267 = vmatprep.subr.bf16.mxu0 0
        %3268 = vmatpush1.bf16.msra.mxu0 0
        %3269 = vmatprep.subr.bf16.mxu0 0
        %3270 = vmatpush1.bf16.msra.mxu0 0
        %3271 = vmatprep.mubr.bf16.mxu0 0
        %3272 = vmatmul.mubr.bf16.gmra.mrb[0].mxu0 %v3039
        %v3273 = vpop.f32.mrb[0].mxu0
        %v3274 = vadd.f32 0.0, %v3273
        %v3275 = vpop.f32.mrb[0].mxu0
        %v3276 = vadd.f32 0.0, %v3275
        %v3277 = vpop.f32.mrb[0].mxu0
        %v3278 = vadd.f32 0.0, %v3277
        %v3279 = vpop.f32.mrb[0].mxu0
        %v3280 = vadd.f32 0.0, %v3279
        %3281 = vmatprep.mubr.bf16.mxu0 0
        %3282 = vmatmul.mubr.bf16.gmra.mrb[0].mxu0 %v3040
        %v3283 = vpop.f32.mrb[0].mxu0
        %v3284 = vadd.f32 0.0, %v3283
        %v3285 = vpop.f32.mrb[0].mxu0
        %v3286 = vadd.f32 0.0, %v3285
        %v3287 = vpop.f32.mrb[0].mxu0
        %v3288 = vadd.f32 0.0, %v3287
        %v3289 = vpop.f32.mrb[0].mxu0
        %v3290 = vadd.f32 0.0, %v3289
        %3291 = vmatprep.mubr.bf16.mxu0 0
        %3292 = vmatmul.mubr.bf16.gmra.mrb[0].mxu0 %v3041
        %v3293 = vpop.f32.mrb[0].mxu0
        %v3294 = vadd.f32 0.0, %v3293
        %v3295 = vpop.f32.mrb[0].mxu0
        %v3296 = vadd.f32 0.0, %v3295
        %v3297 = vpop.f32.mrb[0].mxu0
        %v3298 = vadd.f32 0.0, %v3297
        %v3299 = vpop.f32.mrb[0].mxu0
        %v3300 = vadd.f32 0.0, %v3299
        %3301 = vmatprep.mubr.bf16.mxu0 0
        %3302 = vmatmul.mubr.bf16.gmra.mrb[0].mxu0 %v3042
        %v3303 = vpop.f32.mrb[0].mxu0
        %v3304 = vadd.f32 0.0, %v3303
        %v3305 = vpop.f32.mrb[0].mxu0
        %v3306 = vadd.f32 0.0, %v3305
        %v3307 = vpop.f32.mrb[0].mxu0
        %v3308 = vadd.f32 0.0, %v3307
        %v3309 = vpop.f32.mrb[0].mxu0
        %v3310 = vadd.f32 0.0, %v3309
        %3311 = vmatprep.mubr.bf16.mxu0 0
        %3312 = vmatmul.mubr.bf16.gmra.mrb[0].mxu0 %v3043
        %v3313 = vpop.f32.mrb[0].mxu0
        %v3314 = vadd.f32 0.0, %v3313
        %v3315 = vpop.f32.mrb[0].mxu0
        %v3316 = vadd.f32 0.0, %v3315
        %v3317 = vpop.f32.mrb[0].mxu0
        %v3318 = vadd.f32 0.0, %v3317
        %v3319 = vpop.f32.mrb[0].mxu0
        %v3320 = vadd.f32 0.0, %v3319
        %3321 = vmatprep.mubr.bf16.mxu0 0
        %3322 = vmatmul.mubr.bf16.gmra.mrb[0].mxu0 %v3044
        %v3323 = vpop.f32.mrb[0].mxu0
        %v3324 = vadd.f32 0.0, %v3323
        %v3325 = vpop.f32.mrb[0].mxu0
        %v3326 = vadd.f32 0.0, %v3325
        %v3327 = vpop.f32.mrb[0].mxu0
        %v3328 = vadd.f32 0.0, %v3327
        %v3329 = vpop.f32.mrb[0].mxu0
        %v3330 = vadd.f32 0.0, %v3329
        %3331 = vmatprep.mubr.bf16.mxu0 0
        %3332 = vmatmul.mubr.bf16.gmra.mrb[0].mxu0 %v3045
        %v3333 = vpop.f32.mrb[0].mxu0
        %v3334 = vadd.f32 0.0, %v3333
        %v3335 = vpop.f32.mrb[0].mxu0
        %v3336 = vadd.f32 0.0, %v3335
        %v3337 = vpop.f32.mrb[0].mxu0
        %v3338 = vadd.f32 0.0, %v3337
        %v3339 = vpop.f32.mrb[0].mxu0
        %v3340 = vadd.f32 0.0, %v3339
        %3341 = vmatprep.mubr.bf16.mxu0 0
        %3342 = vmatmul.mubr.bf16.gmra.mrb[0].mxu0 %v3046
        %v3343 = vpop.f32.mrb[0].mxu0
        %v3344 = vadd.f32 0.0, %v3343
        %v3345 = vpop.f32.mrb[0].mxu0
        %v3346 = vadd.f32 0.0, %v3345
        %v3347 = vpop.f32.mrb[0].mxu0
        %v3348 = vadd.f32 0.0, %v3347
        %v3349 = vpop.f32.mrb[0].mxu0
        %v3350 = vadd.f32 0.0, %v3349
        %3351 = vdwg.mxu0
        %3352 = vmatprep.subr.bf16.mxu0 %v3178
        %3353 = vmatpush1.bf16.msra.mxu0 %v3177
        %3354 = vmatprep.subr.bf16.mxu0 %v3182
        %3355 = vmatpush1.bf16.msra.mxu0 %v3181
        %3356 = vmatprep.subr.bf16.mxu0 %v3186
        %3357 = vmatpush1.bf16.msra.mxu0 %v3185
        %3358 = vmatprep.subr.bf16.mxu0 %v3190
        %3359 = vmatpush1.bf16.msra.mxu0 %v3189
        %3360 = vmatprep.subr.bf16.mxu0 %v3194
        %3361 = vmatpush1.bf16.msra.mxu0 %v3193
        %3362 = vmatprep.subr.bf16.mxu0 %v3198
        %3363 = vmatpush1.bf16.msra.mxu0 %v3197
        %3364 = vmatprep.subr.bf16.mxu0 %v3202
        %3365 = vmatpush1.bf16.msra.mxu0 %v3201
        %3366 = vmatprep.subr.bf16.mxu0 %v3206
        %3367 = vmatpush1.bf16.msra.mxu0 %v3205
        %3368 = vmatprep.subr.bf16.mxu0 0
        %3369 = vmatpush1.bf16.msra.mxu0 0
        %3370 = vmatprep.subr.bf16.mxu0 0
        %3371 = vmatpush1.bf16.msra.mxu0 0
        %3372 = vmatprep.subr.bf16.mxu0 0
        %3373 = vmatpush1.bf16.msra.mxu0 0
        %3374 = vmatprep.subr.bf16.mxu0 0
        %3375 = vmatpush1.bf16.msra.mxu0 0
        %3376 = vmatprep.subr.bf16.mxu0 0
        %3377 = vmatpush1.bf16.msra.mxu0 0
        %3378 = vmatprep.subr.bf16.mxu0 0
        %3379 = vmatpush1.bf16.msra.mxu0 0
        %3380 = vmatprep.subr.bf16.mxu0 0
        %3381 = vmatpush1.bf16.msra.mxu0 0
        %3382 = vmatprep.subr.bf16.mxu0 0
        %3383 = vmatpush1.bf16.msra.mxu0 0
        %3384 = vmatprep.mubr.bf16.mxu0 0
        %3385 = vmatmul.mubr.bf16.gmra.mrb[0].mxu0 %v3039
        %v3386 = vpop.f32.mrb[0].mxu0
        %v3387 = vadd.f32 0.0, %v3386
        %v3388 = vpop.f32.mrb[0].mxu0
        %v3389 = vadd.f32 0.0, %v3388
        %v3390 = vpop.f32.mrb[0].mxu0
        %v3391 = vadd.f32 0.0, %v3390
        %v3392 = vpop.f32.mrb[0].mxu0
        %v3393 = vadd.f32 0.0, %v3392
        %3394 = vmatprep.mubr.bf16.mxu0 0
        %3395 = vmatmul.mubr.bf16.gmra.mrb[0].mxu0 %v3040
        %v3396 = vpop.f32.mrb[0].mxu0
        %v3397 = vadd.f32 0.0, %v3396
        %v3398 = vpop.f32.mrb[0].mxu0
        %v3399 = vadd.f32 0.0, %v3398
        %v3400 = vpop.f32.mrb[0].mxu0
        %v3401 = vadd.f32 0.0, %v3400
        %v3402 = vpop.f32.mrb[0].mxu0
        %v3403 = vadd.f32 0.0, %v3402
        %3404 = vmatprep.mubr.bf16.mxu0 0
        %3405 = vmatmul.mubr.bf16.gmra.mrb[0].mxu0 %v3041
        %v3406 = vpop.f32.mrb[0].mxu0
        %v3407 = vadd.f32 0.0, %v3406
        %v3408 = vpop.f32.mrb[0].mxu0
        %v3409 = vadd.f32 0.0, %v3408
        %v3410 = vpop.f32.mrb[0].mxu0
        %v3411 = vadd.f32 0.0, %v3410
        %v3412 = vpop.f32.mrb[0].mxu0
        %v3413 = vadd.f32 0.0, %v3412
        %3414 = vmatprep.mubr.bf16.mxu0 0
        %3415 = vmatmul.mubr.bf16.gmra.mrb[0].mxu0 %v3042
        %v3416 = vpop.f32.mrb[0].mxu0
        %v3417 = vadd.f32 0.0, %v3416
        %v3418 = vpop.f32.mrb[0].mxu0
        %v3419 = vadd.f32 0.0, %v3418
        %v3420 = vpop.f32.mrb[0].mxu0
        %v3421 = vadd.f32 0.0, %v3420
        %v3422 = vpop.f32.mrb[0].mxu0
        %v3423 = vadd.f32 0.0, %v3422
        %3424 = vmatprep.mubr.bf16.mxu0 0
        %3425 = vmatmul.mubr.bf16.gmra.mrb[0].mxu0 %v3043
        %v3426 = vpop.f32.mrb[0].mxu0
        %v3427 = vadd.f32 0.0, %v3426
        %v3428 = vpop.f32.mrb[0].mxu0
        %v3429 = vadd.f32 0.0, %v3428
        %v3430 = vpop.f32.mrb[0].mxu0
        %v3431 = vadd.f32 0.0, %v3430
        %v3432 = vpop.f32.mrb[0].mxu0
        %v3433 = vadd.f32 0.0, %v3432
        %3434 = vmatprep.mubr.bf16.mxu0 0
        %3435 = vmatmul.mubr.bf16.gmra.mrb[0].mxu0 %v3044
        %v3436 = vpop.f32.mrb[0].mxu0
        %v3437 = vadd.f32 0.0, %v3436
        %v3438 = vpop.f32.mrb[0].mxu0
        %v3439 = vadd.f32 0.0, %v3438
        %v3440 = vpop.f32.mrb[0].mxu0
        %v3441 = vadd.f32 0.0, %v3440
        %v3442 = vpop.f32.mrb[0].mxu0
        %v3443 = vadd.f32 0.0, %v3442
        %3444 = vmatprep.mubr.bf16.mxu0 0
        %3445 = vmatmul.mubr.bf16.gmra.mrb[0].mxu0 %v3045
        %v3446 = vpop.f32.mrb[0].mxu0
        %v3447 = vadd.f32 0.0, %v3446
        %v3448 = vpop.f32.mrb[0].mxu0
        %v3449 = vadd.f32 0.0, %v3448
        %v3450 = vpop.f32.mrb[0].mxu0
        %v3451 = vadd.f32 0.0, %v3450
        %v3452 = vpop.f32.mrb[0].mxu0
        %v3453 = vadd.f32 0.0, %v3452
        %3454 = vmatprep.mubr.bf16.mxu0 0
        %3455 = vmatmul.mubr.bf16.gmra.mrb[0].mxu0 %v3046
        %v3456 = vpop.f32.mrb[0].mxu0
        %v3457 = vadd.f32 0.0, %v3456
        %v3458 = vpop.f32.mrb[0].mxu0
        %v3459 = vadd.f32 0.0, %v3458
        %v3460 = vpop.f32.mrb[0].mxu0
        %v3461 = vadd.f32 0.0, %v3460
        %v3462 = vpop.f32.mrb[0].mxu0
        %v3463 = vadd.f32 0.0, %v3462
        %3464 = vdwg.mxu0
        %v3465 = vxor.u32 %v3274, 2147483648
        %v3466 = vxor.u32 %v3276, 2147483648
        %v3467 = vxor.u32 %v3278, 2147483648
        %v3468 = vxor.u32 %v3280, 2147483648
        %v3469 = vxor.u32 %v3284, 2147483648
        %v3470 = vxor.u32 %v3286, 2147483648
        %v3471 = vxor.u32 %v3288, 2147483648
        %v3472 = vxor.u32 %v3290, 2147483648
        %v3473 = vxor.u32 %v3294, 2147483648
        %v3474 = vxor.u32 %v3296, 2147483648
        %v3475 = vxor.u32 %v3298, 2147483648
        %v3476 = vxor.u32 %v3300, 2147483648
        %v3477 = vxor.u32 %v3304, 2147483648
        %v3478 = vxor.u32 %v3306, 2147483648
        %v3479 = vxor.u32 %v3308, 2147483648
        %v3480 = vxor.u32 %v3310, 2147483648
        %v3481 = vxor.u32 %v3314, 2147483648
        %v3482 = vxor.u32 %v3316, 2147483648
        %v3483 = vxor.u32 %v3318, 2147483648
        %v3484 = vxor.u32 %v3320, 2147483648
        %v3485 = vxor.u32 %v3324, 2147483648
        %v3486 = vxor.u32 %v3326, 2147483648
        %v3487 = vxor.u32 %v3328, 2147483648
        %v3488 = vxor.u32 %v3330, 2147483648
        %v3489 = vxor.u32 %v3334, 2147483648
        %v3490 = vxor.u32 %v3336, 2147483648
        %v3491 = vxor.u32 %v3338, 2147483648
        %v3492 = vxor.u32 %v3340, 2147483648
        %v3493 = vxor.u32 %v3344, 2147483648
        %v3494 = vxor.u32 %v3346, 2147483648
        %v3495 = vxor.u32 %v3348, 2147483648
        %v3496 = vxor.u32 %v3350, 2147483648
        %v3497 = vmul.f32 %v3465, 1.442695
        %v3498 = vpow.pop %v3497
        %v3499 = vmul.f32 %v3466, 1.442695
        %v3500 = vpow.pop %v3499
        %v3501 = vmul.f32 %v3467, 1.442695
        %v3502 = vpow.pop %v3501
        %v3503 = vmul.f32 %v3468, 1.442695
        %v3504 = vpow.pop %v3503
        %v3505 = vmul.f32 %v3469, 1.442695
        %v3506 = vpow.pop %v3505
        %v3507 = vmul.f32 %v3470, 1.442695
        %v3508 = vpow.pop %v3507
        %v3509 = vmul.f32 %v3471, 1.442695
        %v3510 = vpow.pop %v3509
        %v3511 = vmul.f32 %v3472, 1.442695
        %v3512 = vpow.pop %v3511
        %v3513 = vmul.f32 %v3473, 1.442695
        %v3514 = vpow.pop %v3513
        %v3515 = vmul.f32 %v3474, 1.442695
        %v3516 = vpow.pop %v3515
        %v3517 = vmul.f32 %v3475, 1.442695
        %v3518 = vpow.pop %v3517
        %v3519 = vmul.f32 %v3476, 1.442695
        %v3520 = vpow.pop %v3519
        %v3521 = vmul.f32 %v3477, 1.442695
        %v3522 = vpow.pop %v3521
        %v3523 = vmul.f32 %v3478, 1.442695
        %v3524 = vpow.pop %v3523
        %v3525 = vmul.f32 %v3479, 1.442695
        %v3526 = vpow.pop %v3525
        %v3527 = vmul.f32 %v3480, 1.442695
        %v3528 = vpow.pop %v3527
        %v3529 = vmul.f32 %v3481, 1.442695
        %v3530 = vpow.pop %v3529
        %v3531 = vmul.f32 %v3482, 1.442695
        %v3532 = vpow.pop %v3531
        %v3533 = vmul.f32 %v3483, 1.442695
        %v3534 = vpow.pop %v3533
        %v3535 = vmul.f32 %v3484, 1.442695
        %v3536 = vpow.pop %v3535
        %v3537 = vmul.f32 %v3485, 1.442695
        %v3538 = vpow.pop %v3537
        %v3539 = vmul.f32 %v3486, 1.442695
        %v3540 = vpow.pop %v3539
        %v3541 = vmul.f32 %v3487, 1.442695
        %v3542 = vpow.pop %v3541
        %v3543 = vmul.f32 %v3488, 1.442695
        %v3544 = vpow.pop %v3543
        %v3545 = vmul.f32 %v3489, 1.442695
        %v3546 = vpow.pop %v3545
        %v3547 = vmul.f32 %v3490, 1.442695
        %v3548 = vpow.pop %v3547
        %v3549 = vmul.f32 %v3491, 1.442695
        %v3550 = vpow.pop %v3549
        %v3551 = vmul.f32 %v3492, 1.442695
        %v3552 = vpow.pop %v3551
        %v3553 = vmul.f32 %v3493, 1.442695
        %v3554 = vpow.pop %v3553
        %v3555 = vmul.f32 %v3494, 1.442695
        %v3556 = vpow.pop %v3555
        %v3557 = vmul.f32 %v3495, 1.442695
        %v3558 = vpow.pop %v3557
        %v3559 = vmul.f32 %v3496, 1.442695
        %v3560 = vpow.pop %v3559
        %v3561 = vadd.f32 %v3498, 1.0
        %v3562 = vadd.f32 %v3500, 1.0
        %v3563 = vadd.f32 %v3502, 1.0
        %v3564 = vadd.f32 %v3504, 1.0
        %v3565 = vadd.f32 %v3506, 1.0
        %v3566 = vadd.f32 %v3508, 1.0
        %v3567 = vadd.f32 %v3510, 1.0
        %v3568 = vadd.f32 %v3512, 1.0
        %v3569 = vadd.f32 %v3514, 1.0
        %v3570 = vadd.f32 %v3516, 1.0
        %v3571 = vadd.f32 %v3518, 1.0
        %v3572 = vadd.f32 %v3520, 1.0
        %v3573 = vadd.f32 %v3522, 1.0
        %v3574 = vadd.f32 %v3524, 1.0
        %v3575 = vadd.f32 %v3526, 1.0
        %v3576 = vadd.f32 %v3528, 1.0
        %v3577 = vadd.f32 %v3530, 1.0
        %v3578 = vadd.f32 %v3532, 1.0
        %v3579 = vadd.f32 %v3534, 1.0
        %v3580 = vadd.f32 %v3536, 1.0
        %v3581 = vadd.f32 %v3538, 1.0
        %v3582 = vadd.f32 %v3540, 1.0
        %v3583 = vadd.f32 %v3542, 1.0
        %v3584 = vadd.f32 %v3544, 1.0
        %v3585 = vadd.f32 %v3546, 1.0
        %v3586 = vadd.f32 %v3548, 1.0
        %v3587 = vadd.f32 %v3550, 1.0
        %v3588 = vadd.f32 %v3552, 1.0
        %v3589 = vadd.f32 %v3554, 1.0
        %v3590 = vadd.f32 %v3556, 1.0
        %v3591 = vadd.f32 %v3558, 1.0
        %v3592 = vadd.f32 %v3560, 1.0
        %v3593 = vrcp.pop %v3561
        %v3594 = vmul.f32 1.0, %v3593
        %v3595 = vrcp.pop %v3562
        %v3596 = vmul.f32 1.0, %v3595
        %v3597 = vrcp.pop %v3563
        %v3598 = vmul.f32 1.0, %v3597
        %v3599 = vrcp.pop %v3564
        %v3600 = vmul.f32 1.0, %v3599
        %v3601 = vrcp.pop %v3565
        %v3602 = vmul.f32 1.0, %v3601
        %v3603 = vrcp.pop %v3566
        %v3604 = vmul.f32 1.0, %v3603
        %v3605 = vrcp.pop %v3567
        %v3606 = vmul.f32 1.0, %v3605
        %v3607 = vrcp.pop %v3568
        %v3608 = vmul.f32 1.0, %v3607
        %v3609 = vrcp.pop %v3569
        %v3610 = vmul.f32 1.0, %v3609
        %v3611 = vrcp.pop %v3570
        %v3612 = vmul.f32 1.0, %v3611
        %v3613 = vrcp.pop %v3571
        %v3614 = vmul.f32 1.0, %v3613
        %v3615 = vrcp.pop %v3572
        %v3616 = vmul.f32 1.0, %v3615
        %v3617 = vrcp.pop %v3573
        %v3618 = vmul.f32 1.0, %v3617
        %v3619 = vrcp.pop %v3574
        %v3620 = vmul.f32 1.0, %v3619
        %v3621 = vrcp.pop %v3575
        %v3622 = vmul.f32 1.0, %v3621
        %v3623 = vrcp.pop %v3576
        %v3624 = vmul.f32 1.0, %v3623
        %v3625 = vrcp.pop %v3577
        %v3626 = vmul.f32 1.0, %v3625
        %v3627 = vrcp.pop %v3578
        %v3628 = vmul.f32 1.0, %v3627
        %v3629 = vrcp.pop %v3579
        %v3630 = vmul.f32 1.0, %v3629
        %v3631 = vrcp.pop %v3580
        %v3632 = vmul.f32 1.0, %v3631
        %v3633 = vrcp.pop %v3581
        %v3634 = vmul.f32 1.0, %v3633
        %v3635 = vrcp.pop %v3582
        %v3636 = vmul.f32 1.0, %v3635
        %v3637 = vrcp.pop %v3583
        %v3638 = vmul.f32 1.0, %v3637
        %v3639 = vrcp.pop %v3584
        %v3640 = vmul.f32 1.0, %v3639
        %v3641 = vrcp.pop %v3585
        %v3642 = vmul.f32 1.0, %v3641
        %v3643 = vrcp.pop %v3586
        %v3644 = vmul.f32 1.0, %v3643
        %v3645 = vrcp.pop %v3587
        %v3646 = vmul.f32 1.0, %v3645
        %v3647 = vrcp.pop %v3588
        %v3648 = vmul.f32 1.0, %v3647
        %v3649 = vrcp.pop %v3589
        %v3650 = vmul.f32 1.0, %v3649
        %v3651 = vrcp.pop %v3590
        %v3652 = vmul.f32 1.0, %v3651
        %v3653 = vrcp.pop %v3591
        %v3654 = vmul.f32 1.0, %v3653
        %v3655 = vrcp.pop %v3592
        %v3656 = vmul.f32 1.0, %v3655
        %v3657 = vmul.f32 %v3274, %v3594
        %v3658 = vmul.f32 %v3276, %v3596
        %v3659 = vmul.f32 %v3278, %v3598
        %v3660 = vmul.f32 %v3280, %v3600
        %v3661 = vmul.f32 %v3284, %v3602
        %v3662 = vmul.f32 %v3286, %v3604
        %v3663 = vmul.f32 %v3288, %v3606
        %v3664 = vmul.f32 %v3290, %v3608
        %v3665 = vmul.f32 %v3294, %v3610
        %v3666 = vmul.f32 %v3296, %v3612
        %v3667 = vmul.f32 %v3298, %v3614
        %v3668 = vmul.f32 %v3300, %v3616
        %v3669 = vmul.f32 %v3304, %v3618
        %v3670 = vmul.f32 %v3306, %v3620
        %v3671 = vmul.f32 %v3308, %v3622
        %v3672 = vmul.f32 %v3310, %v3624
        %v3673 = vmul.f32 %v3314, %v3626
        %v3674 = vmul.f32 %v3316, %v3628
        %v3675 = vmul.f32 %v3318, %v3630
        %v3676 = vmul.f32 %v3320, %v3632
        %v3677 = vmul.f32 %v3324, %v3634
        %v3678 = vmul.f32 %v3326, %v3636
        %v3679 = vmul.f32 %v3328, %v3638
        %v3680 = vmul.f32 %v3330, %v3640
        %v3681 = vmul.f32 %v3334, %v3642
        %v3682 = vmul.f32 %v3336, %v3644
        %v3683 = vmul.f32 %v3338, %v3646
        %v3684 = vmul.f32 %v3340, %v3648
        %v3685 = vmul.f32 %v3344, %v3650
        %v3686 = vmul.f32 %v3346, %v3652
        %v3687 = vmul.f32 %v3348, %v3654
        %v3688 = vmul.f32 %v3350, %v3656
        %v3689 = vmul.f32 %v3657, %v3387
        %v3690 = vmul.f32 %v3658, %v3389
        %v3691 = vmul.f32 %v3659, %v3391
        %v3692 = vmul.f32 %v3660, %v3393
        %v3693 = vmul.f32 %v3661, %v3397
        %v3694 = vmul.f32 %v3662, %v3399
        %v3695 = vmul.f32 %v3663, %v3401
        %v3696 = vmul.f32 %v3664, %v3403
        %v3697 = vmul.f32 %v3665, %v3407
        %v3698 = vmul.f32 %v3666, %v3409
        %v3699 = vmul.f32 %v3667, %v3411
        %v3700 = vmul.f32 %v3668, %v3413
        %v3701 = vmul.f32 %v3669, %v3417
        %v3702 = vmul.f32 %v3670, %v3419
        %v3703 = vmul.f32 %v3671, %v3421
        %v3704 = vmul.f32 %v3672, %v3423
        %v3705 = vmul.f32 %v3673, %v3427
        %v3706 = vmul.f32 %v3674, %v3429
        %v3707 = vmul.f32 %v3675, %v3431
        %v3708 = vmul.f32 %v3676, %v3433
        %v3709 = vmul.f32 %v3677, %v3437
        %v3710 = vmul.f32 %v3678, %v3439
        %v3711 = vmul.f32 %v3679, %v3441
        %v3712 = vmul.f32 %v3680, %v3443
        %v3713 = vmul.f32 %v3681, %v3447
        %v3714 = vmul.f32 %v3682, %v3449
        %v3715 = vmul.f32 %v3683, %v3451
        %v3716 = vmul.f32 %v3684, %v3453
        %v3717 = vmul.f32 %v3685, %v3457
        %v3718 = vmul.f32 %v3686, %v3459
        %v3719 = vmul.f32 %v3687, %v3461
        %v3720 = vmul.f32 %v3688, %v3463
        %v3721 = vpack.c.bf16 %v3691, %v3689
        %v3722 = vpack.c.bf16 %v3692, %v3690
        %v3723 = vpack.c.bf16 %v3695, %v3693
        %v3724 = vpack.c.bf16 %v3696, %v3694
        %v3725 = vpack.c.bf16 %v3699, %v3697
        %v3726 = vpack.c.bf16 %v3700, %v3698
        %v3727 = vpack.c.bf16 %v3703, %v3701
        %v3728 = vpack.c.bf16 %v3704, %v3702
        %v3729 = vpack.c.bf16 %v3707, %v3705
        %v3730 = vpack.c.bf16 %v3708, %v3706
        %v3731 = vpack.c.bf16 %v3711, %v3709
        %v3732 = vpack.c.bf16 %v3712, %v3710
        %v3733 = vpack.c.bf16 %v3715, %v3713
        %v3734 = vpack.c.bf16 %v3716, %v3714
        %v3735 = vpack.c.bf16 %v3719, %v3717
        %v3736 = vpack.c.bf16 %v3720, %v3718
        %v3737 = vld [vmem:[%s563] sm:$0xf]
        %v3738 = vld [vmem:[%s563 + $0x4] sm:$0xf]
        %v3739 = vld [vmem:[%s563 + $0x8] sm:$0xf]
        %v3740 = vld [vmem:[%s563 + $0xc] sm:$0xf]
        %v3741 = vld [vmem:[%s563 + $0x10] sm:$0xf]
        %v3742 = vld [vmem:[%s563 + $0x14] sm:$0xf]
        %v3743 = vld [vmem:[%s563 + $0x18] sm:$0xf]
        %v3744 = vld [vmem:[%s563 + $0x1c] sm:$0xf]
        %v3745 = vld [vmem:[%s563 + $0x20] sm:$0xf]
        %v3746 = vld [vmem:[%s563 + $0x24] sm:$0xf]
        %v3747 = vld [vmem:[%s563 + $0x28] sm:$0xf]
        %v3748 = vld [vmem:[%s563 + $0x2c] sm:$0xf]
        %v3749 = vld [vmem:[%s563 + $0x30] sm:$0xf]
        %v3750 = vld [vmem:[%s563 + $0x34] sm:$0xf]
        %v3751 = vld [vmem:[%s563 + $0x38] sm:$0xf]
        %v3752 = vld [vmem:[%s563 + $0x3c] sm:$0xf]
        %v3753 = vld [vmem:[%s563 + $0x40] sm:$0xf]
        %v3754 = vld [vmem:[%s563 + $0x44] sm:$0xf]
        %v3755 = vld [vmem:[%s563 + $0x48] sm:$0xf]
        %v3756 = vld [vmem:[%s563 + $0x4c] sm:$0xf]
        %v3757 = vld [vmem:[%s563 + $0x50] sm:$0xf]
        %v3758 = vld [vmem:[%s563 + $0x54] sm:$0xf]
        %v3759 = vld [vmem:[%s563 + $0x58] sm:$0xf]
        %v3760 = vld [vmem:[%s563 + $0x5c] sm:$0xf]
        %v3761 = vld [vmem:[%s563 + $0x60] sm:$0xf]
        %v3762 = vld [vmem:[%s563 + $0x64] sm:$0xf]
        %v3763 = vld [vmem:[%s563 + $0x68] sm:$0xf]
        %v3764 = vld [vmem:[%s563 + $0x6c] sm:$0xf]
        %v3765 = vld [vmem:[%s563 + $0x70] sm:$0xf]
        %v3766 = vld [vmem:[%s563 + $0x74] sm:$0xf]
        %v3767 = vld [vmem:[%s563 + $0x78] sm:$0xf]
        %v3768 = vld [vmem:[%s563 + $0x7c] sm:$0xf]
        %v3801 = vunpack.c.l.b16 %v3737
        %v3802 = vunpack.c.l.b16 %v3738
        %v3803 = vunpack.c.l.b16 %v3739
        %v3804 = vunpack.c.l.b16 %v3740
        %v3805 = vunpack.c.l.b16 %v3741
        %v3806 = vunpack.c.l.b16 %v3742
        %v3807 = vunpack.c.l.b16 %v3743
        %v3808 = vunpack.c.l.b16 %v3744
        %v3809 = vunpack.c.l.b16 %v3745
        %v3810 = vunpack.c.l.b16 %v3746
        %v3811 = vunpack.c.l.b16 %v3747
        %v3812 = vunpack.c.l.b16 %v3748
        %v3813 = vunpack.c.l.b16 %v3749
        %v3814 = vunpack.c.l.b16 %v3750
        %v3815 = vunpack.c.l.b16 %v3751
        %v3816 = vunpack.c.l.b16 %v3752
        %v3817 = vunpack.c.l.b16 %v3753
        %v3818 = vunpack.c.l.b16 %v3754
        %v3819 = vunpack.c.l.b16 %v3755
        %v3820 = vunpack.c.l.b16 %v3756
        %v3821 = vunpack.c.l.b16 %v3757
        %v3822 = vunpack.c.l.b16 %v3758
        %v3823 = vunpack.c.l.b16 %v3759
        %v3824 = vunpack.c.l.b16 %v3760
        %v3825 = vunpack.c.l.b16 %v3761
        %v3826 = vunpack.c.l.b16 %v3762
        %v3827 = vunpack.c.l.b16 %v3763
        %v3828 = vunpack.c.l.b16 %v3764
        %v3829 = vunpack.c.l.b16 %v3765
        %v3830 = vunpack.c.l.b16 %v3766
        %v3831 = vunpack.c.l.b16 %v3767
        %v3832 = vunpack.c.l.b16 %v3768
        %v3833 = vpack.c.b16 %v3802, %v3801
        %v3834 = vpack.c.b16 %v3804, %v3803
        %v3835 = vpack.c.b16 %v3806, %v3805
        %v3836 = vpack.c.b16 %v3808, %v3807
        %v3837 = vpack.c.b16 %v3810, %v3809
        %v3838 = vpack.c.b16 %v3812, %v3811
        %v3839 = vpack.c.b16 %v3814, %v3813
        %v3840 = vpack.c.b16 %v3816, %v3815
        %v3841 = vpack.c.b16 %v3818, %v3817
        %v3842 = vpack.c.b16 %v3820, %v3819
        %v3843 = vpack.c.b16 %v3822, %v3821
        %v3844 = vpack.c.b16 %v3824, %v3823
        %v3845 = vpack.c.b16 %v3826, %v3825
        %v3846 = vpack.c.b16 %v3828, %v3827
        %v3847 = vpack.c.b16 %v3830, %v3829
        %v3848 = vpack.c.b16 %v3832, %v3831
        %3865 = vmatprep.subr.bf16.mxu0 0
        %3866 = vmatpush1.bf16.msra.mxu0 %v3833
        %3867 = vmatprep.subr.bf16.mxu0 0
        %3868 = vmatpush1.bf16.msra.mxu0 %v3834
        %3869 = vmatprep.subr.bf16.mxu0 0
        %3870 = vmatpush1.bf16.msra.mxu0 %v3835
        %3871 = vmatprep.subr.bf16.mxu0 0
        %3872 = vmatpush1.bf16.msra.mxu0 %v3836
        %3873 = vmatprep.subr.bf16.mxu0 0
        %3874 = vmatpush1.bf16.msra.mxu0 %v3837
        %3875 = vmatprep.subr.bf16.mxu0 0
        %3876 = vmatpush1.bf16.msra.mxu0 %v3838
        %3877 = vmatprep.subr.bf16.mxu0 0
        %3878 = vmatpush1.bf16.msra.mxu0 %v3839
        %3879 = vmatprep.subr.bf16.mxu0 0
        %3880 = vmatpush1.bf16.msra.mxu0 %v3840
        %3881 = vmatprep.subr.bf16.mxu0 0
        %3882 = vmatpush1.bf16.msra.mxu0 %v3841
        %3883 = vmatprep.subr.bf16.mxu0 0
        %3884 = vmatpush1.bf16.msra.mxu0 %v3842
        %3885 = vmatprep.subr.bf16.mxu0 0
        %3886 = vmatpush1.bf16.msra.mxu0 %v3843
        %3887 = vmatprep.subr.bf16.mxu0 0
        %3888 = vmatpush1.bf16.msra.mxu0 %v3844
        %3889 = vmatprep.subr.bf16.mxu0 0
        %3890 = vmatpush1.bf16.msra.mxu0 %v3845
        %3891 = vmatprep.subr.bf16.mxu0 0
        %3892 = vmatpush1.bf16.msra.mxu0 %v3846
        %3893 = vmatprep.subr.bf16.mxu0 0
        %3894 = vmatpush1.bf16.msra.mxu0 %v3847
        %3895 = vmatprep.subr.bf16.mxu0 0
        %3896 = vmatpush1.bf16.msra.mxu0 %v3848
        %3897 = vmatprep.mubr.bf16.mxu0 %v3722
        %3898 = vmatmul.mubr.bf16.gmra.mrb[0].mxu0 %v3721
        %v3899 = vpop.f32.mrb[0].mxu0
        %v3900 = vadd.f32 0.0, %v3899
        %v3901 = vpop.f32.mrb[0].mxu0
        %v3902 = vpop.f32.mrb[0].mxu0
        %v3903 = vadd.f32 0.0, %v3902
        %v3904 = vpop.f32.mrb[0].mxu0
        %3905 = vmatprep.mubr.bf16.mxu0 %v3724
        %3906 = vmatmul.mubr.bf16.gmra.mrb[0].mxu0 %v3723
        %v3907 = vpop.f32.mrb[0].mxu0
        %v3908 = vadd.f32 0.0, %v3907
        %v3909 = vpop.f32.mrb[0].mxu0
        %v3910 = vpop.f32.mrb[0].mxu0
        %v3911 = vadd.f32 0.0, %v3910
        %v3912 = vpop.f32.mrb[0].mxu0
        %3913 = vmatprep.mubr.bf16.mxu0 %v3726
        %3914 = vmatmul.mubr.bf16.gmra.mrb[0].mxu0 %v3725
        %v3915 = vpop.f32.mrb[0].mxu0
        %v3916 = vadd.f32 0.0, %v3915
        %v3917 = vpop.f32.mrb[0].mxu0
        %v3918 = vpop.f32.mrb[0].mxu0
        %v3919 = vadd.f32 0.0, %v3918
        %v3920 = vpop.f32.mrb[0].mxu0
        %3921 = vmatprep.mubr.bf16.mxu0 %v3728
        %3922 = vmatmul.mubr.bf16.gmra.mrb[0].mxu0 %v3727
        %v3923 = vpop.f32.mrb[0].mxu0
        %v3924 = vadd.f32 0.0, %v3923
        %v3925 = vpop.f32.mrb[0].mxu0
        %v3926 = vpop.f32.mrb[0].mxu0
        %v3927 = vadd.f32 0.0, %v3926
        %v3928 = vpop.f32.mrb[0].mxu0
        %3929 = vmatprep.mubr.bf16.mxu0 %v3730
        %3930 = vmatmul.mubr.bf16.gmra.mrb[0].mxu0 %v3729
        %v3931 = vpop.f32.mrb[0].mxu0
        %v3932 = vadd.f32 0.0, %v3931
        %v3933 = vpop.f32.mrb[0].mxu0
        %v3934 = vpop.f32.mrb[0].mxu0
        %v3935 = vadd.f32 0.0, %v3934
        %v3936 = vpop.f32.mrb[0].mxu0
        %3937 = vmatprep.mubr.bf16.mxu0 %v3732
        %3938 = vmatmul.mubr.bf16.gmra.mrb[0].mxu0 %v3731
        %v3939 = vpop.f32.mrb[0].mxu0
        %v3940 = vadd.f32 0.0, %v3939
        %v3941 = vpop.f32.mrb[0].mxu0
        %v3942 = vpop.f32.mrb[0].mxu0
        %v3943 = vadd.f32 0.0, %v3942
        %v3944 = vpop.f32.mrb[0].mxu0
        %3945 = vmatprep.mubr.bf16.mxu0 %v3734
        %3946 = vmatmul.mubr.bf16.gmra.mrb[0].mxu0 %v3733
        %v3947 = vpop.f32.mrb[0].mxu0
        %v3948 = vadd.f32 0.0, %v3947
        %v3949 = vpop.f32.mrb[0].mxu0
        %v3950 = vpop.f32.mrb[0].mxu0
        %v3951 = vadd.f32 0.0, %v3950
        %v3952 = vpop.f32.mrb[0].mxu0
        %3953 = vmatprep.mubr.bf16.mxu0 %v3736
        %3954 = vmatmul.mubr.bf16.gmra.mrb[0].mxu0 %v3735
        %v3955 = vpop.f32.mrb[0].mxu0
        %v3956 = vadd.f32 0.0, %v3955
        %v3957 = vpop.f32.mrb[0].mxu0
        %v3958 = vpop.f32.mrb[0].mxu0
        %v3959 = vadd.f32 0.0, %v3958
        %v3960 = vpop.f32.mrb[0].mxu0
        %3961 = vdwg.mxu0
        %v3962 = vadd.f32 %v2888, %v3900
        %v3963 = vadd.f32 %v2889, %v3903
        %v3964 = vadd.f32 %v2890, %v3908
        %v3965 = vadd.f32 %v2891, %v3911
        %v3966 = vadd.f32 %v2892, %v3916
        %v3967 = vadd.f32 %v2893, %v3919
        %v3968 = vadd.f32 %v2894, %v3924
        %v3969 = vadd.f32 %v2895, %v3927
        %v3970 = vadd.f32 %v2896, %v3932
        %v3971 = vadd.f32 %v2897, %v3935
        %v3972 = vadd.f32 %v2898, %v3940
        %v3973 = vadd.f32 %v2899, %v3943
        %v3974 = vadd.f32 %v2900, %v3948
        %v3975 = vadd.f32 %v2901, %v3951
        %v3976 = vadd.f32 %v2902, %v3956
        %v3977 = vadd.f32 %v2903, %v3959
        %3978 = vst [vmem:[#allocation2] sm:$0xff] %v3962
        %3979 = vst [vmem:[#allocation2 + $0x8] sm:$0xff] %v3963
        %3980 = vst [vmem:[#allocation2 + $0x10] sm:$0xff] %v3964
        %3981 = vst [vmem:[#allocation2 + $0x18] sm:$0xff] %v3965
        %3982 = vst [vmem:[#allocation2 + $0x20] sm:$0xff] %v3966
        %3983 = vst [vmem:[#allocation2 + $0x28] sm:$0xff] %v3967
        %3984 = vst [vmem:[#allocation2 + $0x30] sm:$0xff] %v3968
        %3985 = vst [vmem:[#allocation2 + $0x38] sm:$0xff] %v3969
        %3986 = vst [vmem:[#allocation2 + $0x40] sm:$0xff] %v3970
        %3987 = vst [vmem:[#allocation2 + $0x48] sm:$0xff] %v3971
        %3988 = vst [vmem:[#allocation2 + $0x50] sm:$0xff] %v3972
        %3989 = vst [vmem:[#allocation2 + $0x58] sm:$0xff] %v3973
        %3990 = vst [vmem:[#allocation2 + $0x60] sm:$0xff] %v3974
        %3991 = vst [vmem:[#allocation2 + $0x68] sm:$0xff] %v3975
        %3992 = vst [vmem:[#allocation2 + $0x70] sm:$0xff] %v3976
        %3993 = vst [vmem:[#allocation2 + $0x78] sm:$0xff] %v3977
        %p3994 = scmp.eq.s32.totalorder %s34, 1
        // Predicated region
        $region101: #{tpu_custom_call.1} parent=75 // pred_check
          %p3995 = pneg %p3994
        $region102: #{tpu_custom_call.1} parent=75 // pred_check_branch
          %3997 = sbr.rel (%p3995) target = $region104
        $region103: #{tpu_custom_call.1} parent=75 // pred_region
          %v3998 = vld [vmem:[%s11] sm:$0x1]
          %v3999 = vmul.f32 %v3962, %v3962
          %v4000 = vmul.f32 %v3963, %v3963
          %v4001 = vmul.f32 %v3964, %v3964
          %v4002 = vmul.f32 %v3965, %v3965
          %v4003 = vmul.f32 %v3966, %v3966
          %v4004 = vmul.f32 %v3967, %v3967
          %v4005 = vmul.f32 %v3968, %v3968
          %v4006 = vmul.f32 %v3969, %v3969
          %v4007 = vmul.f32 %v3970, %v3970
          %v4008 = vmul.f32 %v3971, %v3971
          %v4009 = vmul.f32 %v3972, %v3972
          %v4010 = vmul.f32 %v3973, %v3973
          %v4011 = vmul.f32 %v3974, %v3974
          %v4012 = vmul.f32 %v3975, %v3975
          %v4013 = vmul.f32 %v3976, %v3976
          %v4014 = vmul.f32 %v3977, %v3977
          %4015 = vadd.xlane.f32.xlu0 %v3999
          %v4016 = vpop.xlane.xlu0 %4015
          %4017 = vadd.xlane.f32.xlu0 %v4000
          %v4018 = vpop.xlane.xlu0 %4017
          %4019 = vadd.xlane.f32.xlu0 %v4001
          %v4020 = vpop.xlane.xlu0 %4019
          %4021 = vadd.xlane.f32.xlu0 %v4002
          %v4022 = vpop.xlane.xlu0 %4021
          %4023 = vadd.xlane.f32.xlu0 %v4003
          %v4024 = vpop.xlane.xlu0 %4023
          %4025 = vadd.xlane.f32.xlu0 %v4004
          %v4026 = vpop.xlane.xlu0 %4025
          %4027 = vadd.xlane.f32.xlu0 %v4005
          %v4028 = vpop.xlane.xlu0 %4027
          %4029 = vadd.xlane.f32.xlu0 %v4006
          %v4030 = vpop.xlane.xlu0 %4029
          %4031 = vadd.xlane.f32.xlu0 %v4007
          %v4032 = vpop.xlane.xlu0 %4031
          %4033 = vadd.xlane.f32.xlu0 %v4008
          %v4034 = vpop.xlane.xlu0 %4033
          %4035 = vadd.xlane.f32.xlu0 %v4009
          %v4036 = vpop.xlane.xlu0 %4035
          %4037 = vadd.xlane.f32.xlu0 %v4010
          %v4038 = vpop.xlane.xlu0 %4037
          %4039 = vadd.xlane.f32.xlu0 %v4011
          %v4040 = vpop.xlane.xlu0 %4039
          %4041 = vadd.xlane.f32.xlu0 %v4012
          %v4042 = vpop.xlane.xlu0 %4041
          %4043 = vadd.xlane.f32.xlu0 %v4013
          %v4044 = vpop.xlane.xlu0 %4043
          %4045 = vadd.xlane.f32.xlu0 %v4014
          %v4046 = vpop.xlane.xlu0 %4045
          %v4047 = vmul.f32 %v4016, %v962
          %v4048 = vmul.f32 %v4018, %v962
          %v4049 = vmul.f32 %v4020, %v962
          %v4050 = vmul.f32 %v4022, %v962
          %v4051 = vmul.f32 %v4024, %v962
          %v4052 = vmul.f32 %v4026, %v962
          %v4053 = vmul.f32 %v4028, %v962
          %v4054 = vmul.f32 %v4030, %v962
          %v4055 = vmul.f32 %v4032, %v962
          %v4056 = vmul.f32 %v4034, %v962
          %v4057 = vmul.f32 %v4036, %v962
          %v4058 = vmul.f32 %v4038, %v962
          %v4059 = vmul.f32 %v4040, %v962
          %v4060 = vmul.f32 %v4042, %v962
          %v4061 = vmul.f32 %v4044, %v962
          %v4062 = vmul.f32 %v4046, %v962
          %v4063 = vadd.f32 %v4047, 1e-06
          %v4064 = vadd.f32 %v4048, 1e-06
          %v4065 = vadd.f32 %v4049, 1e-06
          %v4066 = vadd.f32 %v4050, 1e-06
          %v4067 = vadd.f32 %v4051, 1e-06
          %v4068 = vadd.f32 %v4052, 1e-06
          %v4069 = vadd.f32 %v4053, 1e-06
          %v4070 = vadd.f32 %v4054, 1e-06
          %v4071 = vadd.f32 %v4055, 1e-06
          %v4072 = vadd.f32 %v4056, 1e-06
          %v4073 = vadd.f32 %v4057, 1e-06
          %v4074 = vadd.f32 %v4058, 1e-06
          %v4075 = vadd.f32 %v4059, 1e-06
          %v4076 = vadd.f32 %v4060, 1e-06
          %v4077 = vadd.f32 %v4061, 1e-06
          %v4078 = vadd.f32 %v4062, 1e-06
          %v4079 = vrsqrt.pop %v4063
          %v4080 = vrsqrt.pop %v4064
          %v4081 = vrsqrt.pop %v4065
          %v4082 = vrsqrt.pop %v4066
          %v4083 = vrsqrt.pop %v4067
          %v4084 = vrsqrt.pop %v4068
          %v4085 = vrsqrt.pop %v4069
          %v4086 = vrsqrt.pop %v4070
          %v4087 = vrsqrt.pop %v4071
          %v4088 = vrsqrt.pop %v4072
          %v4089 = vrsqrt.pop %v4073
          %v4090 = vrsqrt.pop %v4074
          %v4091 = vrsqrt.pop %v4075
          %v4092 = vrsqrt.pop %v4076
          %v4093 = vrsqrt.pop %v4077
          %v4094 = vrsqrt.pop %v4078
          %v4095 = vmul.f32 %v3962, %v4079
          %v4096 = vmul.f32 %v3963, %v4080
          %v4097 = vmul.f32 %v3964, %v4081
          %v4098 = vmul.f32 %v3965, %v4082
          %v4099 = vmul.f32 %v3966, %v4083
          %v4100 = vmul.f32 %v3967, %v4084
          %v4101 = vmul.f32 %v3968, %v4085
          %v4102 = vmul.f32 %v3969, %v4086
          %v4103 = vmul.f32 %v3970, %v4087
          %v4104 = vmul.f32 %v3971, %v4088
          %v4105 = vmul.f32 %v3972, %v4089
          %v4106 = vmul.f32 %v3973, %v4090
          %v4107 = vmul.f32 %v3974, %v4091
          %v4108 = vmul.f32 %v3975, %v4092
          %v4109 = vmul.f32 %v3976, %v4093
          %v4110 = vmul.f32 %v3977, %v4094
          %v4112 = vlaneseq
          %v4113 = vshrl.u32 %v4112, 7
          %v4114 = vsub.s32 0, %v4113
          %v4115 = vrot.slane %v3998, %v4114
          %v4117 = vmul.f32 %v4095, %v4115
          %v4118 = vmul.f32 %v4096, %v4115
          %v4119 = vmul.f32 %v4097, %v4115
          %v4120 = vmul.f32 %v4098, %v4115
          %v4121 = vmul.f32 %v4099, %v4115
          %v4122 = vmul.f32 %v4100, %v4115
          %v4123 = vmul.f32 %v4101, %v4115
          %v4124 = vmul.f32 %v4102, %v4115
          %v4125 = vmul.f32 %v4103, %v4115
          %v4126 = vmul.f32 %v4104, %v4115
          %v4127 = vmul.f32 %v4105, %v4115
          %v4128 = vmul.f32 %v4106, %v4115
          %v4129 = vmul.f32 %v4107, %v4115
          %v4130 = vmul.f32 %v4108, %v4115
          %v4131 = vmul.f32 %v4109, %v4115
          %v4132 = vmul.f32 %v4110, %v4115
          %v4133 = vld [vmem:[%s4] sm:$0xff]
          %4134 = vmatprep.subr.mxu0 0.0
          %4135 = vmatpush1.msra.mxu0 %v4117
          %4136 = vmatprep.subr.mxu0 0.0
          %4137 = vmatpush1.msra.mxu0 %v4118
          %4138 = vmatprep.subr.mxu0 0.0
          %4139 = vmatpush1.msra.mxu0 %v4119
          %4140 = vmatprep.subr.mxu0 0.0
          %4141 = vmatpush1.msra.mxu0 %v4120
          %4142 = vmatprep.subr.mxu0 0.0
          %4143 = vmatpush1.msra.mxu0 %v4121
          %4144 = vmatprep.subr.mxu0 0.0
          %4145 = vmatpush1.msra.mxu0 %v4122
          %4146 = vmatprep.subr.mxu0 0.0
          %4147 = vmatpush1.msra.mxu0 %v4123
          %4148 = vmatprep.subr.mxu0 0.0
          %4149 = vmatpush1.msra.mxu0 %v4124
          %4150 = vmatprep.subr.mxu0 0.0
          %4151 = vmatpush1.msra.mxu0 %v4125
          %4152 = vmatprep.subr.mxu0 0.0
          %4153 = vmatpush1.msra.mxu0 %v4126
          %4154 = vmatprep.subr.mxu0 0.0
          %4155 = vmatpush1.msra.mxu0 %v4127
          %4156 = vmatprep.subr.mxu0 0.0
          %4157 = vmatpush1.msra.mxu0 %v4128
          %4158 = vmatprep.subr.mxu0 0.0
          %4159 = vmatpush1.msra.mxu0 %v4129
          %4160 = vmatprep.subr.mxu0 0.0
          %4161 = vmatpush1.msra.mxu0 %v4130
          %4162 = vmatprep.subr.mxu0 0.0
          %4163 = vmatpush1.msra.mxu0 %v4131
          %4164 = vmatprep.subr.mxu0 0.0
          %4165 = vmatpush1.msra.mxu0 %v4132
          %4166 = vmatprep.subr.mxu0 0.0
          %4167 = vmatpush1.msra.mxu0 0.0
          %4168 = vmatprep.subr.mxu0 0.0
          %4169 = vmatpush1.msra.mxu0 0.0
          %4170 = vmatprep.subr.mxu0 0.0
          %4171 = vmatpush1.msra.mxu0 0.0
          %4172 = vmatprep.subr.mxu0 0.0
          %4173 = vmatpush1.msra.mxu0 0.0
          %4174 = vmatprep.subr.mxu0 0.0
          %4175 = vmatpush1.msra.mxu0 0.0
          %4176 = vmatprep.subr.mxu0 0.0
          %4177 = vmatpush1.msra.mxu0 0.0
          %4178 = vmatprep.subr.mxu0 0.0
          %4179 = vmatpush1.msra.mxu0 0.0
          %4180 = vmatprep.subr.mxu0 0.0
          %4181 = vmatpush1.msra.mxu0 0.0
          %4182 = vmatprep.subr.mxu0 0.0
          %4183 = vmatpush1.msra.mxu0 0.0
          %4184 = vmatprep.subr.mxu0 0.0
          %4185 = vmatpush1.msra.mxu0 0.0
          %4186 = vmatprep.subr.mxu0 0.0
          %4187 = vmatpush1.msra.mxu0 0.0
          %4188 = vmatprep.subr.mxu0 0.0
          %4189 = vmatpush1.msra.mxu0 0.0
          %4190 = vmatprep.subr.mxu0 0.0
          %4191 = vmatpush1.msra.mxu0 0.0
          %4192 = vmatprep.subr.mxu0 0.0
          %4193 = vmatpush1.msra.mxu0 0.0
          %4194 = vmatprep.subr.mxu0 0.0
          %4195 = vmatpush1.msra.mxu0 0.0
          %4196 = vmatprep.subr.mxu0 0.0
          %4197 = vmatpush1.msra.mxu0 0.0
          %4198 = vmatprep.mubr.f32.mxu0 0.0
          %4199 = vmatmul.mubr.f32.gmra.mrb[0].mxu0 %v4133
          %v4200 = vpop.f32.mrb[0].mxu0
          %v4201 = vadd.f32 0.0, %v4200
          %v4202 = vpop.f32.mrb[0].mxu0
          %4203 = vdwg.mxu0
          %v4204 = vld [vmem:[%s12] sm:$0x1]
          %v4206 = vlaneseq
          %v4207 = vshrl.u32 %v4206, 7
          %v4208 = vsub.s32 0, %v4207
          %v4209 = vrot.slane %v4204, %v4208
          %v4211 = vmul.f32 %v4201, %v4209
          %4212 = vadd.xlane.f32.xlu0 %v4211
          %v4213 = vpop.xlane.xlu0 %4212
          %s4214 = sld [smem:[#allocation4]]
          %v4215 = vstv %s4214
          %v4216 = vadd.f32 %v4213, %v4215
          %v4219 = vunpack.c.l.s4 839922192
          %v4220 = vunpack.c.0.s8 %v4219
          %v4221 = vlaneseq
          %v4222 = vshrl.u32 %v4221, 7
          %v4223 = vsub.s32 %v4220, %v4222
          %v4224 = vrot.slane %v4216, %v4223
          %v4226 = vunpack.c.l.s4 1985246804
          %v4227 = vunpack.c.0.s8 %v4226
          %v4228 = vlaneseq
          %v4229 = vshrl.u32 %v4228, 7
          %v4230 = vsub.s32 %v4227, %v4229
          %v4231 = vrot.slane %v4216, %v4230
          %4232 = vset.pattern.permute.xlu0 0
          %4233 = vperm.xlu0 %4232, %v4224
          %v4234 = vpop.permute.xlu0 %4233
          %4235 = vset.pattern.permute.xlu0 0
          %4236 = vperm.xlu0 %4235, %v4231
          %v4237 = vpop.permute.xlu0 %4236
          %v4238 = vlaneseq
          %v4239 = vshrl.u32 %v4238, 7
          %v4240 = vsub.s32 %v892, %v4239
          %v4241 = vrot.slane %v4234, %v4240
          %v4242 = vlaneseq
          %v4243 = vshrl.u32 %v4242, 7
          %v4244 = vsub.s32 %v892, %v4243
          %v4245 = vrot.slane %v4237, %v4244
          %vm4246 = vcmask 1041409
          %v4247 = vsel %vm4246, %v4245, %v4241
          %vm4249 = vcmask 25600
          %4250 = vst.msk [vmem:[#allocation14] sm:$0x3] %vm4249, %v4247
        $region104: #{tpu_custom_call.1} parent=75 // pred_fallthru
          _
        // Predicated region
        $region105: #{tpu_custom_call.1} parent=75 // pred_check
          %p4251 = pneg %p371
        $region106: #{tpu_custom_call.1} parent=75 // pred_check_branch
          %4253 = sbr.rel (%p4251) target = $region108
        $region107: #{tpu_custom_call.1} parent=75 // pred_region
          %s4255 = ssub.s32 32, 32
          %4256 = vsyncadd [#allocation7], %s4255
          %s4258 = sshll.u32 [#allocation14], 4
          %s4259 = int_to_ptr.vmem [resolvable:$true] %s4258
          %4261 = dma.vmem_to_hbm [thread:$0]  %s4259, 32, %s14, [#allocation7]
        $region108: #{tpu_custom_call.1} parent=75 // pred_fallthru
          _
        // Predicated region
        $region109: #{tpu_custom_call.1} parent=75 // pred_check
          %p4262 = pneg %p371
        $region110: #{tpu_custom_call.1} parent=75 // pred_check_branch
          %4264 = sbr.rel (%p4262) target = $region112
        $region111: #{tpu_custom_call.1} parent=75 // pred_region
          %4265 = dma.done [#allocation7], 32
        $region112: #{tpu_custom_call.1} parent=75 // pred_fallthru
          _
      $region76: #{tpu_custom_call.1} parent=5 // pred_fallthru
        _
      %p4266 = scmp.le.s32.totalorder 2, %s29
      // Predicated region
      $region113: #{tpu_custom_call.1} parent=5 // pred_check
        %p4267 = pneg %p4266
      $region114: #{tpu_custom_call.1} parent=5 // pred_check_branch
        %4269 = sbr.rel (%p4267) target = $region116
      $region115: #{tpu_custom_call.1} parent=5 // pred_region
        %s4270 = ssub.s32 %s29, 2
      $region116: #{tpu_custom_call.1} parent=5 // pred_fallthru
        _
    $region6: #{tpu_custom_call.1} parent=1 // loop_footer
      %s33 = sadd.s32 1, %s29
    $region7: #{tpu_custom_call.1} parent=1 // loop_footer_branch
      %28 = sbr.rel target = $region3
    $region8: #{tpu_custom_call.1} parent=1 // loop_exit
      _
    %4271 = vsyncpa [#allocation6], 1
    %s4272 = scalar_lea.sflag [#allocation6], 1
    %4273 = vsyncpa %s4272, 1
    %4274 = vsyncpa [#allocation9], 1
    %s4275 = scalar_lea.sflag [#allocation9], 1
    %4276 = vsyncpa %s4275, 1
    %4277 = vsyncpa [#allocation12], 1
    %s4278 = scalar_lea.sflag [#allocation12], 1
    %4279 = vsyncpa %s4278, 1
    %4280 = vsyncpa [#allocation7], 1
    %s4281 = scalar_lea.sflag [#allocation7], 1
    %4282 = vsyncpa %s4281, 1

</llo_original>
